<compile_context>
chip_gen: v7x
topology: tpu7x:2x2x1
jax: 0.10.0
libtpu: 0.0.40
codegen_flags: <defaults>
</compile_context>

<pallas_src>
import math
from functools import lru_cache

import numpy as np
import jax
import jax.numpy as jnp
from jax.experimental import pallas as pl
from jax.experimental.pallas import tpu as pltpu

_FEAT_DTYPE = jnp.bfloat16   # inter-layer activations / weights (f32 accumulation in-kernel)


# ----------------------------------------------------------------------------
# Pallas kernels
# ----------------------------------------------------------------------------
def _conv3x3_bn_relu(x, w9, scale, bias):
    """3x3 conv (stride 1, pad 1) + folded eval-mode BatchNorm + ReLU.

    x : (N,H,W,Cin) bf16, w9 : (9,Cin,Cout) bf16 (tap order dy,dx) -> (N,H,W,Cout) bf16.

    The padded activation is flattened to ((H+2)*(W+2)+2, Cin) rows; each of the 9 taps is
    then a *contiguous* row window of that 2-D array, so every tap is a plain 2-D MXU matmul
    accumulated in f32 (no HBM im2col, no in-kernel reshapes).  The kernel computes W+2
    output columns per row; the 2 garbage boundary columns are stripped in the wrapper.
    """
    N, H, W, Cin = x.shape
    Cout = w9.shape[-1]
    W2 = W + 2
    HW2 = H * W2                       # rows of the padded-width output grid
    L = (H + 2) * W2 + 2               # flattened padded input rows (+1 guard row each end)

    xp = jnp.pad(x, ((0, 0), (1, 1), (1, 1), (0, 0)))              # (N, H+2, W+2, Cin)
    xf = jnp.pad(xp.reshape(N, (H + 2) * W2, Cin), ((0, 0), (1, 1), (0, 0)))   # (N, L, Cin)

    scale2 = scale.reshape(1, Cout).astype(jnp.float32)
    bias2 = bias.reshape(1, Cout).astype(jnp.float32)

    def kernel(x_ref, w_ref, s_ref, b_ref, o_ref):
        acc = jnp.zeros((HW2, Cout), jnp.float32)
        for dy in range(3):
            for dx in range(3):
                s0 = dy * W2 + dx
                win = x_ref[0, s0:s0 + HW2, :]                     # contiguous (HW2, Cin)
                acc = acc + jnp.dot(win, w_ref[dy * 3 + dx],
                                    preferred_element_type=jnp.float32)
        y = jnp.maximum(acc * s_ref[...] + b_ref[...], 0.0)        # folded BN + ReLU
        o_ref[0] = y.astype(o_ref.dtype)

    flops = 2 * N * HW2 * 9 * Cin * Cout
    bytes_accessed = (N * L * Cin + 9 * Cin * Cout + N * HW2 * Cout) * 2 + 8 * Cout

    out = pl.pallas_call(
        kernel,
        out_shape=jax.ShapeDtypeStruct((N, HW2, Cout), _FEAT_DTYPE),
        grid=(N,),
        in_specs=[
            pl.BlockSpec((1, L, Cin), lambda n: (n, 0, 0)),
            pl.BlockSpec((9, Cin, Cout), lambda n: (0, 0, 0)),
            pl.BlockSpec((1, Cout), lambda n: (0, 0)),
            pl.BlockSpec((1, Cout), lambda n: (0, 0)),
        ],
        out_specs=pl.BlockSpec((1, HW2, Cout), lambda n: (n, 0, 0)),
        compiler_params=pltpu.CompilerParams(
            dimension_semantics=("parallel",),
            vmem_limit_bytes=32 * 1024 * 1024),
        cost_estimate=pl.CostEstimate(flops=flops, transcendentals=0,
                                      bytes_accessed=bytes_accessed),
    )(xf, w9, scale2, bias2)
    # TODO(synk): for large spatial sizes, additionally tile the grid over output-row blocks
    # (halo via manual DMA) so a full image plane need not be resident in VMEM.
    return out.reshape(N, H, W2, Cout)[:, :, 1:W + 1, :]


@lru_cache(maxsize=None)
def _upsample_matrix_np(n_in, n_out):
    """1-D bilinear interpolation matrix, align_corners=True (cached per shape)."""
    if n_in == 1:
        return np.ones((n_out, 1), np.float32)
    src = np.arange(n_out, dtype=np.float64) * (n_in - 1) / (n_out - 1)
    lo = np.clip(np.floor(src).astype(np.int64), 0, n_in - 2)
    frac = (src - lo).astype(np.float32)
    m = np.zeros((n_out, n_in), np.float32)
    rows = np.arange(n_out)
    m[rows, lo] += 1.0 - frac
    m[rows, lo + 1] += frac
    return m


def _upsample2x_rows(x3, up_h):
    """Height pass: (N,H,W*C) -> (N,2H,W*C) via up_h @ x (lane-dense W*C output)."""
    N, H, WC = x3.shape
    Ho = up_h.shape[0]

    def kernel(u_ref, x_ref, o_ref):
        o_ref[0] = jnp.dot(u_ref[...], x_ref[0].astype(jnp.float32),
                           preferred_element_type=jnp.float32).astype(o_ref.dtype)

    return pl.pallas_call(
        kernel,
        out_shape=jax.ShapeDtypeStruct((N, Ho, WC), _FEAT_DTYPE),
        grid=(N,),
        in_specs=[pl.BlockSpec((Ho, H), lambda n: (0, 0)),
                  pl.BlockSpec((1, H, WC), lambda n: (n, 0, 0))],
        out_specs=pl.BlockSpec((1, Ho, WC), lambda n: (n, 0, 0)),
        compiler_params=pltpu.CompilerParams(dimension_semantics=("parallel",)),
    )(up_h, x3)


def _upsample2x_cols(x4, up_w):
    """Width pass: (N,Ho,W,C) -> (N,Ho,2W,C) via per-(n,row) up_w @ x matmuls."""
    N, Ho, W, C = x4.shape
    Wo = up_w.shape[0]

    def kernel(u_ref, x_ref, o_ref):
        o_ref[0, 0] = jnp.dot(u_ref[...], x_ref[0, 0].astype(jnp.float32),
                              preferred_element_type=jnp.float32).astype(o_ref.dtype)

    return pl.pallas_call(
        kernel,
        out_shape=jax.ShapeDtypeStruct((N, Ho, Wo, C), _FEAT_DTYPE),
        grid=(N, Ho),
        in_specs=[pl.BlockSpec((Wo, W), lambda n, h: (0, 0)),
                  pl.BlockSpec((1, 1, W, C), lambda n, h: (n, h, 0, 0))],
        out_specs=pl.BlockSpec((1, 1, Wo, C), lambda n, h: (n, h, 0, 0)),
        compiler_params=pltpu.CompilerParams(dimension_semantics=("parallel", "parallel")),
    )(up_w, x4)


def _bilinear_up2x(x):
    """nn.UpsamplingBilinear2d(scale_factor=2) (align_corners=True), separable — no kron."""
    N, H, W, C = x.shape
    up_h = jnp.asarray(_upsample_matrix_np(H, 2 * H))
    up_w = jnp.asarray(_upsample_matrix_np(W, 2 * W))
    t = _upsample2x_rows(x.reshape(N, H, W * C), up_h)      # (N, 2H, W*C)
    t = t.reshape(N, 2 * H, W, C)
    return _upsample2x_cols(t, up_w)                        # (N, 2H, 2W, C)


def _matmul_affine(x2d, w, scale, bias, *, relu, out_dtype):
    """y = act((x @ w) * scale + bias), row-tiled.  Used for 1x1 conv and classifier.

    K and Cout are tiny at these channel counts, so only the M (row) axis is tiled and
    marked "parallel" (megacore on v7x); K fits a single block.
    """
    M, K = x2d.shape
    C = w.shape[1]
    TM = min(256, M)

    def kernel(x_ref, w_ref, s_ref, b_ref, o_ref):
        y = jnp.dot(x_ref[...], w_ref[...], preferred_element_type=jnp.float32)
        y = y * s_ref[...] + b_ref[...]
        if relu:
            y = jnp.maximum(y, 0.0)
        o_ref[...] = y.astype(o_ref.dtype)

    return pl.pallas_call(
        kernel,
        out_shape=jax.ShapeDtypeStruct((M, C), out_dtype),
        grid=(pl.cdiv(M, TM),),
        in_specs=[
            pl.BlockSpec((TM, K), lambda i: (i, 0)),
            pl.BlockSpec((K, C), lambda i: (0, 0)),
            pl.BlockSpec((1, C), lambda i: (0, 0)),
            pl.BlockSpec((1, C), lambda i: (0, 0)),
        ],
        out_specs=pl.BlockSpec((TM, C), lambda i: (i, 0)),
        compiler_params=pltpu.CompilerParams(dimension_semantics=("parallel",)),
    )(x2d, w, scale.reshape(1, C).astype(jnp.float32), bias.reshape(1, C).astype(jnp.float32))


def _mean_over_blocks(feats):
    """out_feat = sum(inner_feat_list) / len(...): K separate inputs (no stack), row-tiled."""
    K = len(feats)
    N, H, W, C = feats[0].shape
    M = N * H * W
    TM = min(256, M)
    flats = [f.reshape(M, C) for f in feats]

    def kernel(*refs):
        in_refs, o_ref = refs[:-1], refs[-1]
        acc = in_refs[0][...].astype(jnp.float32)
        for r in in_refs[1:]:
            acc = acc + r[...].astype(jnp.float32)
        o_ref[...] = (acc * (1.0 / K)).astype(o_ref.dtype)

    out = pl.pallas_call(
        kernel,
        out_shape=jax.ShapeDtypeStruct((M, C), _FEAT_DTYPE),
        grid=(pl.cdiv(M, TM),),
        in_specs=[pl.BlockSpec((TM, C), lambda i: (i, 0)) for _ in range(K)],
        out_specs=pl.BlockSpec((TM, C), lambda i: (i, 0)),
        compiler_params=pltpu.CompilerParams(dimension_semantics=("parallel",)),
    )(*flats)
    return out.reshape(N, H, W, C)


# ----------------------------------------------------------------------------
# Module glue (layout plumbing only; all math is in the kernels above)
# ----------------------------------------------------------------------------
def _decoder_block_apply(x, layers):
    """One AssymetricDecoder block: repeat [conv3x3 -> BN -> ReLU -> (bilinear 2x)]."""
    for layer in layers:
        x = _conv3x3_bn_relu(x, layer["w"], layer["scale"], layer["bias"])
        if layer["up"]:
            x = _bilinear_up2x(x)
    return x


def decoder_forward(feat_list, params):
    inner = [_decoder_block_apply(f, layers)
             for layers, f in zip(params["blocks"], feat_list)]
    out_feat = _mean_over_blocks(inner)
    N, H, W, C = out_feat.shape
    num_classes = params["cls_w"].shape[1]
    # dropout is the identity in eval mode
    logit2d = _matmul_affine(out_feat.reshape(N * H * W, C), params["cls_w"],
                             jnp.ones((num_classes,), jnp.float32), params["cls_b"],
                             relu=False, out_dtype=jnp.float32)
    return logit2d.reshape(N, H, W, num_classes), out_feat


def conv_block_1x1(x, w, scale, bias):
    # TODO(synk): ConvBlock assumed to be Conv2d(1x1, bias=False) + BatchNorm + ReLU (FarSeg++ convention).
    N, H, W, Cin = x.shape
    y2d = _matmul_affine(x.reshape(N * H * W, Cin), w, scale, bias,
                         relu=True, out_dtype=_FEAT_DTYPE)
    return y2d.reshape(N, H, W, w.shape[1])


def objseg_cascade_forward(features, params):
    features = [f.astype(_FEAT_DTYPE) for f in features]
    obj_logit, obj_feature = decoder_forward(features, params["obj"])
    bridged = conv_block_1x1(obj_feature, params["conv_w"],
                             params["conv_scale"], params["conv_bias"])
    seg_logit, _ = decoder_forward([bridged] + list(features), params["seg"])
    return obj_logit, seg_logit


# ----------------------------------------------------------------------------
# Deterministic parameter construction
# ----------------------------------------------------------------------------
def _init_bn(key, c):
    k1, k2, k3, k4 = jax.random.split(key, 4)
    gamma = 1.0 + 0.1 * jax.random.normal(k1, (c,), jnp.float32)
    beta = 0.1 * jax.random.normal(k2, (c,), jnp.float32)
    mean = 0.1 * jax.random.normal(k3, (c,), jnp.float32)
    var = jnp.abs(1.0 + 0.1 * jax.random.normal(k4, (c,), jnp.float32))
    scale = gamma / jnp.sqrt(var + 1e-5)      # eval-mode BatchNorm folded to an affine op
    bias = beta - mean * scale
    return scale, bias


def make_decoder_params(key, in_channels, out_channels, in_strides, out_stride, num_classes):
    blocks = []
    for bi, os_ in enumerate(in_strides):
        num_up = int(math.log2(int(os_))) - int(math.log2(int(out_stride)))
        num_layers = num_up if num_up != 0 else 1
        layers = []
        for li in range(num_layers):
            cin = in_channels if li == 0 else out_channels
            kk = jax.random.fold_in(key, bi * 16 + li)
            w = (0.1 * jax.random.normal(jax.random.fold_in(kk, 0),
                                         (3, 3, cin, out_channels), jnp.float32)
                 ).reshape(9, cin, out_channels).astype(_FEAT_DTYPE)    # tap order (dy, dx)
            scale, bias = _init_bn(jax.random.fold_in(kk, 1), out_channels)
            layers.append(dict(w=w, scale=scale, bias=bias, up=(num_up != 0)))
        blocks.append(layers)
    kc = jax.random.fold_in(key, 9999)
    cls_w = (0.1 * jax.random.normal(jax.random.fold_in(kc, 0),
                                     (out_channels, num_classes), jnp.float32)).astype(_FEAT_DTYPE)
    cls_b = 0.1 * jax.random.normal(jax.random.fold_in(kc, 1), (num_classes,), jnp.float32)
    return dict(blocks=blocks, out_channels=out_channels, cls_w=cls_w, cls_b=cls_b)


# ----------------------------------------------------------------------------
# Example run
# ----------------------------------------------------------------------------
if __name__ == "__main__":
    key = jax.random.PRNGKey(0)
    N, C_feat = 2, 8                      # FPN feature channels (= obj & seg in_channels)
    base = 16                             # spatial size at output-stride 4
    obj_out, seg_out = 16, 16
    obj_classes, seg_classes = 2, 5
    strides = (4, 8, 16, 32)

    k_feat, k_obj, k_seg, k_conv = jax.random.split(key, 4)
    features = []
    for i, s in enumerate(strides):
        hw = base // (s // 4)
        features.append(jax.random.normal(jax.random.fold_in(k_feat, i),
                                          (N, hw, hw, C_feat), jnp.float32))

    params = dict(
        obj=make_decoder_params(k_obj, C_feat, obj_out, strides, 4, obj_classes),
        # seg decoder consumes [conv(obj_feature)] + features -> 5 inputs, first two at OS 4
        seg=make_decoder_params(k_seg, C_feat, seg_out, (4,) + strides, 4, seg_classes),
    )
    kc1, kc2 = jax.random.split(k_conv)
    params["conv_w"] = (0.1 * jax.random.normal(kc1, (obj_out, C_feat), jnp.float32)).astype(_FEAT_DTYPE)
    params["conv_scale"], params["conv_bias"] = _init_bn(kc2, C_feat)

    obj_logit, seg_logit = objseg_cascade_forward(features, params)
    jax.block_until_ready((obj_logit, seg_logit))
    assert obj_logit.shape == (N, base, base, obj_classes)
    assert seg_logit.shape == (N, base, base, seg_classes)
    print("KERNEL_OK")
</pallas_src>

<mosaic_0001>
module attributes {stable_mosaic.version = 11 : i64} {
  func.func @kernel(%arg0: i32, %arg1: memref<1x326x8xbf16, #tpu.memory_space<vmem>>, %arg2: memref<9x8x16xbf16, #tpu.memory_space<vmem>>, %arg3: memref<1x16xf32, #tpu.memory_space<vmem>>, %arg4: memref<1x16xf32, #tpu.memory_space<vmem>>, %arg5: memref<1x288x16xbf16, #tpu.memory_space<vmem>>) attributes {dimension_semantics = [#tpu.dimension_semantics<parallel>], iteration_bounds = array<i64: 2>, scalar_prefetch = 0 : i64, scratch_operands = 0 : i64, tpu.core_type = #tpu.core_type<tc>, window_params = [{transform_indices = @transform_0, window_bounds = array<i64: 1, 326, 8>}, {pipeline_mode = #tpu.pipeline_mode<synchronous>, transform_indices = @transform_1, window_bounds = array<i64: 9, 8, 16>}, {pipeline_mode = #tpu.pipeline_mode<synchronous>, transform_indices = @transform_2, window_bounds = array<i64: 1, 16>}, {pipeline_mode = #tpu.pipeline_mode<synchronous>, transform_indices = @transform_3, window_bounds = array<i64: 1, 16>}, {transform_indices = @transform_4, window_bounds = array<i64: 1, 288, 16>}]} {
    %cst = arith.constant 0.000000e+00 : f32
    %0 = vector.broadcast %cst : f32 to vector<288x16xf32>
    %c0 = arith.constant 0 : index
    %c0_0 = arith.constant 0 : index
    %c0_1 = arith.constant 0 : index
    %1 = vector.load %arg1[%c0, %c0_0, %c0_1] : memref<1x326x8xbf16, #tpu.memory_space<vmem>>, vector<1x288x8xbf16>
    %2 = vector.shape_cast %1 : vector<1x288x8xbf16> to vector<288x8xbf16>
    %c0_2 = arith.constant 0 : index
    %c0_3 = arith.constant 0 : index
    %c0_4 = arith.constant 0 : index
    %3 = vector.load %arg2[%c0_2, %c0_3, %c0_4] : memref<9x8x16xbf16, #tpu.memory_space<vmem>>, vector<1x8x16xbf16>
    %4 = vector.shape_cast %3 : vector<1x8x16xbf16> to vector<8x16xbf16>
    %cst_5 = arith.constant dense<0.000000e+00> : vector<288x16xf32>
    %5 = tpu.matmul %2, %4, %cst_5 {dimension_numbers = #tpu.dot_dimension_numbers<[1], [0], [0], [1], [0, 0, 1, 1], [], []>} : vector<288x8xbf16>, vector<8x16xbf16>, vector<288x16xf32> -> vector<288x16xf32>
    %6 = arith.addf %0, %5 : vector<288x16xf32>
    %c0_6 = arith.constant 0 : index
    %c1 = arith.constant 1 : index
    %c0_7 = arith.constant 0 : index
    %7 = vector.load %arg1[%c0_6, %c1, %c0_7] : memref<1x326x8xbf16, #tpu.memory_space<vmem>>, vector<1x288x8xbf16>
    %8 = vector.shape_cast %7 : vector<1x288x8xbf16> to vector<288x8xbf16>
    %c1_8 = arith.constant 1 : index
    %c0_9 = arith.constant 0 : index
    %c0_10 = arith.constant 0 : index
    %9 = vector.load %arg2[%c1_8, %c0_9, %c0_10] : memref<9x8x16xbf16, #tpu.memory_space<vmem>>, vector<1x8x16xbf16>
    %10 = vector.shape_cast %9 : vector<1x8x16xbf16> to vector<8x16xbf16>
    %cst_11 = arith.constant dense<0.000000e+00> : vector<288x16xf32>
    %11 = tpu.matmul %8, %10, %cst_11 {dimension_numbers = #tpu.dot_dimension_numbers<[1], [0], [0], [1], [0, 0, 1, 1], [], []>} : vector<288x8xbf16>, vector<8x16xbf16>, vector<288x16xf32> -> vector<288x16xf32>
    %12 = arith.addf %6, %11 : vector<288x16xf32>
    %c0_12 = arith.constant 0 : index
    %c2 = arith.constant 2 : index
    %c0_13 = arith.constant 0 : index
    %13 = vector.load %arg1[%c0_12, %c2, %c0_13] : memref<1x326x8xbf16, #tpu.memory_space<vmem>>, vector<1x288x8xbf16>
    %14 = vector.shape_cast %13 : vector<1x288x8xbf16> to vector<288x8xbf16>
    %c2_14 = arith.constant 2 : index
    %c0_15 = arith.constant 0 : index
    %c0_16 = arith.constant 0 : index
    %15 = vector.load %arg2[%c2_14, %c0_15, %c0_16] : memref<9x8x16xbf16, #tpu.memory_space<vmem>>, vector<1x8x16xbf16>
    %16 = vector.shape_cast %15 : vector<1x8x16xbf16> to vector<8x16xbf16>
    %cst_17 = arith.constant dense<0.000000e+00> : vector<288x16xf32>
    %17 = tpu.matmul %14, %16, %cst_17 {dimension_numbers = #tpu.dot_dimension_numbers<[1], [0], [0], [1], [0, 0, 1, 1], [], []>} : vector<288x8xbf16>, vector<8x16xbf16>, vector<288x16xf32> -> vector<288x16xf32>
    %18 = arith.addf %12, %17 : vector<288x16xf32>
    %c0_18 = arith.constant 0 : index
    %c18 = arith.constant 18 : index
    %c0_19 = arith.constant 0 : index
    %19 = vector.load %arg1[%c0_18, %c18, %c0_19] : memref<1x326x8xbf16, #tpu.memory_space<vmem>>, vector<1x288x8xbf16>
    %20 = vector.shape_cast %19 : vector<1x288x8xbf16> to vector<288x8xbf16>
    %c3 = arith.constant 3 : index
    %c0_20 = arith.constant 0 : index
    %c0_21 = arith.constant 0 : index
    %21 = vector.load %arg2[%c3, %c0_20, %c0_21] : memref<9x8x16xbf16, #tpu.memory_space<vmem>>, vector<1x8x16xbf16>
    %22 = vector.shape_cast %21 : vector<1x8x16xbf16> to vector<8x16xbf16>
    %cst_22 = arith.constant dense<0.000000e+00> : vector<288x16xf32>
    %23 = tpu.matmul %20, %22, %cst_22 {dimension_numbers = #tpu.dot_dimension_numbers<[1], [0], [0], [1], [0, 0, 1, 1], [], []>} : vector<288x8xbf16>, vector<8x16xbf16>, vector<288x16xf32> -> vector<288x16xf32>
    %24 = arith.addf %18, %23 : vector<288x16xf32>
    %c0_23 = arith.constant 0 : index
    %c19 = arith.constant 19 : index
    %c0_24 = arith.constant 0 : index
    %25 = vector.load %arg1[%c0_23, %c19, %c0_24] : memref<1x326x8xbf16, #tpu.memory_space<vmem>>, vector<1x288x8xbf16>
    %26 = vector.shape_cast %25 : vector<1x288x8xbf16> to vector<288x8xbf16>
    %c4 = arith.constant 4 : index
    %c0_25 = arith.constant 0 : index
    %c0_26 = arith.constant 0 : index
    %27 = vector.load %arg2[%c4, %c0_25, %c0_26] : memref<9x8x16xbf16, #tpu.memory_space<vmem>>, vector<1x8x16xbf16>
    %28 = vector.shape_cast %27 : vector<1x8x16xbf16> to vector<8x16xbf16>
    %cst_27 = arith.constant dense<0.000000e+00> : vector<288x16xf32>
    %29 = tpu.matmul %26, %28, %cst_27 {dimension_numbers = #tpu.dot_dimension_numbers<[1], [0], [0], [1], [0, 0, 1, 1], [], []>} : vector<288x8xbf16>, vector<8x16xbf16>, vector<288x16xf32> -> vector<288x16xf32>
    %30 = arith.addf %24, %29 : vector<288x16xf32>
    %c0_28 = arith.constant 0 : index
    %c20 = arith.constant 20 : index
    %c0_29 = arith.constant 0 : index
    %31 = vector.load %arg1[%c0_28, %c20, %c0_29] : memref<1x326x8xbf16, #tpu.memory_space<vmem>>, vector<1x288x8xbf16>
    %32 = vector.shape_cast %31 : vector<1x288x8xbf16> to vector<288x8xbf16>
    %c5 = arith.constant 5 : index
    %c0_30 = arith.constant 0 : index
    %c0_31 = arith.constant 0 : index
    %33 = vector.load %arg2[%c5, %c0_30, %c0_31] : memref<9x8x16xbf16, #tpu.memory_space<vmem>>, vector<1x8x16xbf16>
    %34 = vector.shape_cast %33 : vector<1x8x16xbf16> to vector<8x16xbf16>
    %cst_32 = arith.constant dense<0.000000e+00> : vector<288x16xf32>
    %35 = tpu.matmul %32, %34, %cst_32 {dimension_numbers = #tpu.dot_dimension_numbers<[1], [0], [0], [1], [0, 0, 1, 1], [], []>} : vector<288x8xbf16>, vector<8x16xbf16>, vector<288x16xf32> -> vector<288x16xf32>
    %36 = arith.addf %30, %35 : vector<288x16xf32>
    %c0_33 = arith.constant 0 : index
    %c36 = arith.constant 36 : index
    %c0_34 = arith.constant 0 : index
    %37 = vector.load %arg1[%c0_33, %c36, %c0_34] : memref<1x326x8xbf16, #tpu.memory_space<vmem>>, vector<1x288x8xbf16>
    %38 = vector.shape_cast %37 : vector<1x288x8xbf16> to vector<288x8xbf16>
    %c6 = arith.constant 6 : index
    %c0_35 = arith.constant 0 : index
    %c0_36 = arith.constant 0 : index
    %39 = vector.load %arg2[%c6, %c0_35, %c0_36] : memref<9x8x16xbf16, #tpu.memory_space<vmem>>, vector<1x8x16xbf16>
    %40 = vector.shape_cast %39 : vector<1x8x16xbf16> to vector<8x16xbf16>
    %cst_37 = arith.constant dense<0.000000e+00> : vector<288x16xf32>
    %41 = tpu.matmul %38, %40, %cst_37 {dimension_numbers = #tpu.dot_dimension_numbers<[1], [0], [0], [1], [0, 0, 1, 1], [], []>} : vector<288x8xbf16>, vector<8x16xbf16>, vector<288x16xf32> -> vector<288x16xf32>
    %42 = arith.addf %36, %41 : vector<288x16xf32>
    %c0_38 = arith.constant 0 : index
    %c37 = arith.constant 37 : index
    %c0_39 = arith.constant 0 : index
    %43 = vector.load %arg1[%c0_38, %c37, %c0_39] : memref<1x326x8xbf16, #tpu.memory_space<vmem>>, vector<1x288x8xbf16>
    %44 = vector.shape_cast %43 : vector<1x288x8xbf16> to vector<288x8xbf16>
    %c7 = arith.constant 7 : index
    %c0_40 = arith.constant 0 : index
    %c0_41 = arith.constant 0 : index
    %45 = vector.load %arg2[%c7, %c0_40, %c0_41] : memref<9x8x16xbf16, #tpu.memory_space<vmem>>, vector<1x8x16xbf16>
    %46 = vector.shape_cast %45 : vector<1x8x16xbf16> to vector<8x16xbf16>
    %cst_42 = arith.constant dense<0.000000e+00> : vector<288x16xf32>
    %47 = tpu.matmul %44, %46, %cst_42 {dimension_numbers = #tpu.dot_dimension_numbers<[1], [0], [0], [1], [0, 0, 1, 1], [], []>} : vector<288x8xbf16>, vector<8x16xbf16>, vector<288x16xf32> -> vector<288x16xf32>
    %48 = arith.addf %42, %47 : vector<288x16xf32>
    %c0_43 = arith.constant 0 : index
    %c38 = arith.constant 38 : index
    %c0_44 = arith.constant 0 : index
    %49 = vector.load %arg1[%c0_43, %c38, %c0_44] : memref<1x326x8xbf16, #tpu.memory_space<vmem>>, vector<1x288x8xbf16>
    %50 = vector.shape_cast %49 : vector<1x288x8xbf16> to vector<288x8xbf16>
    %c8 = arith.constant 8 : index
    %c0_45 = arith.constant 0 : index
    %c0_46 = arith.constant 0 : index
    %51 = vector.load %arg2[%c8, %c0_45, %c0_46] : memref<9x8x16xbf16, #tpu.memory_space<vmem>>, vector<1x8x16xbf16>
    %52 = vector.shape_cast %51 : vector<1x8x16xbf16> to vector<8x16xbf16>
    %cst_47 = arith.constant dense<0.000000e+00> : vector<288x16xf32>
    %53 = tpu.matmul %50, %52, %cst_47 {dimension_numbers = #tpu.dot_dimension_numbers<[1], [0], [0], [1], [0, 0, 1, 1], [], []>} : vector<288x8xbf16>, vector<8x16xbf16>, vector<288x16xf32> -> vector<288x16xf32>
    %54 = arith.addf %48, %53 : vector<288x16xf32>
    %c0_48 = arith.constant 0 : index
    %c0_49 = arith.constant 0 : index
    %55 = vector.load %arg3[%c0_48, %c0_49] : memref<1x16xf32, #tpu.memory_space<vmem>>, vector<1x16xf32>
    %56 = vector.broadcast %55 : vector<1x16xf32> to vector<288x16xf32>
    %57 = arith.mulf %54, %56 : vector<288x16xf32>
    %c0_50 = arith.constant 0 : index
    %c0_51 = arith.constant 0 : index
    %58 = vector.load %arg4[%c0_50, %c0_51] : memref<1x16xf32, #tpu.memory_space<vmem>>, vector<1x16xf32>
    %59 = vector.broadcast %58 : vector<1x16xf32> to vector<288x16xf32>
    %60 = arith.addf %57, %59 : vector<288x16xf32>
    %cst_52 = arith.constant 0.000000e+00 : f32
    %61 = vector.broadcast %cst_52 : f32 to vector<288x16xf32>
    %62 = arith.maximumf %60, %61 : vector<288x16xf32>
    %63 = arith.truncf %62 : vector<288x16xf32> to vector<288x16xbf16>
    %c0_53 = arith.constant 0 : index
    %c0_54 = arith.constant 0 : index
    %c0_55 = arith.constant 0 : index
    %64 = vector.load %arg5[%c0_53, %c0_54, %c0_55] : memref<1x288x16xbf16, #tpu.memory_space<vmem>>, vector<1x288x16xbf16>
    %65 = vector.shape_cast %64 : vector<1x288x16xbf16> to vector<288x16xbf16>
    %66 = vector.shape_cast %63 : vector<288x16xbf16> to vector<1x288x16xbf16>
    tpu.vector_store %arg5[%c0_53, %c0_54, %c0_55], %66 {strides = array<i32>} : memref<1x288x16xbf16, #tpu.memory_space<vmem>>, vector<1x288x16xbf16>,
    return
  }
  func.func @transform_0(%arg0: i32) -> (i32, i32, i32) {
    %c0_i32 = arith.constant 0 : i32
    %c0_i32_0 = arith.constant 0 : i32
    %c0_i32_1 = arith.constant 0 : i32
    return %arg0, %c0_i32, %c0_i32_0 : i32, i32, i32
  }
  func.func @transform_1(%arg0: i32) -> (i32, i32, i32) {
    %c0_i32 = arith.constant 0 : i32
    %c0_i32_0 = arith.constant 0 : i32
    %c0_i32_1 = arith.constant 0 : i32
    %c0_i32_2 = arith.constant 0 : i32
    return %c0_i32, %c0_i32_0, %c0_i32_1 : i32, i32, i32
  }
  func.func @transform_2(%arg0: i32) -> (i32, i32) {
    %c0_i32 = arith.constant 0 : i32
    %c0_i32_0 = arith.constant 0 : i32
    %c0_i32_1 = arith.constant 0 : i32
    return %c0_i32, %c0_i32_0 : i32, i32
  }
  func.func @transform_3(%arg0: i32) -> (i32, i32) {
    %c0_i32 = arith.constant 0 : i32
    %c0_i32_0 = arith.constant 0 : i32
    %c0_i32_1 = arith.constant 0 : i32
    return %c0_i32, %c0_i32_0 : i32, i32
  }
  func.func @transform_4(%arg0: i32) -> (i32, i32, i32) {
    %c0_i32 = arith.constant 0 : i32
    %c0_i32_0 = arith.constant 0 : i32
    %c0_i32_1 = arith.constant 0 : i32
    return %arg0, %c0_i32, %c0_i32_0 : i32, i32, i32
  }
}

</mosaic_0001>

<llo_original>
// kernel: tpu_custom_call.1
$region0: #{tpu_custom_call.1}
  #allocation0 [shape = 'u32[]', space=smem, size = 0x4, offset = 0x4, fixed_abs, tag = 'smem constant byte address 0x4 - core index']
  #allocation1 [shape = 'u32[144,128]{1,0:T(1,128)}', space=vmem, size = 0x12000, scoped, tag = 'internal scratch']
  %s0 = inlined_call_operand.vmem [shape: bf16[2,326,8], index: 0, kind: input, shape index: {}]
  %s1 = inlined_call_operand.vmem [shape: bf16[9,8,16], index: 1, kind: input, shape index: {}]
  %s2 = inlined_call_operand.vmem [shape: f32[1,16], index: 2, kind: input, shape index: {}]
  %s3 = inlined_call_operand.vmem [shape: f32[1,16], index: 3, kind: input, shape index: {}]
  %s4 = inlined_call_operand.vmem [shape: bf16[2,288,16], index: 4, kind: output, shape index: {}]
  %s5 = sld [smem:[#allocation0]]
  $region49: #{tpu_custom_call.1} parent=0
    _
  %s7 = ssub.s32 1, %s5
  %s8 = scalar_select 0, %s7, %s5
  loop: start=0, step=1, limit=4
  $region2: #{tpu_custom_call.1} parent=0 // loop_pre_header
    _
  $region3: #{tpu_custom_call.1} parent=0 // loop_header
    %s10 = sphi 0, %s14
    %p11 = scmp.ge.s32.totalorder %s10, 4
    %s20 = sphi 0, %s22
    %s23 = sphi 0, %s20
    %s24 = sphi 0, %s23
    %s40 = sphi 0, %s24
    %s44 = sphi 0, %s44
    %s46 = sphi 0, %s44
    %s47 = sphi 0, %s46
    %s61 = sphi 0, %s47
    %s65 = sphi 0, %s65
    %s67 = sphi 0, %s65
    %s68 = sphi 0, %s67
    %s82 = sphi 0, %s68
    %s86 = sphi 0, %s86
    %s88 = sphi 0, %s86
    %s89 = sphi 0, %s88
    %s103 = sphi 0, %s89
    %s109 = sphi 0, %s111
    %s112 = sphi 0, %s109
    %s113 = sphi 0, %s112
    %s129 = sphi 0, %s113
  $region4: #{tpu_custom_call.1} parent=0 // loop_header_branch
    %13 = sbr.rel (%p11) target = $region8
  $region5: #{tpu_custom_call.1} parent=0 // loop_body
    %s15 = ssub.s32 %s10, 1
    %s16 = ssub.s32 %s10, 2
    %s17 = sadd.s32 %s10, 1
    %s18 = ssub.s32 %s10, %s17
    %p19 = scmp.eq.s32.totalorder %s18, 0
    %s21 = sadd.s32 %s20, 1
    %s22 = scalar_select %p19, %s20, %s21
    %p25 = pneg %p19
    %p26 = scmp.eq.s32.totalorder %s10, 1
    %p27 = por %p25, %p26
    %p28 = scmp.ne.s32.totalorder %s20, %s23
    %p29 = scmp.eq.s32.totalorder %s10, 0
    %p30 = por %p28, %p29
    %p31 = scmp.ne.s32.totalorder %s20, %s23
    %p32 = scmp.eq.s32.totalorder %s15, 1
    %p33 = por %p31, %p32
    %p34 = scmp.ne.s32.totalorder %s23, %s24
    %p35 = scmp.eq.s32.totalorder %s15, 0
    %p36 = por %p34, %p35
    %p37 = scmp.ne.s32.totalorder %s23, %s24
    %p38 = scmp.eq.s32.totalorder %s16, 1
    %p39 = por %p37, %p38
    %p41 = scmp.ne.s32.totalorder %s24, %s40
    %p42 = scmp.eq.s32.totalorder %s16, 0
    %p43 = por %p41, %p42
    %s45 = sadd.s32 %s44, 1
    %p48 = scmp.eq.s32.totalorder %s10, 1
    %p49 = scmp.ne.s32.totalorder %s44, %s46
    %p50 = scmp.eq.s32.totalorder %s10, 0
    %p51 = por %p49, %p50
    %p52 = scmp.ne.s32.totalorder %s44, %s46
    %p53 = scmp.eq.s32.totalorder %s15, 1
    %p54 = por %p52, %p53
    %p55 = scmp.ne.s32.totalorder %s46, %s47
    %p56 = scmp.eq.s32.totalorder %s15, 0
    %p57 = por %p55, %p56
    %p58 = scmp.ne.s32.totalorder %s46, %s47
    %p59 = scmp.eq.s32.totalorder %s16, 1
    %p60 = por %p58, %p59
    %p62 = scmp.ne.s32.totalorder %s47, %s61
    %p63 = scmp.eq.s32.totalorder %s16, 0
    %p64 = por %p62, %p63
    %s66 = sadd.s32 %s65, 1
    %p69 = scmp.eq.s32.totalorder %s10, 1
    %p70 = scmp.ne.s32.totalorder %s65, %s67
    %p71 = scmp.eq.s32.totalorder %s10, 0
    %p72 = por %p70, %p71
    %p73 = scmp.ne.s32.totalorder %s65, %s67
    %p74 = scmp.eq.s32.totalorder %s15, 1
    %p75 = por %p73, %p74
    %p76 = scmp.ne.s32.totalorder %s67, %s68
    %p77 = scmp.eq.s32.totalorder %s15, 0
    %p78 = por %p76, %p77
    %p79 = scmp.ne.s32.totalorder %s67, %s68
    %p80 = scmp.eq.s32.totalorder %s16, 1
    %p81 = por %p79, %p80
    %p83 = scmp.ne.s32.totalorder %s68, %s82
    %p84 = scmp.eq.s32.totalorder %s16, 0
    %p85 = por %p83, %p84
    %s87 = sadd.s32 %s86, 1
    %p90 = scmp.eq.s32.totalorder %s10, 1
    %p91 = scmp.ne.s32.totalorder %s86, %s88
    %p92 = scmp.eq.s32.totalorder %s10, 0
    %p93 = por %p91, %p92
    %p94 = scmp.ne.s32.totalorder %s86, %s88
    %p95 = scmp.eq.s32.totalorder %s15, 1
    %p96 = por %p94, %p95
    %p97 = scmp.ne.s32.totalorder %s88, %s89
    %p98 = scmp.eq.s32.totalorder %s15, 0
    %p99 = por %p97, %p98
    %p100 = scmp.ne.s32.totalorder %s88, %s89
    %p101 = scmp.eq.s32.totalorder %s16, 1
    %p102 = por %p100, %p101
    %p104 = scmp.ne.s32.totalorder %s89, %s103
    %p105 = scmp.eq.s32.totalorder %s16, 0
    %p106 = por %p104, %p105
    %s107 = ssub.s32 %s10, %s17
    %p108 = scmp.eq.s32.totalorder %s107, 0
    %s110 = sadd.s32 %s109, 1
    %s111 = scalar_select %p108, %s109, %s110
    %p114 = pneg %p108
    %p115 = scmp.eq.s32.totalorder %s10, 1
    %p116 = por %p114, %p115
    %p117 = scmp.ne.s32.totalorder %s109, %s112
    %p118 = scmp.eq.s32.totalorder %s10, 0
    %p119 = por %p117, %p118
    %p120 = scmp.ne.s32.totalorder %s109, %s112
    %p121 = scmp.eq.s32.totalorder %s15, 1
    %p122 = por %p120, %p121
    %p123 = scmp.ne.s32.totalorder %s112, %s113
    %p124 = scmp.eq.s32.totalorder %s15, 0
    %p125 = por %p123, %p124
    %p126 = scmp.ne.s32.totalorder %s112, %s113
    %p127 = scmp.eq.s32.totalorder %s16, 1
    %p128 = por %p126, %p127
    %p130 = scmp.ne.s32.totalorder %s113, %s129
    %p131 = scmp.eq.s32.totalorder %s16, 0
    %p132 = por %p130, %p131
    %p133 = scmp.le.s32.totalorder 1, %s10
    %p134 = scmp.lt.s32.totalorder %s10, 3
    %p135 = pnand %p133, %p134
    %p136 = pneg %p135
    // Predicated region
    $region9: #{tpu_custom_call.1} parent=5 // pred_check
      _
    $region10: #{tpu_custom_call.1} parent=5 // pred_check_branch
      %138 = sbr.rel (%p135) target = $region12
    $region11: #{tpu_custom_call.1} parent=5 // pred_region
      %s139 = ssub.s32 %s10, 1
      // Predicated region
      $region13: #{tpu_custom_call.1} parent=11 // pred_check
        %p140 = pneg %p57
      $region14: #{tpu_custom_call.1} parent=11 // pred_check_branch
        %142 = sbr.rel (%p140) target = $region16
      $region15: #{tpu_custom_call.1} parent=11 // pred_region
        _
      $region16: #{tpu_custom_call.1} parent=11 // pred_fallthru
        _
      // Predicated region
      $region17: #{tpu_custom_call.1} parent=11 // pred_check
        %p143 = pneg %p78
      $region18: #{tpu_custom_call.1} parent=11 // pred_check_branch
        %145 = sbr.rel (%p143) target = $region20
      $region19: #{tpu_custom_call.1} parent=11 // pred_region
        _
      $region20: #{tpu_custom_call.1} parent=11 // pred_fallthru
        _
      // Predicated region
      $region21: #{tpu_custom_call.1} parent=11 // pred_check
        %p146 = pneg %p99
      $region22: #{tpu_custom_call.1} parent=11 // pred_check_branch
        %148 = sbr.rel (%p146) target = $region24
      $region23: #{tpu_custom_call.1} parent=11 // pred_region
        _
      $region24: #{tpu_custom_call.1} parent=11 // pred_fallthru
        _
    $region12: #{tpu_custom_call.1} parent=5 // pred_fallthru
      _
    %p149 = scmp.lt.s32.totalorder %s10, 2
    // Predicated region
    $region25: #{tpu_custom_call.1} parent=5 // pred_check
      %p150 = pneg %p149
    $region26: #{tpu_custom_call.1} parent=5 // pred_check_branch
      %152 = sbr.rel (%p150) target = $region28
    $region27: #{tpu_custom_call.1} parent=5 // pred_region
      // Predicated region
      $region29: #{tpu_custom_call.1} parent=27 // pred_check
        %p153 = pneg %p30
      $region30: #{tpu_custom_call.1} parent=27 // pred_check_branch
        %155 = sbr.rel (%p153) target = $region32
      $region31: #{tpu_custom_call.1} parent=27 // pred_region
        %p156 = scmp.lt.s32.totalorder %s10, 1
        %s157 = scalar_select %p156, %s10, 1
        %s158 = smul.addr %s157, 41
        %s159 = smul.addr %s158, 4
        %s160 = scalar_lea.vmem %s0, %s159
      $region32: #{tpu_custom_call.1} parent=27 // pred_fallthru
        _
    $region28: #{tpu_custom_call.1} parent=5 // pred_fallthru
      _
    %p161 = scmp.le.s32.totalorder 1, %s10
    %p162 = scmp.lt.s32.totalorder %s10, 3
    %p163 = pnand %p161, %p162
    %p164 = pneg %p163
    // Predicated region
    $region33: #{tpu_custom_call.1} parent=5 // pred_check
      _
    $region34: #{tpu_custom_call.1} parent=5 // pred_check_branch
      %166 = sbr.rel (%p163) target = $region36
    $region35: #{tpu_custom_call.1} parent=5 // pred_region
      %s167 = ssub.s32 %s10, 1
      %p168 = scmp.lt.s32.totalorder %s15, 1
      %s169 = scalar_select %p168, %s15, 1
      %s170 = smul.addr %s169, 41
      %s171 = smul.addr %s170, 4
      %s172 = scalar_lea.vmem %s0, %s171
      %p173 = pneg %p36
      %p174 = pneg %p33
      %p175 = pneg %p57
      %p176 = pneg %p54
      %p177 = pneg %p78
      %p178 = pneg %p75
      %p179 = pneg %p99
      %p180 = pneg %p96
      %p181 = pneg %p125
      %p182 = pneg %p122
      %p183 = scmp.lt.s32.totalorder %s15, 1
      %s184 = scalar_select %p183, %s15, 1
      %s185 = smul.addr %s184, 36
      %s186 = smul.addr %s185, 4
      %s187 = scalar_lea.vmem %s4, %s186
      %p188 = scmp.lt.s32.totalorder %s15, 1
      %s189 = scalar_select %p188, %s15, 1
      %s190 = smul.addr %s189, 41
      %s191 = smul.addr %s190, 4
      %s192 = scalar_lea.vmem %s0, %s191
      %p193 = scmp.lt.s32.totalorder %s15, 1
      %s194 = scalar_select %p193, %s15, 1
      %s195 = smul.addr %s194, 36
      %s196 = smul.addr %s195, 4
      %s197 = scalar_lea.vmem %s4, %s196
      %v199 = vld [vmem:[%s192] sm:$0xf]
      %v200 = vld [vmem:[%s192 + $0x4] sm:$0xf]
      %v201 = vld [vmem:[%s192 + $0x8] sm:$0xf]
      %v202 = vld [vmem:[%s192 + $0xc] sm:$0xf]
      %v203 = vld [vmem:[%s192 + $0x10] sm:$0xf]
      %v204 = vld [vmem:[%s192 + $0x14] sm:$0xf]
      %v205 = vld [vmem:[%s192 + $0x18] sm:$0xf]
      %v206 = vld [vmem:[%s192 + $0x1c] sm:$0xf]
      %v207 = vld [vmem:[%s192 + $0x20] sm:$0xf]
      %v208 = vld [vmem:[%s192 + $0x24] sm:$0xf]
      %v209 = vld [vmem:[%s192 + $0x28] sm:$0xf]
      %v210 = vld [vmem:[%s192 + $0x2c] sm:$0xf]
      %v211 = vld [vmem:[%s192 + $0x30] sm:$0xf]
      %v212 = vld [vmem:[%s192 + $0x34] sm:$0xf]
      %v213 = vld [vmem:[%s192 + $0x38] sm:$0xf]
      %v214 = vld [vmem:[%s192 + $0x3c] sm:$0xf]
      %v215 = vld [vmem:[%s192 + $0x40] sm:$0xf]
      %v216 = vld [vmem:[%s192 + $0x44] sm:$0xf]
      %v217 = vld [vmem:[%s192 + $0x48] sm:$0xf]
      %v218 = vld [vmem:[%s192 + $0x4c] sm:$0xf]
      %v219 = vld [vmem:[%s192 + $0x50] sm:$0xf]
      %v220 = vld [vmem:[%s192 + $0x54] sm:$0xf]
      %v221 = vld [vmem:[%s192 + $0x58] sm:$0xf]
      %v222 = vld [vmem:[%s192 + $0x5c] sm:$0xf]
      %v223 = vld [vmem:[%s192 + $0x60] sm:$0xf]
      %v224 = vld [vmem:[%s192 + $0x64] sm:$0xf]
      %v225 = vld [vmem:[%s192 + $0x68] sm:$0xf]
      %v226 = vld [vmem:[%s192 + $0x6c] sm:$0xf]
      %v227 = vld [vmem:[%s192 + $0x70] sm:$0xf]
      %v228 = vld [vmem:[%s192 + $0x74] sm:$0xf]
      %v229 = vld [vmem:[%s192 + $0x78] sm:$0xf]
      %v230 = vld [vmem:[%s192 + $0x7c] sm:$0xf]
      %v231 = vld [vmem:[%s192 + $0x80] sm:$0xf]
      %v232 = vld [vmem:[%s192 + $0x84] sm:$0xf]
      %v233 = vld [vmem:[%s192 + $0x88] sm:$0xf]
      %v234 = vld [vmem:[%s192 + $0x8c] sm:$0xf]
      %v235 = vld [vmem:[%s1] sm:$0xf]
      %v236 = vld [vmem:[%s192 + $0x90] sm:$0x1]
      %s237 = scalar_lea.vmem %s1, 4
      %v238 = vld [vmem:[%s237] sm:$0xf]
      %v276 = vunpack.c.l.b16 %v199
      %v277 = vunpack.c.l.b16 %v200
      %v278 = vunpack.c.l.b16 %v201
      %v279 = vunpack.c.l.b16 %v202
      %v280 = vunpack.c.l.b16 %v203
      %v281 = vunpack.c.l.b16 %v204
      %v282 = vunpack.c.l.b16 %v205
      %v283 = vunpack.c.l.b16 %v206
      %v284 = vunpack.c.l.b16 %v207
      %v285 = vunpack.c.l.b16 %v208
      %v286 = vunpack.c.l.b16 %v209
      %v287 = vunpack.c.l.b16 %v210
      %v288 = vunpack.c.l.b16 %v211
      %v289 = vunpack.c.l.b16 %v212
      %v290 = vunpack.c.l.b16 %v213
      %v291 = vunpack.c.l.b16 %v214
      %v292 = vunpack.c.l.b16 %v215
      %v293 = vunpack.c.l.b16 %v216
      %v294 = vunpack.c.l.b16 %v217
      %v295 = vunpack.c.l.b16 %v218
      %v296 = vunpack.c.l.b16 %v219
      %v297 = vunpack.c.l.b16 %v220
      %v298 = vunpack.c.l.b16 %v221
      %v299 = vunpack.c.l.b16 %v222
      %v300 = vunpack.c.l.b16 %v223
      %v301 = vunpack.c.l.b16 %v224
      %v302 = vunpack.c.l.b16 %v225
      %v303 = vunpack.c.l.b16 %v226
      %v304 = vunpack.c.l.b16 %v227
      %v305 = vunpack.c.l.b16 %v228
      %v306 = vunpack.c.l.b16 %v229
      %v307 = vunpack.c.l.b16 %v230
      %v308 = vunpack.c.l.b16 %v231
      %v309 = vunpack.c.l.b16 %v232
      %v310 = vunpack.c.l.b16 %v233
      %v311 = vunpack.c.l.b16 %v234
      %v312 = vunpack.c.l.b16 %v236
      %v313 = vpack.c.b16 %v277, %v276
      %v314 = vpack.c.b16 %v279, %v278
      %v315 = vpack.c.b16 %v281, %v280
      %v316 = vpack.c.b16 %v283, %v282
      %v317 = vpack.c.b16 %v285, %v284
      %v318 = vpack.c.b16 %v287, %v286
      %v319 = vpack.c.b16 %v289, %v288
      %v320 = vpack.c.b16 %v291, %v290
      %v321 = vpack.c.b16 %v293, %v292
      %v322 = vpack.c.b16 %v295, %v294
      %v323 = vpack.c.b16 %v297, %v296
      %v324 = vpack.c.b16 %v299, %v298
      %v325 = vpack.c.b16 %v301, %v300
      %v326 = vpack.c.b16 %v303, %v302
      %v327 = vpack.c.b16 %v305, %v304
      %v328 = vpack.c.b16 %v307, %v306
      %v329 = vpack.c.b16 %v309, %v308
      %v330 = vpack.c.b16 %v311, %v310
      %v331 = vpack.c.b16 %v312, %v312
      %vm332 = vsmask.f32 7424
      %v334 = vshrl.u32 %v313, 16
      %v336 = vshll.u32 %v313, 16
      %v338 = vrot.slane %v336, 1
      %v339 = vor.u32 %v334, %v338
      %v341 = vshll.u32 %v314, 16
      %v343 = vrot.slane %v341, 1
      %v344 = vsel %vm332, %v339, %v343
      %v345 = vshrl.u32 %v314, 16
      %v347 = vor.u32 %v345, %v343
      %v349 = vshll.u32 %v315, 16
      %v351 = vrot.slane %v349, 1
      %v352 = vsel %vm332, %v347, %v351
      %v353 = vshrl.u32 %v315, 16
      %v355 = vor.u32 %v353, %v351
      %v357 = vshll.u32 %v316, 16
      %v359 = vrot.slane %v357, 1
      %v360 = vsel %vm332, %v355, %v359
      %v361 = vshrl.u32 %v316, 16
      %v363 = vor.u32 %v361, %v359
      %v365 = vshll.u32 %v317, 16
      %v367 = vrot.slane %v365, 1
      %v368 = vsel %vm332, %v363, %v367
      %v369 = vshrl.u32 %v317, 16
      %v371 = vor.u32 %v369, %v367
      %v373 = vshll.u32 %v318, 16
      %v375 = vrot.slane %v373, 1
      %v376 = vsel %vm332, %v371, %v375
      %v377 = vshrl.u32 %v318, 16
      %v379 = vor.u32 %v377, %v375
      %v381 = vshll.u32 %v319, 16
      %v383 = vrot.slane %v381, 1
      %v384 = vsel %vm332, %v379, %v383
      %v385 = vshrl.u32 %v319, 16
      %v387 = vor.u32 %v385, %v383
      %v389 = vshll.u32 %v320, 16
      %v391 = vrot.slane %v389, 1
      %v392 = vsel %vm332, %v387, %v391
      %v393 = vshrl.u32 %v320, 16
      %v395 = vor.u32 %v393, %v391
      %v397 = vshll.u32 %v321, 16
      %v399 = vrot.slane %v397, 1
      %v400 = vsel %vm332, %v395, %v399
      %v401 = vshrl.u32 %v321, 16
      %v403 = vor.u32 %v401, %v399
      %v405 = vshll.u32 %v322, 16
      %v407 = vrot.slane %v405, 1
      %v408 = vsel %vm332, %v403, %v407
      %v409 = vshrl.u32 %v322, 16
      %v411 = vor.u32 %v409, %v407
      %v413 = vshll.u32 %v323, 16
      %v415 = vrot.slane %v413, 1
      %v416 = vsel %vm332, %v411, %v415
      %v417 = vshrl.u32 %v323, 16
      %v419 = vor.u32 %v417, %v415
      %v421 = vshll.u32 %v324, 16
      %v423 = vrot.slane %v421, 1
      %v424 = vsel %vm332, %v419, %v423
      %v425 = vshrl.u32 %v324, 16
      %v427 = vor.u32 %v425, %v423
      %v429 = vshll.u32 %v325, 16
      %v431 = vrot.slane %v429, 1
      %v432 = vsel %vm332, %v427, %v431
      %v433 = vshrl.u32 %v325, 16
      %v435 = vor.u32 %v433, %v431
      %v437 = vshll.u32 %v326, 16
      %v439 = vrot.slane %v437, 1
      %v440 = vsel %vm332, %v435, %v439
      %v441 = vshrl.u32 %v326, 16
      %v443 = vor.u32 %v441, %v439
      %v445 = vshll.u32 %v327, 16
      %v447 = vrot.slane %v445, 1
      %v448 = vsel %vm332, %v443, %v447
      %v449 = vshrl.u32 %v327, 16
      %v451 = vor.u32 %v449, %v447
      %v453 = vshll.u32 %v328, 16
      %v455 = vrot.slane %v453, 1
      %v456 = vsel %vm332, %v451, %v455
      %v457 = vshrl.u32 %v328, 16
      %v459 = vor.u32 %v457, %v455
      %v461 = vshll.u32 %v329, 16
      %v463 = vrot.slane %v461, 1
      %v464 = vsel %vm332, %v459, %v463
      %v465 = vshrl.u32 %v329, 16
      %v467 = vor.u32 %v465, %v463
      %v469 = vshll.u32 %v330, 16
      %v471 = vrot.slane %v469, 1
      %v472 = vsel %vm332, %v467, %v471
      %v473 = vshrl.u32 %v330, 16
      %v475 = vor.u32 %v473, %v471
      %v477 = vshll.u32 %v331, 16
      %v479 = vrot.slane %v477, 1
      %v480 = vsel %vm332, %v475, %v479
      %vm481 = vcmask 64512
      %v483 = vsel %vm481, %v344, 0
      %v486 = vsel %vm481, %v352, 0
      %v489 = vsel %vm481, %v360, 0
      %v492 = vsel %vm481, %v368, 0
      %v495 = vsel %vm481, %v376, 0
      %v498 = vsel %vm481, %v384, 0
      %v501 = vsel %vm481, %v392, 0
      %v504 = vsel %vm481, %v400, 0
      %v507 = vsel %vm481, %v408, 0
      %v510 = vsel %vm481, %v416, 0
      %v513 = vsel %vm481, %v424, 0
      %v516 = vsel %vm481, %v432, 0
      %v519 = vsel %vm481, %v440, 0
      %v522 = vsel %vm481, %v448, 0
      %v525 = vsel %vm481, %v456, 0
      %v528 = vsel %vm481, %v464, 0
      %v531 = vsel %vm481, %v472, 0
      %v534 = vsel %vm481, %v480, 0
      %vm536 = vcmask 1043456
      %v538 = vsel %vm536, %v238, 0
      %540 = vmatprep.subr.bf16.mxu0 0
      %541 = vmatpush1.bf16.msra.mxu0 %v538
      %542 = vmatprep.subr.bf16.mxu0 0
      %543 = vmatpush1.bf16.msra.mxu0 0
      %544 = vmatprep.subr.bf16.mxu0 0
      %545 = vmatpush1.bf16.msra.mxu0 0
      %546 = vmatprep.subr.bf16.mxu0 0
      %547 = vmatpush1.bf16.msra.mxu0 0
      %548 = vmatprep.subr.bf16.mxu0 0
      %549 = vmatpush1.bf16.msra.mxu0 0
      %550 = vmatprep.subr.bf16.mxu0 0
      %551 = vmatpush1.bf16.msra.mxu0 0
      %552 = vmatprep.subr.bf16.mxu0 0
      %553 = vmatpush1.bf16.msra.mxu0 0
      %554 = vmatprep.subr.bf16.mxu0 0
      %555 = vmatpush1.bf16.msra.mxu0 0
      %556 = vmatprep.subr.bf16.mxu0 0
      %557 = vmatpush1.bf16.msra.mxu0 0
      %558 = vmatprep.subr.bf16.mxu0 0
      %559 = vmatpush1.bf16.msra.mxu0 0
      %560 = vmatprep.subr.bf16.mxu0 0
      %561 = vmatpush1.bf16.msra.mxu0 0
      %562 = vmatprep.subr.bf16.mxu0 0
      %563 = vmatpush1.bf16.msra.mxu0 0
      %564 = vmatprep.subr.bf16.mxu0 0
      %565 = vmatpush1.bf16.msra.mxu0 0
      %566 = vmatprep.subr.bf16.mxu0 0
      %567 = vmatpush1.bf16.msra.mxu0 0
      %568 = vmatprep.subr.bf16.mxu0 0
      %569 = vmatpush1.bf16.msra.mxu0 0
      %570 = vmatprep.subr.bf16.mxu0 0
      %571 = vmatpush1.bf16.msra.mxu0 0
      %572 = vmatprep.mubr.bf16.mxu0 0
      %573 = vmatmul.mubr.bf16.gmra.mrb[0].mxu0 %v483
      %v574 = vpop.f32.mrb[0].mxu0
      %v575 = vadd.f32 0.0, %v574
      %v576 = vpop.f32.mrb[0].mxu0
      %v577 = vpop.f32.mrb[0].mxu0
      %v578 = vadd.f32 0.0, %v577
      %v579 = vpop.f32.mrb[0].mxu0
      %580 = vmatprep.mubr.bf16.mxu0 0
      %581 = vmatmul.mubr.bf16.gmra.mrb[0].mxu0 %v486
      %v582 = vpop.f32.mrb[0].mxu0
      %v583 = vadd.f32 0.0, %v582
      %v584 = vpop.f32.mrb[0].mxu0
      %v585 = vpop.f32.mrb[0].mxu0
      %v586 = vadd.f32 0.0, %v585
      %v587 = vpop.f32.mrb[0].mxu0
      %588 = vmatprep.mubr.bf16.mxu0 0
      %589 = vmatmul.mubr.bf16.gmra.mrb[0].mxu0 %v489
      %v590 = vpop.f32.mrb[0].mxu0
      %v591 = vadd.f32 0.0, %v590
      %v592 = vpop.f32.mrb[0].mxu0
      %v593 = vpop.f32.mrb[0].mxu0
      %v594 = vadd.f32 0.0, %v593
      %v595 = vpop.f32.mrb[0].mxu0
      %596 = vmatprep.mubr.bf16.mxu0 0
      %597 = vmatmul.mubr.bf16.gmra.mrb[0].mxu0 %v492
      %v598 = vpop.f32.mrb[0].mxu0
      %v599 = vadd.f32 0.0, %v598
      %v600 = vpop.f32.mrb[0].mxu0
      %v601 = vpop.f32.mrb[0].mxu0
      %v602 = vadd.f32 0.0, %v601
      %v603 = vpop.f32.mrb[0].mxu0
      %604 = vmatprep.mubr.bf16.mxu0 0
      %605 = vmatmul.mubr.bf16.gmra.mrb[0].mxu0 %v495
      %v606 = vpop.f32.mrb[0].mxu0
      %v607 = vadd.f32 0.0, %v606
      %v608 = vpop.f32.mrb[0].mxu0
      %v609 = vpop.f32.mrb[0].mxu0
      %v610 = vadd.f32 0.0, %v609
      %v611 = vpop.f32.mrb[0].mxu0
      %612 = vmatprep.mubr.bf16.mxu0 0
      %613 = vmatmul.mubr.bf16.gmra.mrb[0].mxu0 %v498
      %v614 = vpop.f32.mrb[0].mxu0
      %v615 = vadd.f32 0.0, %v614
      %v616 = vpop.f32.mrb[0].mxu0
      %v617 = vpop.f32.mrb[0].mxu0
      %v618 = vadd.f32 0.0, %v617
      %v619 = vpop.f32.mrb[0].mxu0
      %620 = vmatprep.mubr.bf16.mxu0 0
      %621 = vmatmul.mubr.bf16.gmra.mrb[0].mxu0 %v501
      %v622 = vpop.f32.mrb[0].mxu0
      %v623 = vadd.f32 0.0, %v622
      %v624 = vpop.f32.mrb[0].mxu0
      %v625 = vpop.f32.mrb[0].mxu0
      %v626 = vadd.f32 0.0, %v625
      %v627 = vpop.f32.mrb[0].mxu0
      %628 = vmatprep.mubr.bf16.mxu0 0
      %629 = vmatmul.mubr.bf16.gmra.mrb[0].mxu0 %v504
      %v630 = vpop.f32.mrb[0].mxu0
      %v631 = vadd.f32 0.0, %v630
      %v632 = vpop.f32.mrb[0].mxu0
      %v633 = vpop.f32.mrb[0].mxu0
      %v634 = vadd.f32 0.0, %v633
      %v635 = vpop.f32.mrb[0].mxu0
      %636 = vmatprep.mubr.bf16.mxu0 0
      %637 = vmatmul.mubr.bf16.gmra.mrb[0].mxu0 %v507
      %v638 = vpop.f32.mrb[0].mxu0
      %v639 = vadd.f32 0.0, %v638
      %v640 = vpop.f32.mrb[0].mxu0
      %v641 = vpop.f32.mrb[0].mxu0
      %v642 = vadd.f32 0.0, %v641
      %v643 = vpop.f32.mrb[0].mxu0
      %644 = vmatprep.mubr.bf16.mxu0 0
      %645 = vmatmul.mubr.bf16.gmra.mrb[0].mxu0 %v510
      %v646 = vpop.f32.mrb[0].mxu0
      %v647 = vadd.f32 0.0, %v646
      %v648 = vpop.f32.mrb[0].mxu0
      %v649 = vpop.f32.mrb[0].mxu0
      %v650 = vadd.f32 0.0, %v649
      %v651 = vpop.f32.mrb[0].mxu0
      %652 = vmatprep.mubr.bf16.mxu0 0
      %653 = vmatmul.mubr.bf16.gmra.mrb[0].mxu0 %v513
      %v654 = vpop.f32.mrb[0].mxu0
      %v655 = vadd.f32 0.0, %v654
      %v656 = vpop.f32.mrb[0].mxu0
      %v657 = vpop.f32.mrb[0].mxu0
      %v658 = vadd.f32 0.0, %v657
      %v659 = vpop.f32.mrb[0].mxu0
      %660 = vmatprep.mubr.bf16.mxu0 0
      %661 = vmatmul.mubr.bf16.gmra.mrb[0].mxu0 %v516
      %v662 = vpop.f32.mrb[0].mxu0
      %v663 = vadd.f32 0.0, %v662
      %v664 = vpop.f32.mrb[0].mxu0
      %v665 = vpop.f32.mrb[0].mxu0
      %v666 = vadd.f32 0.0, %v665
      %v667 = vpop.f32.mrb[0].mxu0
      %668 = vmatprep.mubr.bf16.mxu0 0
      %669 = vmatmul.mubr.bf16.gmra.mrb[0].mxu0 %v519
      %v670 = vpop.f32.mrb[0].mxu0
      %v671 = vadd.f32 0.0, %v670
      %v672 = vpop.f32.mrb[0].mxu0
      %v673 = vpop.f32.mrb[0].mxu0
      %v674 = vadd.f32 0.0, %v673
      %v675 = vpop.f32.mrb[0].mxu0
      %676 = vmatprep.mubr.bf16.mxu0 0
      %677 = vmatmul.mubr.bf16.gmra.mrb[0].mxu0 %v522
      %v678 = vpop.f32.mrb[0].mxu0
      %v679 = vadd.f32 0.0, %v678
      %v680 = vpop.f32.mrb[0].mxu0
      %v681 = vpop.f32.mrb[0].mxu0
      %v682 = vadd.f32 0.0, %v681
      %v683 = vpop.f32.mrb[0].mxu0
      %684 = vmatprep.mubr.bf16.mxu0 0
      %685 = vmatmul.mubr.bf16.gmra.mrb[0].mxu0 %v525
      %v686 = vpop.f32.mrb[0].mxu0
      %v687 = vadd.f32 0.0, %v686
      %v688 = vpop.f32.mrb[0].mxu0
      %v689 = vpop.f32.mrb[0].mxu0
      %v690 = vadd.f32 0.0, %v689
      %v691 = vpop.f32.mrb[0].mxu0
      %692 = vmatprep.mubr.bf16.mxu0 0
      %693 = vmatmul.mubr.bf16.gmra.mrb[0].mxu0 %v528
      %v694 = vpop.f32.mrb[0].mxu0
      %v695 = vadd.f32 0.0, %v694
      %v696 = vpop.f32.mrb[0].mxu0
      %v697 = vpop.f32.mrb[0].mxu0
      %v698 = vadd.f32 0.0, %v697
      %v699 = vpop.f32.mrb[0].mxu0
      %700 = vmatprep.mubr.bf16.mxu0 0
      %701 = vmatmul.mubr.bf16.gmra.mrb[0].mxu0 %v531
      %v702 = vpop.f32.mrb[0].mxu0
      %v703 = vadd.f32 0.0, %v702
      %v704 = vpop.f32.mrb[0].mxu0
      %v705 = vpop.f32.mrb[0].mxu0
      %v706 = vadd.f32 0.0, %v705
      %v707 = vpop.f32.mrb[0].mxu0
      %708 = vmatprep.mubr.bf16.mxu0 0
      %709 = vmatmul.mubr.bf16.gmra.mrb[0].mxu0 %v534
      %v710 = vpop.f32.mrb[0].mxu0
      %v711 = vadd.f32 0.0, %v710
      %v712 = vpop.f32.mrb[0].mxu0
      %v713 = vpop.f32.mrb[0].mxu0
      %v714 = vadd.f32 0.0, %v713
      %v715 = vpop.f32.mrb[0].mxu0
      %716 = vdwg.mxu0
      %v717 = vsel %vm481, %v313, 0
      %v719 = vsel %vm481, %v314, 0
      %v721 = vsel %vm481, %v315, 0
      %v723 = vsel %vm481, %v316, 0
      %v725 = vsel %vm481, %v317, 0
      %v727 = vsel %vm481, %v318, 0
      %v729 = vsel %vm481, %v319, 0
      %v731 = vsel %vm481, %v320, 0
      %v733 = vsel %vm481, %v321, 0
      %v735 = vsel %vm481, %v322, 0
      %v737 = vsel %vm481, %v323, 0
      %v739 = vsel %vm481, %v324, 0
      %v741 = vsel %vm481, %v325, 0
      %v743 = vsel %vm481, %v326, 0
      %v745 = vsel %vm481, %v327, 0
      %v747 = vsel %vm481, %v328, 0
      %v749 = vsel %vm481, %v329, 0
      %v751 = vsel %vm481, %v330, 0
      %v754 = vsel %vm536, %v235, 0
      %756 = vmatprep.subr.bf16.mxu0 0
      %757 = vmatpush1.bf16.msra.mxu0 %v754
      %758 = vmatprep.subr.bf16.mxu0 0
      %759 = vmatpush1.bf16.msra.mxu0 0
      %760 = vmatprep.subr.bf16.mxu0 0
      %761 = vmatpush1.bf16.msra.mxu0 0
      %762 = vmatprep.subr.bf16.mxu0 0
      %763 = vmatpush1.bf16.msra.mxu0 0
      %764 = vmatprep.subr.bf16.mxu0 0
      %765 = vmatpush1.bf16.msra.mxu0 0
      %766 = vmatprep.subr.bf16.mxu0 0
      %767 = vmatpush1.bf16.msra.mxu0 0
      %768 = vmatprep.subr.bf16.mxu0 0
      %769 = vmatpush1.bf16.msra.mxu0 0
      %770 = vmatprep.subr.bf16.mxu0 0
      %771 = vmatpush1.bf16.msra.mxu0 0
      %772 = vmatprep.subr.bf16.mxu0 0
      %773 = vmatpush1.bf16.msra.mxu0 0
      %774 = vmatprep.subr.bf16.mxu0 0
      %775 = vmatpush1.bf16.msra.mxu0 0
      %776 = vmatprep.subr.bf16.mxu0 0
      %777 = vmatpush1.bf16.msra.mxu0 0
      %778 = vmatprep.subr.bf16.mxu0 0
      %779 = vmatpush1.bf16.msra.mxu0 0
      %780 = vmatprep.subr.bf16.mxu0 0
      %781 = vmatpush1.bf16.msra.mxu0 0
      %782 = vmatprep.subr.bf16.mxu0 0
      %783 = vmatpush1.bf16.msra.mxu0 0
      %784 = vmatprep.subr.bf16.mxu0 0
      %785 = vmatpush1.bf16.msra.mxu0 0
      %786 = vmatprep.subr.bf16.mxu0 0
      %787 = vmatpush1.bf16.msra.mxu0 0
      %788 = vmatprep.mubr.bf16.mxu0 0
      %789 = vmatmul.mubr.bf16.gmra.mrb[0].mxu0 %v717
      %v790 = vpop.f32.mrb[0].mxu0
      %v791 = vadd.f32 %v575, %v790
      %v792 = vpop.f32.mrb[0].mxu0
      %v793 = vpop.f32.mrb[0].mxu0
      %v794 = vadd.f32 %v578, %v793
      %v795 = vpop.f32.mrb[0].mxu0
      %796 = vmatprep.mubr.bf16.mxu0 0
      %797 = vmatmul.mubr.bf16.gmra.mrb[0].mxu0 %v719
      %v798 = vpop.f32.mrb[0].mxu0
      %v799 = vadd.f32 %v583, %v798
      %v800 = vpop.f32.mrb[0].mxu0
      %v801 = vpop.f32.mrb[0].mxu0
      %v802 = vadd.f32 %v586, %v801
      %v803 = vpop.f32.mrb[0].mxu0
      %804 = vmatprep.mubr.bf16.mxu0 0
      %805 = vmatmul.mubr.bf16.gmra.mrb[0].mxu0 %v721
      %v806 = vpop.f32.mrb[0].mxu0
      %v807 = vadd.f32 %v591, %v806
      %v808 = vpop.f32.mrb[0].mxu0
      %v809 = vpop.f32.mrb[0].mxu0
      %v810 = vadd.f32 %v594, %v809
      %v811 = vpop.f32.mrb[0].mxu0
      %812 = vmatprep.mubr.bf16.mxu0 0
      %813 = vmatmul.mubr.bf16.gmra.mrb[0].mxu0 %v723
      %v814 = vpop.f32.mrb[0].mxu0
      %v815 = vadd.f32 %v599, %v814
      %v816 = vpop.f32.mrb[0].mxu0
      %v817 = vpop.f32.mrb[0].mxu0
      %v818 = vadd.f32 %v602, %v817
      %v819 = vpop.f32.mrb[0].mxu0
      %820 = vmatprep.mubr.bf16.mxu0 0
      %821 = vmatmul.mubr.bf16.gmra.mrb[0].mxu0 %v725
      %v822 = vpop.f32.mrb[0].mxu0
      %v823 = vadd.f32 %v607, %v822
      %v824 = vpop.f32.mrb[0].mxu0
      %v825 = vpop.f32.mrb[0].mxu0
      %v826 = vadd.f32 %v610, %v825
      %v827 = vpop.f32.mrb[0].mxu0
      %828 = vmatprep.mubr.bf16.mxu0 0
      %829 = vmatmul.mubr.bf16.gmra.mrb[0].mxu0 %v727
      %v830 = vpop.f32.mrb[0].mxu0
      %v831 = vadd.f32 %v615, %v830
      %v832 = vpop.f32.mrb[0].mxu0
      %v833 = vpop.f32.mrb[0].mxu0
      %v834 = vadd.f32 %v618, %v833
      %v835 = vpop.f32.mrb[0].mxu0
      %836 = vmatprep.mubr.bf16.mxu0 0
      %837 = vmatmul.mubr.bf16.gmra.mrb[0].mxu0 %v729
      %v838 = vpop.f32.mrb[0].mxu0
      %v839 = vadd.f32 %v623, %v838
      %v840 = vpop.f32.mrb[0].mxu0
      %v841 = vpop.f32.mrb[0].mxu0
      %v842 = vadd.f32 %v626, %v841
      %v843 = vpop.f32.mrb[0].mxu0
      %844 = vmatprep.mubr.bf16.mxu0 0
      %845 = vmatmul.mubr.bf16.gmra.mrb[0].mxu0 %v731
      %v846 = vpop.f32.mrb[0].mxu0
      %v847 = vadd.f32 %v631, %v846
      %v848 = vpop.f32.mrb[0].mxu0
      %v849 = vpop.f32.mrb[0].mxu0
      %v850 = vadd.f32 %v634, %v849
      %v851 = vpop.f32.mrb[0].mxu0
      %852 = vmatprep.mubr.bf16.mxu0 0
      %853 = vmatmul.mubr.bf16.gmra.mrb[0].mxu0 %v733
      %v854 = vpop.f32.mrb[0].mxu0
      %v855 = vadd.f32 %v639, %v854
      %v856 = vpop.f32.mrb[0].mxu0
      %v857 = vpop.f32.mrb[0].mxu0
      %v858 = vadd.f32 %v642, %v857
      %v859 = vpop.f32.mrb[0].mxu0
      %860 = vmatprep.mubr.bf16.mxu0 0
      %861 = vmatmul.mubr.bf16.gmra.mrb[0].mxu0 %v735
      %v862 = vpop.f32.mrb[0].mxu0
      %v863 = vadd.f32 %v647, %v862
      %v864 = vpop.f32.mrb[0].mxu0
      %v865 = vpop.f32.mrb[0].mxu0
      %v866 = vadd.f32 %v650, %v865
      %v867 = vpop.f32.mrb[0].mxu0
      %868 = vmatprep.mubr.bf16.mxu0 0
      %869 = vmatmul.mubr.bf16.gmra.mrb[0].mxu0 %v737
      %v870 = vpop.f32.mrb[0].mxu0
      %v871 = vadd.f32 %v655, %v870
      %v872 = vpop.f32.mrb[0].mxu0
      %v873 = vpop.f32.mrb[0].mxu0
      %v874 = vadd.f32 %v658, %v873
      %v875 = vpop.f32.mrb[0].mxu0
      %876 = vmatprep.mubr.bf16.mxu0 0
      %877 = vmatmul.mubr.bf16.gmra.mrb[0].mxu0 %v739
      %v878 = vpop.f32.mrb[0].mxu0
      %v879 = vadd.f32 %v663, %v878
      %v880 = vpop.f32.mrb[0].mxu0
      %v881 = vpop.f32.mrb[0].mxu0
      %v882 = vadd.f32 %v666, %v881
      %v883 = vpop.f32.mrb[0].mxu0
      %884 = vmatprep.mubr.bf16.mxu0 0
      %885 = vmatmul.mubr.bf16.gmra.mrb[0].mxu0 %v741
      %v886 = vpop.f32.mrb[0].mxu0
      %v887 = vadd.f32 %v671, %v886
      %v888 = vpop.f32.mrb[0].mxu0
      %v889 = vpop.f32.mrb[0].mxu0
      %v890 = vadd.f32 %v674, %v889
      %v891 = vpop.f32.mrb[0].mxu0
      %892 = vmatprep.mubr.bf16.mxu0 0
      %893 = vmatmul.mubr.bf16.gmra.mrb[0].mxu0 %v743
      %v894 = vpop.f32.mrb[0].mxu0
      %v895 = vadd.f32 %v679, %v894
      %v896 = vpop.f32.mrb[0].mxu0
      %v897 = vpop.f32.mrb[0].mxu0
      %v898 = vadd.f32 %v682, %v897
      %v899 = vpop.f32.mrb[0].mxu0
      %900 = vmatprep.mubr.bf16.mxu0 0
      %901 = vmatmul.mubr.bf16.gmra.mrb[0].mxu0 %v745
      %v902 = vpop.f32.mrb[0].mxu0
      %v903 = vadd.f32 %v687, %v902
      %v904 = vpop.f32.mrb[0].mxu0
      %v905 = vpop.f32.mrb[0].mxu0
      %v906 = vadd.f32 %v690, %v905
      %v907 = vpop.f32.mrb[0].mxu0
      %908 = vmatprep.mubr.bf16.mxu0 0
      %909 = vmatmul.mubr.bf16.gmra.mrb[0].mxu0 %v747
      %v910 = vpop.f32.mrb[0].mxu0
      %v911 = vadd.f32 %v695, %v910
      %v912 = vpop.f32.mrb[0].mxu0
      %v913 = vpop.f32.mrb[0].mxu0
      %v914 = vadd.f32 %v698, %v913
      %v915 = vpop.f32.mrb[0].mxu0
      %916 = vmatprep.mubr.bf16.mxu0 0
      %917 = vmatmul.mubr.bf16.gmra.mrb[0].mxu0 %v749
      %v918 = vpop.f32.mrb[0].mxu0
      %v919 = vadd.f32 %v703, %v918
      %v920 = vpop.f32.mrb[0].mxu0
      %v921 = vpop.f32.mrb[0].mxu0
      %v922 = vadd.f32 %v706, %v921
      %v923 = vpop.f32.mrb[0].mxu0
      %924 = vmatprep.mubr.bf16.mxu0 0
      %925 = vmatmul.mubr.bf16.gmra.mrb[0].mxu0 %v751
      %v926 = vpop.f32.mrb[0].mxu0
      %v927 = vadd.f32 %v711, %v926
      %v928 = vpop.f32.mrb[0].mxu0
      %v929 = vpop.f32.mrb[0].mxu0
      %v930 = vadd.f32 %v714, %v929
      %v931 = vpop.f32.mrb[0].mxu0
      %932 = vdwg.mxu0
      %v933 = vld [vmem:[%s192] sm:$0xe]
      %s934 = scalar_lea.vmem %s1, 8
      %v935 = vld [vmem:[%s934] sm:$0xf]
      %v937 = vunpack.c.l.b16 %v933
      %v938 = vpack.c.b16 %v277, %v937
      %vm939 = vcmask 1046528
      %v940 = vrot.slane %v938, 1
      %v941 = vrot.slane %v314, 1
      %v942 = vsel %vm939, %v940, %v941
      %v943 = vrot.slane %v315, 1
      %v944 = vsel %vm939, %v941, %v943
      %v945 = vrot.slane %v316, 1
      %v946 = vsel %vm939, %v943, %v945
      %v947 = vrot.slane %v317, 1
      %v948 = vsel %vm939, %v945, %v947
      %v949 = vrot.slane %v318, 1
      %v950 = vsel %vm939, %v947, %v949
      %v951 = vrot.slane %v319, 1
      %v952 = vsel %vm939, %v949, %v951
      %v953 = vrot.slane %v320, 1
      %v954 = vsel %vm939, %v951, %v953
      %v955 = vrot.slane %v321, 1
      %v956 = vsel %vm939, %v953, %v955
      %v957 = vrot.slane %v322, 1
      %v958 = vsel %vm939, %v955, %v957
      %v959 = vrot.slane %v323, 1
      %v960 = vsel %vm939, %v957, %v959
      %v961 = vrot.slane %v324, 1
      %v962 = vsel %vm939, %v959, %v961
      %v963 = vrot.slane %v325, 1
      %v964 = vsel %vm939, %v961, %v963
      %v965 = vrot.slane %v326, 1
      %v966 = vsel %vm939, %v963, %v965
      %v967 = vrot.slane %v327, 1
      %v968 = vsel %vm939, %v965, %v967
      %v969 = vrot.slane %v328, 1
      %v970 = vsel %vm939, %v967, %v969
      %v971 = vrot.slane %v329, 1
      %v972 = vsel %vm939, %v969, %v971
      %v973 = vrot.slane %v330, 1
      %v974 = vsel %vm939, %v971, %v973
      %v975 = vrot.slane %v331, 1
      %v976 = vsel %vm939, %v973, %v975
      %v978 = vsel %vm481, %v942, 0
      %v981 = vsel %vm481, %v944, 0
      %v984 = vsel %vm481, %v946, 0
      %v987 = vsel %vm481, %v948, 0
      %v990 = vsel %vm481, %v950, 0
      %v993 = vsel %vm481, %v952, 0
      %v996 = vsel %vm481, %v954, 0
      %v999 = vsel %vm481, %v956, 0
      %v1002 = vsel %vm481, %v958, 0
      %v1005 = vsel %vm481, %v960, 0
      %v1008 = vsel %vm481, %v962, 0
      %v1011 = vsel %vm481, %v964, 0
      %v1014 = vsel %vm481, %v966, 0
      %v1017 = vsel %vm481, %v968, 0
      %v1020 = vsel %vm481, %v970, 0
      %v1023 = vsel %vm481, %v972, 0
      %v1026 = vsel %vm481, %v974, 0
      %v1029 = vsel %vm481, %v976, 0
      %v1032 = vsel %vm536, %v935, 0
      %1034 = vmatprep.subr.bf16.mxu0 0
      %1035 = vmatpush1.bf16.msra.mxu0 %v1032
      %1036 = vmatprep.subr.bf16.mxu0 0
      %1037 = vmatpush1.bf16.msra.mxu0 0
      %1038 = vmatprep.subr.bf16.mxu0 0
      %1039 = vmatpush1.bf16.msra.mxu0 0
      %1040 = vmatprep.subr.bf16.mxu0 0
      %1041 = vmatpush1.bf16.msra.mxu0 0
      %1042 = vmatprep.subr.bf16.mxu0 0
      %1043 = vmatpush1.bf16.msra.mxu0 0
      %1044 = vmatprep.subr.bf16.mxu0 0
      %1045 = vmatpush1.bf16.msra.mxu0 0
      %1046 = vmatprep.subr.bf16.mxu0 0
      %1047 = vmatpush1.bf16.msra.mxu0 0
      %1048 = vmatprep.subr.bf16.mxu0 0
      %1049 = vmatpush1.bf16.msra.mxu0 0
      %1050 = vmatprep.subr.bf16.mxu0 0
      %1051 = vmatpush1.bf16.msra.mxu0 0
      %1052 = vmatprep.subr.bf16.mxu0 0
      %1053 = vmatpush1.bf16.msra.mxu0 0
      %1054 = vmatprep.subr.bf16.mxu0 0
      %1055 = vmatpush1.bf16.msra.mxu0 0
      %1056 = vmatprep.subr.bf16.mxu0 0
      %1057 = vmatpush1.bf16.msra.mxu0 0
      %1058 = vmatprep.subr.bf16.mxu0 0
      %1059 = vmatpush1.bf16.msra.mxu0 0
      %1060 = vmatprep.subr.bf16.mxu0 0
      %1061 = vmatpush1.bf16.msra.mxu0 0
      %1062 = vmatprep.subr.bf16.mxu0 0
      %1063 = vmatpush1.bf16.msra.mxu0 0
      %1064 = vmatprep.subr.bf16.mxu0 0
      %1065 = vmatpush1.bf16.msra.mxu0 0
      %1066 = vmatprep.mubr.bf16.mxu0 0
      %1067 = vmatmul.mubr.bf16.gmra.mrb[0].mxu0 %v978
      %v1068 = vpop.f32.mrb[0].mxu0
      %v1069 = vadd.f32 0.0, %v1068
      %v1070 = vpop.f32.mrb[0].mxu0
      %v1071 = vpop.f32.mrb[0].mxu0
      %v1072 = vadd.f32 0.0, %v1071
      %v1073 = vpop.f32.mrb[0].mxu0
      %1074 = vmatprep.mubr.bf16.mxu0 0
      %1075 = vmatmul.mubr.bf16.gmra.mrb[0].mxu0 %v981
      %v1076 = vpop.f32.mrb[0].mxu0
      %v1077 = vadd.f32 0.0, %v1076
      %v1078 = vpop.f32.mrb[0].mxu0
      %v1079 = vpop.f32.mrb[0].mxu0
      %v1080 = vadd.f32 0.0, %v1079
      %v1081 = vpop.f32.mrb[0].mxu0
      %1082 = vmatprep.mubr.bf16.mxu0 0
      %1083 = vmatmul.mubr.bf16.gmra.mrb[0].mxu0 %v984
      %v1084 = vpop.f32.mrb[0].mxu0
      %v1085 = vadd.f32 0.0, %v1084
      %v1086 = vpop.f32.mrb[0].mxu0
      %v1087 = vpop.f32.mrb[0].mxu0
      %v1088 = vadd.f32 0.0, %v1087
      %v1089 = vpop.f32.mrb[0].mxu0
      %1090 = vmatprep.mubr.bf16.mxu0 0
      %1091 = vmatmul.mubr.bf16.gmra.mrb[0].mxu0 %v987
      %v1092 = vpop.f32.mrb[0].mxu0
      %v1093 = vadd.f32 0.0, %v1092
      %v1094 = vpop.f32.mrb[0].mxu0
      %v1095 = vpop.f32.mrb[0].mxu0
      %v1096 = vadd.f32 0.0, %v1095
      %v1097 = vpop.f32.mrb[0].mxu0
      %1098 = vmatprep.mubr.bf16.mxu0 0
      %1099 = vmatmul.mubr.bf16.gmra.mrb[0].mxu0 %v990
      %v1100 = vpop.f32.mrb[0].mxu0
      %v1101 = vadd.f32 0.0, %v1100
      %v1102 = vpop.f32.mrb[0].mxu0
      %v1103 = vpop.f32.mrb[0].mxu0
      %v1104 = vadd.f32 0.0, %v1103
      %v1105 = vpop.f32.mrb[0].mxu0
      %1106 = vmatprep.mubr.bf16.mxu0 0
      %1107 = vmatmul.mubr.bf16.gmra.mrb[0].mxu0 %v993
      %v1108 = vpop.f32.mrb[0].mxu0
      %v1109 = vadd.f32 0.0, %v1108
      %v1110 = vpop.f32.mrb[0].mxu0
      %v1111 = vpop.f32.mrb[0].mxu0
      %v1112 = vadd.f32 0.0, %v1111
      %v1113 = vpop.f32.mrb[0].mxu0
      %1114 = vmatprep.mubr.bf16.mxu0 0
      %1115 = vmatmul.mubr.bf16.gmra.mrb[0].mxu0 %v996
      %v1116 = vpop.f32.mrb[0].mxu0
      %v1117 = vadd.f32 0.0, %v1116
      %v1118 = vpop.f32.mrb[0].mxu0
      %v1119 = vpop.f32.mrb[0].mxu0
      %v1120 = vadd.f32 0.0, %v1119
      %v1121 = vpop.f32.mrb[0].mxu0
      %1122 = vmatprep.mubr.bf16.mxu0 0
      %1123 = vmatmul.mubr.bf16.gmra.mrb[0].mxu0 %v999
      %v1124 = vpop.f32.mrb[0].mxu0
      %v1125 = vadd.f32 0.0, %v1124
      %v1126 = vpop.f32.mrb[0].mxu0
      %v1127 = vpop.f32.mrb[0].mxu0
      %v1128 = vadd.f32 0.0, %v1127
      %v1129 = vpop.f32.mrb[0].mxu0
      %1130 = vmatprep.mubr.bf16.mxu0 0
      %1131 = vmatmul.mubr.bf16.gmra.mrb[0].mxu0 %v1002
      %v1132 = vpop.f32.mrb[0].mxu0
      %v1133 = vadd.f32 0.0, %v1132
      %v1134 = vpop.f32.mrb[0].mxu0
      %v1135 = vpop.f32.mrb[0].mxu0
      %v1136 = vadd.f32 0.0, %v1135
      %v1137 = vpop.f32.mrb[0].mxu0
      %1138 = vmatprep.mubr.bf16.mxu0 0
      %1139 = vmatmul.mubr.bf16.gmra.mrb[0].mxu0 %v1005
      %v1140 = vpop.f32.mrb[0].mxu0
      %v1141 = vadd.f32 0.0, %v1140
      %v1142 = vpop.f32.mrb[0].mxu0
      %v1143 = vpop.f32.mrb[0].mxu0
      %v1144 = vadd.f32 0.0, %v1143
      %v1145 = vpop.f32.mrb[0].mxu0
      %1146 = vmatprep.mubr.bf16.mxu0 0
      %1147 = vmatmul.mubr.bf16.gmra.mrb[0].mxu0 %v1008
      %v1148 = vpop.f32.mrb[0].mxu0
      %v1149 = vadd.f32 0.0, %v1148
      %v1150 = vpop.f32.mrb[0].mxu0
      %v1151 = vpop.f32.mrb[0].mxu0
      %v1152 = vadd.f32 0.0, %v1151
      %v1153 = vpop.f32.mrb[0].mxu0
      %1154 = vmatprep.mubr.bf16.mxu0 0
      %1155 = vmatmul.mubr.bf16.gmra.mrb[0].mxu0 %v1011
      %v1156 = vpop.f32.mrb[0].mxu0
      %v1157 = vadd.f32 0.0, %v1156
      %v1158 = vpop.f32.mrb[0].mxu0
      %v1159 = vpop.f32.mrb[0].mxu0
      %v1160 = vadd.f32 0.0, %v1159
      %v1161 = vpop.f32.mrb[0].mxu0
      %1162 = vmatprep.mubr.bf16.mxu0 0
      %1163 = vmatmul.mubr.bf16.gmra.mrb[0].mxu0 %v1014
      %v1164 = vpop.f32.mrb[0].mxu0
      %v1165 = vadd.f32 0.0, %v1164
      %v1166 = vpop.f32.mrb[0].mxu0
      %v1167 = vpop.f32.mrb[0].mxu0
      %v1168 = vadd.f32 0.0, %v1167
      %v1169 = vpop.f32.mrb[0].mxu0
      %1170 = vmatprep.mubr.bf16.mxu0 0
      %1171 = vmatmul.mubr.bf16.gmra.mrb[0].mxu0 %v1017
      %v1172 = vpop.f32.mrb[0].mxu0
      %v1173 = vadd.f32 0.0, %v1172
      %v1174 = vpop.f32.mrb[0].mxu0
      %v1175 = vpop.f32.mrb[0].mxu0
      %v1176 = vadd.f32 0.0, %v1175
      %v1177 = vpop.f32.mrb[0].mxu0
      %1178 = vmatprep.mubr.bf16.mxu0 0
      %1179 = vmatmul.mubr.bf16.gmra.mrb[0].mxu0 %v1020
      %v1180 = vpop.f32.mrb[0].mxu0
      %v1181 = vadd.f32 0.0, %v1180
      %v1182 = vpop.f32.mrb[0].mxu0
      %v1183 = vpop.f32.mrb[0].mxu0
      %v1184 = vadd.f32 0.0, %v1183
      %v1185 = vpop.f32.mrb[0].mxu0
      %1186 = vmatprep.mubr.bf16.mxu0 0
      %1187 = vmatmul.mubr.bf16.gmra.mrb[0].mxu0 %v1023
      %v1188 = vpop.f32.mrb[0].mxu0
      %v1189 = vadd.f32 0.0, %v1188
      %v1190 = vpop.f32.mrb[0].mxu0
      %v1191 = vpop.f32.mrb[0].mxu0
      %v1192 = vadd.f32 0.0, %v1191
      %v1193 = vpop.f32.mrb[0].mxu0
      %1194 = vmatprep.mubr.bf16.mxu0 0
      %1195 = vmatmul.mubr.bf16.gmra.mrb[0].mxu0 %v1026
      %v1196 = vpop.f32.mrb[0].mxu0
      %v1197 = vadd.f32 0.0, %v1196
      %v1198 = vpop.f32.mrb[0].mxu0
      %v1199 = vpop.f32.mrb[0].mxu0
      %v1200 = vadd.f32 0.0, %v1199
      %v1201 = vpop.f32.mrb[0].mxu0
      %1202 = vmatprep.mubr.bf16.mxu0 0
      %1203 = vmatmul.mubr.bf16.gmra.mrb[0].mxu0 %v1029
      %v1204 = vpop.f32.mrb[0].mxu0
      %v1205 = vadd.f32 0.0, %v1204
      %v1206 = vpop.f32.mrb[0].mxu0
      %v1207 = vpop.f32.mrb[0].mxu0
      %v1208 = vadd.f32 0.0, %v1207
      %v1209 = vpop.f32.mrb[0].mxu0
      %1210 = vdwg.mxu0
      %v1211 = vadd.f32 %v791, %v1069
      %v1212 = vadd.f32 %v794, %v1072
      %v1213 = vadd.f32 %v799, %v1077
      %v1214 = vadd.f32 %v802, %v1080
      %v1215 = vadd.f32 %v807, %v1085
      %v1216 = vadd.f32 %v810, %v1088
      %v1217 = vadd.f32 %v815, %v1093
      %v1218 = vadd.f32 %v818, %v1096
      %v1219 = vadd.f32 %v823, %v1101
      %v1220 = vadd.f32 %v826, %v1104
      %v1221 = vadd.f32 %v831, %v1109
      %v1222 = vadd.f32 %v834, %v1112
      %v1223 = vadd.f32 %v839, %v1117
      %v1224 = vadd.f32 %v842, %v1120
      %v1225 = vadd.f32 %v847, %v1125
      %v1226 = vadd.f32 %v850, %v1128
      %v1227 = vadd.f32 %v855, %v1133
      %v1228 = vadd.f32 %v858, %v1136
      %v1229 = vadd.f32 %v863, %v1141
      %v1230 = vadd.f32 %v866, %v1144
      %v1231 = vadd.f32 %v871, %v1149
      %v1232 = vadd.f32 %v874, %v1152
      %v1233 = vadd.f32 %v879, %v1157
      %v1234 = vadd.f32 %v882, %v1160
      %v1235 = vadd.f32 %v887, %v1165
      %v1236 = vadd.f32 %v890, %v1168
      %v1237 = vadd.f32 %v895, %v1173
      %v1238 = vadd.f32 %v898, %v1176
      %v1239 = vadd.f32 %v903, %v1181
      %v1240 = vadd.f32 %v906, %v1184
      %v1241 = vadd.f32 %v911, %v1189
      %v1242 = vadd.f32 %v914, %v1192
      %v1243 = vadd.f32 %v919, %v1197
      %v1244 = vadd.f32 %v922, %v1200
      %v1245 = vadd.f32 %v927, %v1205
      %v1246 = vadd.f32 %v930, %v1208
      %v1247 = vld [vmem:[%s192 + $0x8] sm:$0xe]
      %v1248 = vld [vmem:[%s192 + $0xc] sm:$0xf]
      %v1249 = vld [vmem:[%s192 + $0x10] sm:$0xf]
      %v1250 = vld [vmem:[%s192 + $0x14] sm:$0xf]
      %v1251 = vld [vmem:[%s192 + $0x18] sm:$0xf]
      %v1252 = vld [vmem:[%s192 + $0x1c] sm:$0xf]
      %v1253 = vld [vmem:[%s192 + $0x20] sm:$0xf]
      %v1254 = vld [vmem:[%s192 + $0x24] sm:$0xf]
      %v1255 = vld [vmem:[%s192 + $0x28] sm:$0xf]
      %v1256 = vld [vmem:[%s192 + $0x2c] sm:$0xf]
      %v1257 = vld [vmem:[%s192 + $0x30] sm:$0xf]
      %v1258 = vld [vmem:[%s192 + $0x34] sm:$0xf]
      %v1259 = vld [vmem:[%s192 + $0x38] sm:$0xf]
      %v1260 = vld [vmem:[%s192 + $0x3c] sm:$0xf]
      %v1261 = vld [vmem:[%s192 + $0x40] sm:$0xf]
      %v1262 = vld [vmem:[%s192 + $0x44] sm:$0xf]
      %v1263 = vld [vmem:[%s192 + $0x48] sm:$0xf]
      %v1264 = vld [vmem:[%s192 + $0x4c] sm:$0xf]
      %v1265 = vld [vmem:[%s192 + $0x50] sm:$0xf]
      %v1266 = vld [vmem:[%s192 + $0x54] sm:$0xf]
      %v1267 = vld [vmem:[%s192 + $0x58] sm:$0xf]
      %v1268 = vld [vmem:[%s192 + $0x5c] sm:$0xf]
      %v1269 = vld [vmem:[%s192 + $0x60] sm:$0xf]
      %v1270 = vld [vmem:[%s192 + $0x64] sm:$0xf]
      %v1271 = vld [vmem:[%s192 + $0x68] sm:$0xf]
      %v1272 = vld [vmem:[%s192 + $0x6c] sm:$0xf]
      %v1273 = vld [vmem:[%s192 + $0x70] sm:$0xf]
      %v1274 = vld [vmem:[%s192 + $0x74] sm:$0xf]
      %v1275 = vld [vmem:[%s192 + $0x78] sm:$0xf]
      %v1276 = vld [vmem:[%s192 + $0x7c] sm:$0xf]
      %v1277 = vld [vmem:[%s192 + $0x80] sm:$0xf]
      %v1278 = vld [vmem:[%s192 + $0x84] sm:$0xf]
      %v1279 = vld [vmem:[%s192 + $0x88] sm:$0xf]
      %v1280 = vld [vmem:[%s192 + $0x8c] sm:$0xf]
      %v1281 = vld [vmem:[%s192 + $0x90] sm:$0xf]
      %v1282 = vld [vmem:[%s192 + $0x94] sm:$0xf]
      %v1283 = vld [vmem:[%s192 + $0x98] sm:$0x1]
      %s1284 = scalar_lea.vmem %s1, 12
      %v1285 = vld [vmem:[%s1284] sm:$0xf]
      %v1323 = vunpack.c.l.b16 %v1247
      %v1324 = vunpack.c.l.b16 %v1248
      %v1325 = vunpack.c.l.b16 %v1249
      %v1326 = vunpack.c.l.b16 %v1250
      %v1327 = vunpack.c.l.b16 %v1251
      %v1328 = vunpack.c.l.b16 %v1252
      %v1329 = vunpack.c.l.b16 %v1253
      %v1330 = vunpack.c.l.b16 %v1254
      %v1331 = vunpack.c.l.b16 %v1255
      %v1332 = vunpack.c.l.b16 %v1256
      %v1333 = vunpack.c.l.b16 %v1257
      %v1334 = vunpack.c.l.b16 %v1258
      %v1335 = vunpack.c.l.b16 %v1259
      %v1336 = vunpack.c.l.b16 %v1260
      %v1337 = vunpack.c.l.b16 %v1261
      %v1338 = vunpack.c.l.b16 %v1262
      %v1339 = vunpack.c.l.b16 %v1263
      %v1340 = vunpack.c.l.b16 %v1264
      %v1341 = vunpack.c.l.b16 %v1265
      %v1342 = vunpack.c.l.b16 %v1266
      %v1343 = vunpack.c.l.b16 %v1267
      %v1344 = vunpack.c.l.b16 %v1268
      %v1345 = vunpack.c.l.b16 %v1269
      %v1346 = vunpack.c.l.b16 %v1270
      %v1347 = vunpack.c.l.b16 %v1271
      %v1348 = vunpack.c.l.b16 %v1272
      %v1349 = vunpack.c.l.b16 %v1273
      %v1350 = vunpack.c.l.b16 %v1274
      %v1351 = vunpack.c.l.b16 %v1275
      %v1352 = vunpack.c.l.b16 %v1276
      %v1353 = vunpack.c.l.b16 %v1277
      %v1354 = vunpack.c.l.b16 %v1278
      %v1355 = vunpack.c.l.b16 %v1279
      %v1356 = vunpack.c.l.b16 %v1280
      %v1357 = vunpack.c.l.b16 %v1281
      %v1358 = vunpack.c.l.b16 %v1282
      %v1359 = vunpack.c.l.b16 %v1283
      %v1360 = vpack.c.b16 %v1324, %v1323
      %v1361 = vpack.c.b16 %v1326, %v1325
      %v1362 = vpack.c.b16 %v1328, %v1327
      %v1363 = vpack.c.b16 %v1330, %v1329
      %v1364 = vpack.c.b16 %v1332, %v1331
      %v1365 = vpack.c.b16 %v1334, %v1333
      %v1366 = vpack.c.b16 %v1336, %v1335
      %v1367 = vpack.c.b16 %v1338, %v1337
      %v1368 = vpack.c.b16 %v1340, %v1339
      %v1369 = vpack.c.b16 %v1342, %v1341
      %v1370 = vpack.c.b16 %v1344, %v1343
      %v1371 = vpack.c.b16 %v1346, %v1345
      %v1372 = vpack.c.b16 %v1348, %v1347
      %v1373 = vpack.c.b16 %v1350, %v1349
      %v1374 = vpack.c.b16 %v1352, %v1351
      %v1375 = vpack.c.b16 %v1354, %v1353
      %v1376 = vpack.c.b16 %v1356, %v1355
      %v1377 = vpack.c.b16 %v1358, %v1357
      %v1378 = vpack.c.b16 %v1359, %v1359
      %v1379 = vrot.slane %v1360, 1
      %v1380 = vrot.slane %v1361, 1
      %v1381 = vsel %vm939, %v1379, %v1380
      %v1382 = vrot.slane %v1362, 1
      %v1383 = vsel %vm939, %v1380, %v1382
      %v1384 = vrot.slane %v1363, 1
      %v1385 = vsel %vm939, %v1382, %v1384
      %v1386 = vrot.slane %v1364, 1
      %v1387 = vsel %vm939, %v1384, %v1386
      %v1388 = vrot.slane %v1365, 1
      %v1389 = vsel %vm939, %v1386, %v1388
      %v1390 = vrot.slane %v1366, 1
      %v1391 = vsel %vm939, %v1388, %v1390
      %v1392 = vrot.slane %v1367, 1
      %v1393 = vsel %vm939, %v1390, %v1392
      %v1394 = vrot.slane %v1368, 1
      %v1395 = vsel %vm939, %v1392, %v1394
      %v1396 = vrot.slane %v1369, 1
      %v1397 = vsel %vm939, %v1394, %v1396
      %v1398 = vrot.slane %v1370, 1
      %v1399 = vsel %vm939, %v1396, %v1398
      %v1400 = vrot.slane %v1371, 1
      %v1401 = vsel %vm939, %v1398, %v1400
      %v1402 = vrot.slane %v1372, 1
      %v1403 = vsel %vm939, %v1400, %v1402
      %v1404 = vrot.slane %v1373, 1
      %v1405 = vsel %vm939, %v1402, %v1404
      %v1406 = vrot.slane %v1374, 1
      %v1407 = vsel %vm939, %v1404, %v1406
      %v1408 = vrot.slane %v1375, 1
      %v1409 = vsel %vm939, %v1406, %v1408
      %v1410 = vrot.slane %v1376, 1
      %v1411 = vsel %vm939, %v1408, %v1410
      %v1412 = vrot.slane %v1377, 1
      %v1413 = vsel %vm939, %v1410, %v1412
      %v1414 = vrot.slane %v1378, 1
      %v1415 = vsel %vm939, %v1412, %v1414
      %v1417 = vsel %vm481, %v1381, 0
      %v1420 = vsel %vm481, %v1383, 0
      %v1423 = vsel %vm481, %v1385, 0
      %v1426 = vsel %vm481, %v1387, 0
      %v1429 = vsel %vm481, %v1389, 0
      %v1432 = vsel %vm481, %v1391, 0
      %v1435 = vsel %vm481, %v1393, 0
      %v1438 = vsel %vm481, %v1395, 0
      %v1441 = vsel %vm481, %v1397, 0
      %v1444 = vsel %vm481, %v1399, 0
      %v1447 = vsel %vm481, %v1401, 0
      %v1450 = vsel %vm481, %v1403, 0
      %v1453 = vsel %vm481, %v1405, 0
      %v1456 = vsel %vm481, %v1407, 0
      %v1459 = vsel %vm481, %v1409, 0
      %v1462 = vsel %vm481, %v1411, 0
      %v1465 = vsel %vm481, %v1413, 0
      %v1468 = vsel %vm481, %v1415, 0
      %v1471 = vsel %vm536, %v1285, 0
      %1473 = vmatprep.subr.bf16.mxu0 0
      %1474 = vmatpush1.bf16.msra.mxu0 %v1471
      %1475 = vmatprep.subr.bf16.mxu0 0
      %1476 = vmatpush1.bf16.msra.mxu0 0
      %1477 = vmatprep.subr.bf16.mxu0 0
      %1478 = vmatpush1.bf16.msra.mxu0 0
      %1479 = vmatprep.subr.bf16.mxu0 0
      %1480 = vmatpush1.bf16.msra.mxu0 0
      %1481 = vmatprep.subr.bf16.mxu0 0
      %1482 = vmatpush1.bf16.msra.mxu0 0
      %1483 = vmatprep.subr.bf16.mxu0 0
      %1484 = vmatpush1.bf16.msra.mxu0 0
      %1485 = vmatprep.subr.bf16.mxu0 0
      %1486 = vmatpush1.bf16.msra.mxu0 0
      %1487 = vmatprep.subr.bf16.mxu0 0
      %1488 = vmatpush1.bf16.msra.mxu0 0
      %1489 = vmatprep.subr.bf16.mxu0 0
      %1490 = vmatpush1.bf16.msra.mxu0 0
      %1491 = vmatprep.subr.bf16.mxu0 0
      %1492 = vmatpush1.bf16.msra.mxu0 0
      %1493 = vmatprep.subr.bf16.mxu0 0
      %1494 = vmatpush1.bf16.msra.mxu0 0
      %1495 = vmatprep.subr.bf16.mxu0 0
      %1496 = vmatpush1.bf16.msra.mxu0 0
      %1497 = vmatprep.subr.bf16.mxu0 0
      %1498 = vmatpush1.bf16.msra.mxu0 0
      %1499 = vmatprep.subr.bf16.mxu0 0
      %1500 = vmatpush1.bf16.msra.mxu0 0
      %1501 = vmatprep.subr.bf16.mxu0 0
      %1502 = vmatpush1.bf16.msra.mxu0 0
      %1503 = vmatprep.subr.bf16.mxu0 0
      %1504 = vmatpush1.bf16.msra.mxu0 0
      %1505 = vmatprep.mubr.bf16.mxu0 0
      %1506 = vmatmul.mubr.bf16.gmra.mrb[0].mxu0 %v1417
      %v1507 = vpop.f32.mrb[0].mxu0
      %v1508 = vadd.f32 0.0, %v1507
      %v1509 = vpop.f32.mrb[0].mxu0
      %v1510 = vpop.f32.mrb[0].mxu0
      %v1511 = vadd.f32 0.0, %v1510
      %v1512 = vpop.f32.mrb[0].mxu0
      %1513 = vmatprep.mubr.bf16.mxu0 0
      %1514 = vmatmul.mubr.bf16.gmra.mrb[0].mxu0 %v1420
      %v1515 = vpop.f32.mrb[0].mxu0
      %v1516 = vadd.f32 0.0, %v1515
      %v1517 = vpop.f32.mrb[0].mxu0
      %v1518 = vpop.f32.mrb[0].mxu0
      %v1519 = vadd.f32 0.0, %v1518
      %v1520 = vpop.f32.mrb[0].mxu0
      %1521 = vmatprep.mubr.bf16.mxu0 0
      %1522 = vmatmul.mubr.bf16.gmra.mrb[0].mxu0 %v1423
      %v1523 = vpop.f32.mrb[0].mxu0
      %v1524 = vadd.f32 0.0, %v1523
      %v1525 = vpop.f32.mrb[0].mxu0
      %v1526 = vpop.f32.mrb[0].mxu0
      %v1527 = vadd.f32 0.0, %v1526
      %v1528 = vpop.f32.mrb[0].mxu0
      %1529 = vmatprep.mubr.bf16.mxu0 0
      %1530 = vmatmul.mubr.bf16.gmra.mrb[0].mxu0 %v1426
      %v1531 = vpop.f32.mrb[0].mxu0
      %v1532 = vadd.f32 0.0, %v1531
      %v1533 = vpop.f32.mrb[0].mxu0
      %v1534 = vpop.f32.mrb[0].mxu0
      %v1535 = vadd.f32 0.0, %v1534
      %v1536 = vpop.f32.mrb[0].mxu0
      %1537 = vmatprep.mubr.bf16.mxu0 0
      %1538 = vmatmul.mubr.bf16.gmra.mrb[0].mxu0 %v1429
      %v1539 = vpop.f32.mrb[0].mxu0
      %v1540 = vadd.f32 0.0, %v1539
      %v1541 = vpop.f32.mrb[0].mxu0
      %v1542 = vpop.f32.mrb[0].mxu0
      %v1543 = vadd.f32 0.0, %v1542
      %v1544 = vpop.f32.mrb[0].mxu0
      %1545 = vmatprep.mubr.bf16.mxu0 0
      %1546 = vmatmul.mubr.bf16.gmra.mrb[0].mxu0 %v1432
      %v1547 = vpop.f32.mrb[0].mxu0
      %v1548 = vadd.f32 0.0, %v1547
      %v1549 = vpop.f32.mrb[0].mxu0
      %v1550 = vpop.f32.mrb[0].mxu0
      %v1551 = vadd.f32 0.0, %v1550
      %v1552 = vpop.f32.mrb[0].mxu0
      %1553 = vmatprep.mubr.bf16.mxu0 0
      %1554 = vmatmul.mubr.bf16.gmra.mrb[0].mxu0 %v1435
      %v1555 = vpop.f32.mrb[0].mxu0
      %v1556 = vadd.f32 0.0, %v1555
      %v1557 = vpop.f32.mrb[0].mxu0
      %v1558 = vpop.f32.mrb[0].mxu0
      %v1559 = vadd.f32 0.0, %v1558
      %v1560 = vpop.f32.mrb[0].mxu0
      %1561 = vmatprep.mubr.bf16.mxu0 0
      %1562 = vmatmul.mubr.bf16.gmra.mrb[0].mxu0 %v1438
      %v1563 = vpop.f32.mrb[0].mxu0
      %v1564 = vadd.f32 0.0, %v1563
      %v1565 = vpop.f32.mrb[0].mxu0
      %v1566 = vpop.f32.mrb[0].mxu0
      %v1567 = vadd.f32 0.0, %v1566
      %v1568 = vpop.f32.mrb[0].mxu0
      %1569 = vmatprep.mubr.bf16.mxu0 0
      %1570 = vmatmul.mubr.bf16.gmra.mrb[0].mxu0 %v1441
      %v1571 = vpop.f32.mrb[0].mxu0
      %v1572 = vadd.f32 0.0, %v1571
      %v1573 = vpop.f32.mrb[0].mxu0
      %v1574 = vpop.f32.mrb[0].mxu0
      %v1575 = vadd.f32 0.0, %v1574
      %v1576 = vpop.f32.mrb[0].mxu0
      %1577 = vmatprep.mubr.bf16.mxu0 0
      %1578 = vmatmul.mubr.bf16.gmra.mrb[0].mxu0 %v1444
      %v1579 = vpop.f32.mrb[0].mxu0
      %v1580 = vadd.f32 0.0, %v1579
      %v1581 = vpop.f32.mrb[0].mxu0
      %v1582 = vpop.f32.mrb[0].mxu0
      %v1583 = vadd.f32 0.0, %v1582
      %v1584 = vpop.f32.mrb[0].mxu0
      %1585 = vmatprep.mubr.bf16.mxu0 0
      %1586 = vmatmul.mubr.bf16.gmra.mrb[0].mxu0 %v1447
      %v1587 = vpop.f32.mrb[0].mxu0
      %v1588 = vadd.f32 0.0, %v1587
      %v1589 = vpop.f32.mrb[0].mxu0
      %v1590 = vpop.f32.mrb[0].mxu0
      %v1591 = vadd.f32 0.0, %v1590
      %v1592 = vpop.f32.mrb[0].mxu0
      %1593 = vmatprep.mubr.bf16.mxu0 0
      %1594 = vmatmul.mubr.bf16.gmra.mrb[0].mxu0 %v1450
      %v1595 = vpop.f32.mrb[0].mxu0
      %v1596 = vadd.f32 0.0, %v1595
      %v1597 = vpop.f32.mrb[0].mxu0
      %v1598 = vpop.f32.mrb[0].mxu0
      %v1599 = vadd.f32 0.0, %v1598
      %v1600 = vpop.f32.mrb[0].mxu0
      %1601 = vmatprep.mubr.bf16.mxu0 0
      %1602 = vmatmul.mubr.bf16.gmra.mrb[0].mxu0 %v1453
      %v1603 = vpop.f32.mrb[0].mxu0
      %v1604 = vadd.f32 0.0, %v1603
      %v1605 = vpop.f32.mrb[0].mxu0
      %v1606 = vpop.f32.mrb[0].mxu0
      %v1607 = vadd.f32 0.0, %v1606
      %v1608 = vpop.f32.mrb[0].mxu0
      %1609 = vmatprep.mubr.bf16.mxu0 0
      %1610 = vmatmul.mubr.bf16.gmra.mrb[0].mxu0 %v1456
      %v1611 = vpop.f32.mrb[0].mxu0
      %v1612 = vadd.f32 0.0, %v1611
      %v1613 = vpop.f32.mrb[0].mxu0
      %v1614 = vpop.f32.mrb[0].mxu0
      %v1615 = vadd.f32 0.0, %v1614
      %v1616 = vpop.f32.mrb[0].mxu0
      %1617 = vmatprep.mubr.bf16.mxu0 0
      %1618 = vmatmul.mubr.bf16.gmra.mrb[0].mxu0 %v1459
      %v1619 = vpop.f32.mrb[0].mxu0
      %v1620 = vadd.f32 0.0, %v1619
      %v1621 = vpop.f32.mrb[0].mxu0
      %v1622 = vpop.f32.mrb[0].mxu0
      %v1623 = vadd.f32 0.0, %v1622
      %v1624 = vpop.f32.mrb[0].mxu0
      %1625 = vmatprep.mubr.bf16.mxu0 0
      %1626 = vmatmul.mubr.bf16.gmra.mrb[0].mxu0 %v1462
      %v1627 = vpop.f32.mrb[0].mxu0
      %v1628 = vadd.f32 0.0, %v1627
      %v1629 = vpop.f32.mrb[0].mxu0
      %v1630 = vpop.f32.mrb[0].mxu0
      %v1631 = vadd.f32 0.0, %v1630
      %v1632 = vpop.f32.mrb[0].mxu0
      %1633 = vmatprep.mubr.bf16.mxu0 0
      %1634 = vmatmul.mubr.bf16.gmra.mrb[0].mxu0 %v1465
      %v1635 = vpop.f32.mrb[0].mxu0
      %v1636 = vadd.f32 0.0, %v1635
      %v1637 = vpop.f32.mrb[0].mxu0
      %v1638 = vpop.f32.mrb[0].mxu0
      %v1639 = vadd.f32 0.0, %v1638
      %v1640 = vpop.f32.mrb[0].mxu0
      %1641 = vmatprep.mubr.bf16.mxu0 0
      %1642 = vmatmul.mubr.bf16.gmra.mrb[0].mxu0 %v1468
      %v1643 = vpop.f32.mrb[0].mxu0
      %v1644 = vadd.f32 0.0, %v1643
      %v1645 = vpop.f32.mrb[0].mxu0
      %v1646 = vpop.f32.mrb[0].mxu0
      %v1647 = vadd.f32 0.0, %v1646
      %v1648 = vpop.f32.mrb[0].mxu0
      %1649 = vdwg.mxu0
      %v1650 = vadd.f32 %v1211, %v1508
      %v1651 = vadd.f32 %v1212, %v1511
      %v1652 = vadd.f32 %v1213, %v1516
      %v1653 = vadd.f32 %v1214, %v1519
      %v1654 = vadd.f32 %v1215, %v1524
      %v1655 = vadd.f32 %v1216, %v1527
      %v1656 = vadd.f32 %v1217, %v1532
      %v1657 = vadd.f32 %v1218, %v1535
      %v1658 = vadd.f32 %v1219, %v1540
      %v1659 = vadd.f32 %v1220, %v1543
      %v1660 = vadd.f32 %v1221, %v1548
      %v1661 = vadd.f32 %v1222, %v1551
      %v1662 = vadd.f32 %v1223, %v1556
      %v1663 = vadd.f32 %v1224, %v1559
      %v1664 = vadd.f32 %v1225, %v1564
      %v1665 = vadd.f32 %v1226, %v1567
      %v1666 = vadd.f32 %v1227, %v1572
      %v1667 = vadd.f32 %v1228, %v1575
      %v1668 = vadd.f32 %v1229, %v1580
      %v1669 = vadd.f32 %v1230, %v1583
      %v1670 = vadd.f32 %v1231, %v1588
      %v1671 = vadd.f32 %v1232, %v1591
      %v1672 = vadd.f32 %v1233, %v1596
      %v1673 = vadd.f32 %v1234, %v1599
      %v1674 = vadd.f32 %v1235, %v1604
      %v1675 = vadd.f32 %v1236, %v1607
      %v1676 = vadd.f32 %v1237, %v1612
      %v1677 = vadd.f32 %v1238, %v1615
      %v1678 = vadd.f32 %v1239, %v1620
      %v1679 = vadd.f32 %v1240, %v1623
      %v1680 = vadd.f32 %v1241, %v1628
      %v1681 = vadd.f32 %v1242, %v1631
      %v1682 = vadd.f32 %v1243, %v1636
      %v1683 = vadd.f32 %v1244, %v1639
      %v1684 = vadd.f32 %v1245, %v1644
      %v1685 = vadd.f32 %v1246, %v1647
      %v1686 = vld [vmem:[%s192 + $0x98] sm:$0x3]
      %s1687 = scalar_lea.vmem %s1, 16
      %v1688 = vld [vmem:[%s1687] sm:$0xf]
      %v1690 = vunpack.c.l.b16 %v1686
      %v1691 = vpack.c.b16 %v1690, %v1690
      %vm1692 = vsmask.f32 6400
      %v1694 = vshrl.u32 %v1360, 16
      %v1696 = vrot.slane %v1694, 1
      %v1697 = vshll.u32 %v1360, 16
      %v1699 = vrot.slane %v1697, 2
      %v1700 = vor.u32 %v1696, %v1699
      %v1702 = vshrl.u32 %v1361, 16
      %v1704 = vrot.slane %v1702, 1
      %v1705 = vshll.u32 %v1361, 16
      %v1707 = vrot.slane %v1705, 2
      %v1708 = vor.u32 %v1704, %v1707
      %v1709 = vsel %vm1692, %v1700, %v1708
      %v1711 = vshrl.u32 %v1362, 16
      %v1713 = vrot.slane %v1711, 1
      %v1714 = vshll.u32 %v1362, 16
      %v1716 = vrot.slane %v1714, 2
      %v1717 = vor.u32 %v1713, %v1716
      %v1718 = vsel %vm1692, %v1708, %v1717
      %v1720 = vshrl.u32 %v1363, 16
      %v1722 = vrot.slane %v1720, 1
      %v1723 = vshll.u32 %v1363, 16
      %v1725 = vrot.slane %v1723, 2
      %v1726 = vor.u32 %v1722, %v1725
      %v1727 = vsel %vm1692, %v1717, %v1726
      %v1729 = vshrl.u32 %v1364, 16
      %v1731 = vrot.slane %v1729, 1
      %v1732 = vshll.u32 %v1364, 16
      %v1734 = vrot.slane %v1732, 2
      %v1735 = vor.u32 %v1731, %v1734
      %v1736 = vsel %vm1692, %v1726, %v1735
      %v1738 = vshrl.u32 %v1365, 16
      %v1740 = vrot.slane %v1738, 1
      %v1741 = vshll.u32 %v1365, 16
      %v1743 = vrot.slane %v1741, 2
      %v1744 = vor.u32 %v1740, %v1743
      %v1745 = vsel %vm1692, %v1735, %v1744
      %v1747 = vshrl.u32 %v1366, 16
      %v1749 = vrot.slane %v1747, 1
      %v1750 = vshll.u32 %v1366, 16
      %v1752 = vrot.slane %v1750, 2
      %v1753 = vor.u32 %v1749, %v1752
      %v1754 = vsel %vm1692, %v1744, %v1753
      %v1756 = vshrl.u32 %v1367, 16
      %v1758 = vrot.slane %v1756, 1
      %v1759 = vshll.u32 %v1367, 16
      %v1761 = vrot.slane %v1759, 2
      %v1762 = vor.u32 %v1758, %v1761
      %v1763 = vsel %vm1692, %v1753, %v1762
      %v1765 = vshrl.u32 %v1368, 16
      %v1767 = vrot.slane %v1765, 1
      %v1768 = vshll.u32 %v1368, 16
      %v1770 = vrot.slane %v1768, 2
      %v1771 = vor.u32 %v1767, %v1770
      %v1772 = vsel %vm1692, %v1762, %v1771
      %v1774 = vshrl.u32 %v1369, 16
      %v1776 = vrot.slane %v1774, 1
      %v1777 = vshll.u32 %v1369, 16
      %v1779 = vrot.slane %v1777, 2
      %v1780 = vor.u32 %v1776, %v1779
      %v1781 = vsel %vm1692, %v1771, %v1780
      %v1783 = vshrl.u32 %v1370, 16
      %v1785 = vrot.slane %v1783, 1
      %v1786 = vshll.u32 %v1370, 16
      %v1788 = vrot.slane %v1786, 2
      %v1789 = vor.u32 %v1785, %v1788
      %v1790 = vsel %vm1692, %v1780, %v1789
      %v1792 = vshrl.u32 %v1371, 16
      %v1794 = vrot.slane %v1792, 1
      %v1795 = vshll.u32 %v1371, 16
      %v1797 = vrot.slane %v1795, 2
      %v1798 = vor.u32 %v1794, %v1797
      %v1799 = vsel %vm1692, %v1789, %v1798
      %v1801 = vshrl.u32 %v1372, 16
      %v1803 = vrot.slane %v1801, 1
      %v1804 = vshll.u32 %v1372, 16
      %v1806 = vrot.slane %v1804, 2
      %v1807 = vor.u32 %v1803, %v1806
      %v1808 = vsel %vm1692, %v1798, %v1807
      %v1810 = vshrl.u32 %v1373, 16
      %v1812 = vrot.slane %v1810, 1
      %v1813 = vshll.u32 %v1373, 16
      %v1815 = vrot.slane %v1813, 2
      %v1816 = vor.u32 %v1812, %v1815
      %v1817 = vsel %vm1692, %v1807, %v1816
      %v1819 = vshrl.u32 %v1374, 16
      %v1821 = vrot.slane %v1819, 1
      %v1822 = vshll.u32 %v1374, 16
      %v1824 = vrot.slane %v1822, 2
      %v1825 = vor.u32 %v1821, %v1824
      %v1826 = vsel %vm1692, %v1816, %v1825
      %v1828 = vshrl.u32 %v1375, 16
      %v1830 = vrot.slane %v1828, 1
      %v1831 = vshll.u32 %v1375, 16
      %v1833 = vrot.slane %v1831, 2
      %v1834 = vor.u32 %v1830, %v1833
      %v1835 = vsel %vm1692, %v1825, %v1834
      %v1837 = vshrl.u32 %v1376, 16
      %v1839 = vrot.slane %v1837, 1
      %v1840 = vshll.u32 %v1376, 16
      %v1842 = vrot.slane %v1840, 2
      %v1843 = vor.u32 %v1839, %v1842
      %v1844 = vsel %vm1692, %v1834, %v1843
      %v1846 = vshrl.u32 %v1377, 16
      %v1848 = vrot.slane %v1846, 1
      %v1849 = vshll.u32 %v1377, 16
      %v1851 = vrot.slane %v1849, 2
      %v1852 = vor.u32 %v1848, %v1851
      %v1853 = vsel %vm1692, %v1843, %v1852
      %v1855 = vshrl.u32 %v1691, 16
      %v1857 = vrot.slane %v1855, 1
      %v1858 = vshll.u32 %v1691, 16
      %v1860 = vrot.slane %v1858, 2
      %v1861 = vor.u32 %v1857, %v1860
      %v1862 = vsel %vm1692, %v1852, %v1861
      %v1864 = vsel %vm481, %v1709, 0
      %v1867 = vsel %vm481, %v1718, 0
      %v1870 = vsel %vm481, %v1727, 0
      %v1873 = vsel %vm481, %v1736, 0
      %v1876 = vsel %vm481, %v1745, 0
      %v1879 = vsel %vm481, %v1754, 0
      %v1882 = vsel %vm481, %v1763, 0
      %v1885 = vsel %vm481, %v1772, 0
      %v1888 = vsel %vm481, %v1781, 0
      %v1891 = vsel %vm481, %v1790, 0
      %v1894 = vsel %vm481, %v1799, 0
      %v1897 = vsel %vm481, %v1808, 0
      %v1900 = vsel %vm481, %v1817, 0
      %v1903 = vsel %vm481, %v1826, 0
      %v1906 = vsel %vm481, %v1835, 0
      %v1909 = vsel %vm481, %v1844, 0
      %v1912 = vsel %vm481, %v1853, 0
      %v1915 = vsel %vm481, %v1862, 0
      %v1918 = vsel %vm536, %v1688, 0
      %1920 = vmatprep.subr.bf16.mxu0 0
      %1921 = vmatpush1.bf16.msra.mxu0 %v1918
      %1922 = vmatprep.subr.bf16.mxu0 0
      %1923 = vmatpush1.bf16.msra.mxu0 0
      %1924 = vmatprep.subr.bf16.mxu0 0
      %1925 = vmatpush1.bf16.msra.mxu0 0
      %1926 = vmatprep.subr.bf16.mxu0 0
      %1927 = vmatpush1.bf16.msra.mxu0 0
      %1928 = vmatprep.subr.bf16.mxu0 0
      %1929 = vmatpush1.bf16.msra.mxu0 0
      %1930 = vmatprep.subr.bf16.mxu0 0
      %1931 = vmatpush1.bf16.msra.mxu0 0
      %1932 = vmatprep.subr.bf16.mxu0 0
      %1933 = vmatpush1.bf16.msra.mxu0 0
      %1934 = vmatprep.subr.bf16.mxu0 0
      %1935 = vmatpush1.bf16.msra.mxu0 0
      %1936 = vmatprep.subr.bf16.mxu0 0
      %1937 = vmatpush1.bf16.msra.mxu0 0
      %1938 = vmatprep.subr.bf16.mxu0 0
      %1939 = vmatpush1.bf16.msra.mxu0 0
      %1940 = vmatprep.subr.bf16.mxu0 0
      %1941 = vmatpush1.bf16.msra.mxu0 0
      %1942 = vmatprep.subr.bf16.mxu0 0
      %1943 = vmatpush1.bf16.msra.mxu0 0
      %1944 = vmatprep.subr.bf16.mxu0 0
      %1945 = vmatpush1.bf16.msra.mxu0 0
      %1946 = vmatprep.subr.bf16.mxu0 0
      %1947 = vmatpush1.bf16.msra.mxu0 0
      %1948 = vmatprep.subr.bf16.mxu0 0
      %1949 = vmatpush1.bf16.msra.mxu0 0
      %1950 = vmatprep.subr.bf16.mxu0 0
      %1951 = vmatpush1.bf16.msra.mxu0 0
      %1952 = vmatprep.mubr.bf16.mxu0 0
      %1953 = vmatmul.mubr.bf16.gmra.mrb[0].mxu0 %v1864
      %v1954 = vpop.f32.mrb[0].mxu0
      %v1955 = vadd.f32 0.0, %v1954
      %v1956 = vpop.f32.mrb[0].mxu0
      %v1957 = vpop.f32.mrb[0].mxu0
      %v1958 = vadd.f32 0.0, %v1957
      %v1959 = vpop.f32.mrb[0].mxu0
      %1960 = vmatprep.mubr.bf16.mxu0 0
      %1961 = vmatmul.mubr.bf16.gmra.mrb[0].mxu0 %v1867
      %v1962 = vpop.f32.mrb[0].mxu0
      %v1963 = vadd.f32 0.0, %v1962
      %v1964 = vpop.f32.mrb[0].mxu0
      %v1965 = vpop.f32.mrb[0].mxu0
      %v1966 = vadd.f32 0.0, %v1965
      %v1967 = vpop.f32.mrb[0].mxu0
      %1968 = vmatprep.mubr.bf16.mxu0 0
      %1969 = vmatmul.mubr.bf16.gmra.mrb[0].mxu0 %v1870
      %v1970 = vpop.f32.mrb[0].mxu0
      %v1971 = vadd.f32 0.0, %v1970
      %v1972 = vpop.f32.mrb[0].mxu0
      %v1973 = vpop.f32.mrb[0].mxu0
      %v1974 = vadd.f32 0.0, %v1973
      %v1975 = vpop.f32.mrb[0].mxu0
      %1976 = vmatprep.mubr.bf16.mxu0 0
      %1977 = vmatmul.mubr.bf16.gmra.mrb[0].mxu0 %v1873
      %v1978 = vpop.f32.mrb[0].mxu0
      %v1979 = vadd.f32 0.0, %v1978
      %v1980 = vpop.f32.mrb[0].mxu0
      %v1981 = vpop.f32.mrb[0].mxu0
      %v1982 = vadd.f32 0.0, %v1981
      %v1983 = vpop.f32.mrb[0].mxu0
      %1984 = vmatprep.mubr.bf16.mxu0 0
      %1985 = vmatmul.mubr.bf16.gmra.mrb[0].mxu0 %v1876
      %v1986 = vpop.f32.mrb[0].mxu0
      %v1987 = vadd.f32 0.0, %v1986
      %v1988 = vpop.f32.mrb[0].mxu0
      %v1989 = vpop.f32.mrb[0].mxu0
      %v1990 = vadd.f32 0.0, %v1989
      %v1991 = vpop.f32.mrb[0].mxu0
      %1992 = vmatprep.mubr.bf16.mxu0 0
      %1993 = vmatmul.mubr.bf16.gmra.mrb[0].mxu0 %v1879
      %v1994 = vpop.f32.mrb[0].mxu0
      %v1995 = vadd.f32 0.0, %v1994
      %v1996 = vpop.f32.mrb[0].mxu0
      %v1997 = vpop.f32.mrb[0].mxu0
      %v1998 = vadd.f32 0.0, %v1997
      %v1999 = vpop.f32.mrb[0].mxu0
      %2000 = vmatprep.mubr.bf16.mxu0 0
      %2001 = vmatmul.mubr.bf16.gmra.mrb[0].mxu0 %v1882
      %v2002 = vpop.f32.mrb[0].mxu0
      %v2003 = vadd.f32 0.0, %v2002
      %v2004 = vpop.f32.mrb[0].mxu0
      %v2005 = vpop.f32.mrb[0].mxu0
      %v2006 = vadd.f32 0.0, %v2005
      %v2007 = vpop.f32.mrb[0].mxu0
      %2008 = vmatprep.mubr.bf16.mxu0 0
      %2009 = vmatmul.mubr.bf16.gmra.mrb[0].mxu0 %v1885
      %v2010 = vpop.f32.mrb[0].mxu0
      %v2011 = vadd.f32 0.0, %v2010
      %v2012 = vpop.f32.mrb[0].mxu0
      %v2013 = vpop.f32.mrb[0].mxu0
      %v2014 = vadd.f32 0.0, %v2013
      %v2015 = vpop.f32.mrb[0].mxu0
      %2016 = vmatprep.mubr.bf16.mxu0 0
      %2017 = vmatmul.mubr.bf16.gmra.mrb[0].mxu0 %v1888
      %v2018 = vpop.f32.mrb[0].mxu0
      %v2019 = vadd.f32 0.0, %v2018
      %v2020 = vpop.f32.mrb[0].mxu0
      %v2021 = vpop.f32.mrb[0].mxu0
      %v2022 = vadd.f32 0.0, %v2021
      %v2023 = vpop.f32.mrb[0].mxu0
      %2024 = vmatprep.mubr.bf16.mxu0 0
      %2025 = vmatmul.mubr.bf16.gmra.mrb[0].mxu0 %v1891
      %v2026 = vpop.f32.mrb[0].mxu0
      %v2027 = vadd.f32 0.0, %v2026
      %v2028 = vpop.f32.mrb[0].mxu0
      %v2029 = vpop.f32.mrb[0].mxu0
      %v2030 = vadd.f32 0.0, %v2029
      %v2031 = vpop.f32.mrb[0].mxu0
      %2032 = vmatprep.mubr.bf16.mxu0 0
      %2033 = vmatmul.mubr.bf16.gmra.mrb[0].mxu0 %v1894
      %v2034 = vpop.f32.mrb[0].mxu0
      %v2035 = vadd.f32 0.0, %v2034
      %v2036 = vpop.f32.mrb[0].mxu0
      %v2037 = vpop.f32.mrb[0].mxu0
      %v2038 = vadd.f32 0.0, %v2037
      %v2039 = vpop.f32.mrb[0].mxu0
      %2040 = vmatprep.mubr.bf16.mxu0 0
      %2041 = vmatmul.mubr.bf16.gmra.mrb[0].mxu0 %v1897
      %v2042 = vpop.f32.mrb[0].mxu0
      %v2043 = vadd.f32 0.0, %v2042
      %v2044 = vpop.f32.mrb[0].mxu0
      %v2045 = vpop.f32.mrb[0].mxu0
      %v2046 = vadd.f32 0.0, %v2045
      %v2047 = vpop.f32.mrb[0].mxu0
      %2048 = vmatprep.mubr.bf16.mxu0 0
      %2049 = vmatmul.mubr.bf16.gmra.mrb[0].mxu0 %v1900
      %v2050 = vpop.f32.mrb[0].mxu0
      %v2051 = vadd.f32 0.0, %v2050
      %v2052 = vpop.f32.mrb[0].mxu0
      %v2053 = vpop.f32.mrb[0].mxu0
      %v2054 = vadd.f32 0.0, %v2053
      %v2055 = vpop.f32.mrb[0].mxu0
      %2056 = vmatprep.mubr.bf16.mxu0 0
      %2057 = vmatmul.mubr.bf16.gmra.mrb[0].mxu0 %v1903
      %v2058 = vpop.f32.mrb[0].mxu0
      %v2059 = vadd.f32 0.0, %v2058
      %v2060 = vpop.f32.mrb[0].mxu0
      %v2061 = vpop.f32.mrb[0].mxu0
      %v2062 = vadd.f32 0.0, %v2061
      %v2063 = vpop.f32.mrb[0].mxu0
      %2064 = vmatprep.mubr.bf16.mxu0 0
      %2065 = vmatmul.mubr.bf16.gmra.mrb[0].mxu0 %v1906
      %v2066 = vpop.f32.mrb[0].mxu0
      %v2067 = vadd.f32 0.0, %v2066
      %v2068 = vpop.f32.mrb[0].mxu0
      %v2069 = vpop.f32.mrb[0].mxu0
      %v2070 = vadd.f32 0.0, %v2069
      %v2071 = vpop.f32.mrb[0].mxu0
      %2072 = vmatprep.mubr.bf16.mxu0 0
      %2073 = vmatmul.mubr.bf16.gmra.mrb[0].mxu0 %v1909
      %v2074 = vpop.f32.mrb[0].mxu0
      %v2075 = vadd.f32 0.0, %v2074
      %v2076 = vpop.f32.mrb[0].mxu0
      %v2077 = vpop.f32.mrb[0].mxu0
      %v2078 = vadd.f32 0.0, %v2077
      %v2079 = vpop.f32.mrb[0].mxu0
      %2080 = vmatprep.mubr.bf16.mxu0 0
      %2081 = vmatmul.mubr.bf16.gmra.mrb[0].mxu0 %v1912
      %v2082 = vpop.f32.mrb[0].mxu0
      %v2083 = vadd.f32 0.0, %v2082
      %v2084 = vpop.f32.mrb[0].mxu0
      %v2085 = vpop.f32.mrb[0].mxu0
      %v2086 = vadd.f32 0.0, %v2085
      %v2087 = vpop.f32.mrb[0].mxu0
      %2088 = vmatprep.mubr.bf16.mxu0 0
      %2089 = vmatmul.mubr.bf16.gmra.mrb[0].mxu0 %v1915
      %v2090 = vpop.f32.mrb[0].mxu0
      %v2091 = vadd.f32 0.0, %v2090
      %v2092 = vpop.f32.mrb[0].mxu0
      %v2093 = vpop.f32.mrb[0].mxu0
      %v2094 = vadd.f32 0.0, %v2093
      %v2095 = vpop.f32.mrb[0].mxu0
      %2096 = vdwg.mxu0
      %v2097 = vadd.f32 %v1650, %v1955
      %v2098 = vadd.f32 %v1651, %v1958
      %v2099 = vadd.f32 %v1652, %v1963
      %v2100 = vadd.f32 %v1653, %v1966
      %v2101 = vadd.f32 %v1654, %v1971
      %v2102 = vadd.f32 %v1655, %v1974
      %v2103 = vadd.f32 %v1656, %v1979
      %v2104 = vadd.f32 %v1657, %v1982
      %v2105 = vadd.f32 %v1658, %v1987
      %v2106 = vadd.f32 %v1659, %v1990
      %v2107 = vadd.f32 %v1660, %v1995
      %v2108 = vadd.f32 %v1661, %v1998
      %v2109 = vadd.f32 %v1662, %v2003
      %v2110 = vadd.f32 %v1663, %v2006
      %v2111 = vadd.f32 %v1664, %v2011
      %v2112 = vadd.f32 %v1665, %v2014
      %v2113 = vadd.f32 %v1666, %v2019
      %v2114 = vadd.f32 %v1667, %v2022
      %v2115 = vadd.f32 %v1668, %v2027
      %v2116 = vadd.f32 %v1669, %v2030
      %v2117 = vadd.f32 %v1670, %v2035
      %v2118 = vadd.f32 %v1671, %v2038
      %v2119 = vadd.f32 %v1672, %v2043
      %v2120 = vadd.f32 %v1673, %v2046
      %v2121 = vadd.f32 %v1674, %v2051
      %v2122 = vadd.f32 %v1675, %v2054
      %v2123 = vadd.f32 %v1676, %v2059
      %v2124 = vadd.f32 %v1677, %v2062
      %v2125 = vadd.f32 %v1678, %v2067
      %v2126 = vadd.f32 %v1679, %v2070
      %v2127 = vadd.f32 %v1680, %v2075
      %v2128 = vadd.f32 %v1681, %v2078
      %v2129 = vadd.f32 %v1682, %v2083
      %v2130 = vadd.f32 %v1683, %v2086
      %v2131 = vadd.f32 %v1684, %v2091
      %v2132 = vadd.f32 %v1685, %v2094
      %v2133 = vld [vmem:[%s192 + $0x8] sm:$0xc]
      %s2134 = scalar_lea.vmem %s1, 20
      %v2135 = vld [vmem:[%s2134] sm:$0xf]
      %v2137 = vunpack.c.l.b16 %v2133
      %v2138 = vpack.c.b16 %v1324, %v2137
      %vm2139 = vcmask 1045504
      %v2140 = vrot.slane %v2138, 2
      %v2141 = vrot.slane %v1361, 2
      %v2142 = vsel %vm2139, %v2140, %v2141
      %v2143 = vrot.slane %v1362, 2
      %v2144 = vsel %vm2139, %v2141, %v2143
      %v2145 = vrot.slane %v1363, 2
      %v2146 = vsel %vm2139, %v2143, %v2145
      %v2147 = vrot.slane %v1364, 2
      %v2148 = vsel %vm2139, %v2145, %v2147
      %v2149 = vrot.slane %v1365, 2
      %v2150 = vsel %vm2139, %v2147, %v2149
      %v2151 = vrot.slane %v1366, 2
      %v2152 = vsel %vm2139, %v2149, %v2151
      %v2153 = vrot.slane %v1367, 2
      %v2154 = vsel %vm2139, %v2151, %v2153
      %v2155 = vrot.slane %v1368, 2
      %v2156 = vsel %vm2139, %v2153, %v2155
      %v2157 = vrot.slane %v1369, 2
      %v2158 = vsel %vm2139, %v2155, %v2157
      %v2159 = vrot.slane %v1370, 2
      %v2160 = vsel %vm2139, %v2157, %v2159
      %v2161 = vrot.slane %v1371, 2
      %v2162 = vsel %vm2139, %v2159, %v2161
      %v2163 = vrot.slane %v1372, 2
      %v2164 = vsel %vm2139, %v2161, %v2163
      %v2165 = vrot.slane %v1373, 2
      %v2166 = vsel %vm2139, %v2163, %v2165
      %v2167 = vrot.slane %v1374, 2
      %v2168 = vsel %vm2139, %v2165, %v2167
      %v2169 = vrot.slane %v1375, 2
      %v2170 = vsel %vm2139, %v2167, %v2169
      %v2171 = vrot.slane %v1376, 2
      %v2172 = vsel %vm2139, %v2169, %v2171
      %v2173 = vrot.slane %v1377, 2
      %v2174 = vsel %vm2139, %v2171, %v2173
      %v2175 = vrot.slane %v1691, 2
      %v2176 = vsel %vm2139, %v2173, %v2175
      %v2178 = vsel %vm481, %v2142, 0
      %v2181 = vsel %vm481, %v2144, 0
      %v2184 = vsel %vm481, %v2146, 0
      %v2187 = vsel %vm481, %v2148, 0
      %v2190 = vsel %vm481, %v2150, 0
      %v2193 = vsel %vm481, %v2152, 0
      %v2196 = vsel %vm481, %v2154, 0
      %v2199 = vsel %vm481, %v2156, 0
      %v2202 = vsel %vm481, %v2158, 0
      %v2205 = vsel %vm481, %v2160, 0
      %v2208 = vsel %vm481, %v2162, 0
      %v2211 = vsel %vm481, %v2164, 0
      %v2214 = vsel %vm481, %v2166, 0
      %v2217 = vsel %vm481, %v2168, 0
      %v2220 = vsel %vm481, %v2170, 0
      %v2223 = vsel %vm481, %v2172, 0
      %v2226 = vsel %vm481, %v2174, 0
      %v2229 = vsel %vm481, %v2176, 0
      %v2232 = vsel %vm536, %v2135, 0
      %2234 = vmatprep.subr.bf16.mxu0 0
      %2235 = vmatpush1.bf16.msra.mxu0 %v2232
      %2236 = vmatprep.subr.bf16.mxu0 0
      %2237 = vmatpush1.bf16.msra.mxu0 0
      %2238 = vmatprep.subr.bf16.mxu0 0
      %2239 = vmatpush1.bf16.msra.mxu0 0
      %2240 = vmatprep.subr.bf16.mxu0 0
      %2241 = vmatpush1.bf16.msra.mxu0 0
      %2242 = vmatprep.subr.bf16.mxu0 0
      %2243 = vmatpush1.bf16.msra.mxu0 0
      %2244 = vmatprep.subr.bf16.mxu0 0
      %2245 = vmatpush1.bf16.msra.mxu0 0
      %2246 = vmatprep.subr.bf16.mxu0 0
      %2247 = vmatpush1.bf16.msra.mxu0 0
      %2248 = vmatprep.subr.bf16.mxu0 0
      %2249 = vmatpush1.bf16.msra.mxu0 0
      %2250 = vmatprep.subr.bf16.mxu0 0
      %2251 = vmatpush1.bf16.msra.mxu0 0
      %2252 = vmatprep.subr.bf16.mxu0 0
      %2253 = vmatpush1.bf16.msra.mxu0 0
      %2254 = vmatprep.subr.bf16.mxu0 0
      %2255 = vmatpush1.bf16.msra.mxu0 0
      %2256 = vmatprep.subr.bf16.mxu0 0
      %2257 = vmatpush1.bf16.msra.mxu0 0
      %2258 = vmatprep.subr.bf16.mxu0 0
      %2259 = vmatpush1.bf16.msra.mxu0 0
      %2260 = vmatprep.subr.bf16.mxu0 0
      %2261 = vmatpush1.bf16.msra.mxu0 0
      %2262 = vmatprep.subr.bf16.mxu0 0
      %2263 = vmatpush1.bf16.msra.mxu0 0
      %2264 = vmatprep.subr.bf16.mxu0 0
      %2265 = vmatpush1.bf16.msra.mxu0 0
      %2266 = vmatprep.mubr.bf16.mxu0 0
      %2267 = vmatmul.mubr.bf16.gmra.mrb[0].mxu0 %v2178
      %v2268 = vpop.f32.mrb[0].mxu0
      %v2269 = vadd.f32 0.0, %v2268
      %v2270 = vpop.f32.mrb[0].mxu0
      %v2271 = vpop.f32.mrb[0].mxu0
      %v2272 = vadd.f32 0.0, %v2271
      %v2273 = vpop.f32.mrb[0].mxu0
      %2274 = vmatprep.mubr.bf16.mxu0 0
      %2275 = vmatmul.mubr.bf16.gmra.mrb[0].mxu0 %v2181
      %v2276 = vpop.f32.mrb[0].mxu0
      %v2277 = vadd.f32 0.0, %v2276
      %v2278 = vpop.f32.mrb[0].mxu0
      %v2279 = vpop.f32.mrb[0].mxu0
      %v2280 = vadd.f32 0.0, %v2279
      %v2281 = vpop.f32.mrb[0].mxu0
      %2282 = vmatprep.mubr.bf16.mxu0 0
      %2283 = vmatmul.mubr.bf16.gmra.mrb[0].mxu0 %v2184
      %v2284 = vpop.f32.mrb[0].mxu0
      %v2285 = vadd.f32 0.0, %v2284
      %v2286 = vpop.f32.mrb[0].mxu0
      %v2287 = vpop.f32.mrb[0].mxu0
      %v2288 = vadd.f32 0.0, %v2287
      %v2289 = vpop.f32.mrb[0].mxu0
      %2290 = vmatprep.mubr.bf16.mxu0 0
      %2291 = vmatmul.mubr.bf16.gmra.mrb[0].mxu0 %v2187
      %v2292 = vpop.f32.mrb[0].mxu0
      %v2293 = vadd.f32 0.0, %v2292
      %v2294 = vpop.f32.mrb[0].mxu0
      %v2295 = vpop.f32.mrb[0].mxu0
      %v2296 = vadd.f32 0.0, %v2295
      %v2297 = vpop.f32.mrb[0].mxu0
      %2298 = vmatprep.mubr.bf16.mxu0 0
      %2299 = vmatmul.mubr.bf16.gmra.mrb[0].mxu0 %v2190
      %v2300 = vpop.f32.mrb[0].mxu0
      %v2301 = vadd.f32 0.0, %v2300
      %v2302 = vpop.f32.mrb[0].mxu0
      %v2303 = vpop.f32.mrb[0].mxu0
      %v2304 = vadd.f32 0.0, %v2303
      %v2305 = vpop.f32.mrb[0].mxu0
      %2306 = vmatprep.mubr.bf16.mxu0 0
      %2307 = vmatmul.mubr.bf16.gmra.mrb[0].mxu0 %v2193
      %v2308 = vpop.f32.mrb[0].mxu0
      %v2309 = vadd.f32 0.0, %v2308
      %v2310 = vpop.f32.mrb[0].mxu0
      %v2311 = vpop.f32.mrb[0].mxu0
      %v2312 = vadd.f32 0.0, %v2311
      %v2313 = vpop.f32.mrb[0].mxu0
      %2314 = vmatprep.mubr.bf16.mxu0 0
      %2315 = vmatmul.mubr.bf16.gmra.mrb[0].mxu0 %v2196
      %v2316 = vpop.f32.mrb[0].mxu0
      %v2317 = vadd.f32 0.0, %v2316
      %v2318 = vpop.f32.mrb[0].mxu0
      %v2319 = vpop.f32.mrb[0].mxu0
      %v2320 = vadd.f32 0.0, %v2319
      %v2321 = vpop.f32.mrb[0].mxu0
      %2322 = vmatprep.mubr.bf16.mxu0 0
      %2323 = vmatmul.mubr.bf16.gmra.mrb[0].mxu0 %v2199
      %v2324 = vpop.f32.mrb[0].mxu0
      %v2325 = vadd.f32 0.0, %v2324
      %v2326 = vpop.f32.mrb[0].mxu0
      %v2327 = vpop.f32.mrb[0].mxu0
      %v2328 = vadd.f32 0.0, %v2327
      %v2329 = vpop.f32.mrb[0].mxu0
      %2330 = vmatprep.mubr.bf16.mxu0 0
      %2331 = vmatmul.mubr.bf16.gmra.mrb[0].mxu0 %v2202
      %v2332 = vpop.f32.mrb[0].mxu0
      %v2333 = vadd.f32 0.0, %v2332
      %v2334 = vpop.f32.mrb[0].mxu0
      %v2335 = vpop.f32.mrb[0].mxu0
      %v2336 = vadd.f32 0.0, %v2335
      %v2337 = vpop.f32.mrb[0].mxu0
      %2338 = vmatprep.mubr.bf16.mxu0 0
      %2339 = vmatmul.mubr.bf16.gmra.mrb[0].mxu0 %v2205
      %v2340 = vpop.f32.mrb[0].mxu0
      %v2341 = vadd.f32 0.0, %v2340
      %v2342 = vpop.f32.mrb[0].mxu0
      %v2343 = vpop.f32.mrb[0].mxu0
      %v2344 = vadd.f32 0.0, %v2343
      %v2345 = vpop.f32.mrb[0].mxu0
      %2346 = vmatprep.mubr.bf16.mxu0 0
      %2347 = vmatmul.mubr.bf16.gmra.mrb[0].mxu0 %v2208
      %v2348 = vpop.f32.mrb[0].mxu0
      %v2349 = vadd.f32 0.0, %v2348
      %v2350 = vpop.f32.mrb[0].mxu0
      %v2351 = vpop.f32.mrb[0].mxu0
      %v2352 = vadd.f32 0.0, %v2351
      %v2353 = vpop.f32.mrb[0].mxu0
      %2354 = vmatprep.mubr.bf16.mxu0 0
      %2355 = vmatmul.mubr.bf16.gmra.mrb[0].mxu0 %v2211
      %v2356 = vpop.f32.mrb[0].mxu0
      %v2357 = vadd.f32 0.0, %v2356
      %v2358 = vpop.f32.mrb[0].mxu0
      %v2359 = vpop.f32.mrb[0].mxu0
      %v2360 = vadd.f32 0.0, %v2359
      %v2361 = vpop.f32.mrb[0].mxu0
      %2362 = vmatprep.mubr.bf16.mxu0 0
      %2363 = vmatmul.mubr.bf16.gmra.mrb[0].mxu0 %v2214
      %v2364 = vpop.f32.mrb[0].mxu0
      %v2365 = vadd.f32 0.0, %v2364
      %v2366 = vpop.f32.mrb[0].mxu0
      %v2367 = vpop.f32.mrb[0].mxu0
      %v2368 = vadd.f32 0.0, %v2367
      %v2369 = vpop.f32.mrb[0].mxu0
      %2370 = vmatprep.mubr.bf16.mxu0 0
      %2371 = vmatmul.mubr.bf16.gmra.mrb[0].mxu0 %v2217
      %v2372 = vpop.f32.mrb[0].mxu0
      %v2373 = vadd.f32 0.0, %v2372
      %v2374 = vpop.f32.mrb[0].mxu0
      %v2375 = vpop.f32.mrb[0].mxu0
      %v2376 = vadd.f32 0.0, %v2375
      %v2377 = vpop.f32.mrb[0].mxu0
      %2378 = vmatprep.mubr.bf16.mxu0 0
      %2379 = vmatmul.mubr.bf16.gmra.mrb[0].mxu0 %v2220
      %v2380 = vpop.f32.mrb[0].mxu0
      %v2381 = vadd.f32 0.0, %v2380
      %v2382 = vpop.f32.mrb[0].mxu0
      %v2383 = vpop.f32.mrb[0].mxu0
      %v2384 = vadd.f32 0.0, %v2383
      %v2385 = vpop.f32.mrb[0].mxu0
      %2386 = vmatprep.mubr.bf16.mxu0 0
      %2387 = vmatmul.mubr.bf16.gmra.mrb[0].mxu0 %v2223
      %v2388 = vpop.f32.mrb[0].mxu0
      %v2389 = vadd.f32 0.0, %v2388
      %v2390 = vpop.f32.mrb[0].mxu0
      %v2391 = vpop.f32.mrb[0].mxu0
      %v2392 = vadd.f32 0.0, %v2391
      %v2393 = vpop.f32.mrb[0].mxu0
      %2394 = vmatprep.mubr.bf16.mxu0 0
      %2395 = vmatmul.mubr.bf16.gmra.mrb[0].mxu0 %v2226
      %v2396 = vpop.f32.mrb[0].mxu0
      %v2397 = vadd.f32 0.0, %v2396
      %v2398 = vpop.f32.mrb[0].mxu0
      %v2399 = vpop.f32.mrb[0].mxu0
      %v2400 = vadd.f32 0.0, %v2399
      %v2401 = vpop.f32.mrb[0].mxu0
      %2402 = vmatprep.mubr.bf16.mxu0 0
      %2403 = vmatmul.mubr.bf16.gmra.mrb[0].mxu0 %v2229
      %v2404 = vpop.f32.mrb[0].mxu0
      %v2405 = vadd.f32 0.0, %v2404
      %v2406 = vpop.f32.mrb[0].mxu0
      %v2407 = vpop.f32.mrb[0].mxu0
      %v2408 = vadd.f32 0.0, %v2407
      %v2409 = vpop.f32.mrb[0].mxu0
      %2410 = vdwg.mxu0
      %v2411 = vadd.f32 %v2097, %v2269
      %v2412 = vadd.f32 %v2098, %v2272
      %v2413 = vadd.f32 %v2099, %v2277
      %v2414 = vadd.f32 %v2100, %v2280
      %v2415 = vadd.f32 %v2101, %v2285
      %v2416 = vadd.f32 %v2102, %v2288
      %v2417 = vadd.f32 %v2103, %v2293
      %v2418 = vadd.f32 %v2104, %v2296
      %v2419 = vadd.f32 %v2105, %v2301
      %v2420 = vadd.f32 %v2106, %v2304
      %v2421 = vadd.f32 %v2107, %v2309
      %v2422 = vadd.f32 %v2108, %v2312
      %v2423 = vadd.f32 %v2109, %v2317
      %v2424 = vadd.f32 %v2110, %v2320
      %v2425 = vadd.f32 %v2111, %v2325
      %v2426 = vadd.f32 %v2112, %v2328
      %v2427 = vadd.f32 %v2113, %v2333
      %v2428 = vadd.f32 %v2114, %v2336
      %v2429 = vadd.f32 %v2115, %v2341
      %v2430 = vadd.f32 %v2116, %v2344
      %v2431 = vadd.f32 %v2117, %v2349
      %v2432 = vadd.f32 %v2118, %v2352
      %v2433 = vadd.f32 %v2119, %v2357
      %v2434 = vadd.f32 %v2120, %v2360
      %v2435 = vadd.f32 %v2121, %v2365
      %v2436 = vadd.f32 %v2122, %v2368
      %v2437 = vadd.f32 %v2123, %v2373
      %v2438 = vadd.f32 %v2124, %v2376
      %v2439 = vadd.f32 %v2125, %v2381
      %v2440 = vadd.f32 %v2126, %v2384
      %v2441 = vadd.f32 %v2127, %v2389
      %v2442 = vadd.f32 %v2128, %v2392
      %v2443 = vadd.f32 %v2129, %v2397
      %v2444 = vadd.f32 %v2130, %v2400
      %v2445 = vadd.f32 %v2131, %v2405
      %v2446 = vadd.f32 %v2132, %v2408
      %v2447 = vld [vmem:[%s192 + $0x10] sm:$0xc]
      %v2448 = vld [vmem:[%s192 + $0x14] sm:$0xf]
      %v2449 = vld [vmem:[%s192 + $0x18] sm:$0xf]
      %v2450 = vld [vmem:[%s192 + $0x1c] sm:$0xf]
      %v2451 = vld [vmem:[%s192 + $0x20] sm:$0xf]
      %v2452 = vld [vmem:[%s192 + $0x24] sm:$0xf]
      %v2453 = vld [vmem:[%s192 + $0x28] sm:$0xf]
      %v2454 = vld [vmem:[%s192 + $0x2c] sm:$0xf]
      %v2455 = vld [vmem:[%s192 + $0x30] sm:$0xf]
      %v2456 = vld [vmem:[%s192 + $0x34] sm:$0xf]
      %v2457 = vld [vmem:[%s192 + $0x38] sm:$0xf]
      %v2458 = vld [vmem:[%s192 + $0x3c] sm:$0xf]
      %v2459 = vld [vmem:[%s192 + $0x40] sm:$0xf]
      %v2460 = vld [vmem:[%s192 + $0x44] sm:$0xf]
      %v2461 = vld [vmem:[%s192 + $0x48] sm:$0xf]
      %v2462 = vld [vmem:[%s192 + $0x4c] sm:$0xf]
      %v2463 = vld [vmem:[%s192 + $0x50] sm:$0xf]
      %v2464 = vld [vmem:[%s192 + $0x54] sm:$0xf]
      %v2465 = vld [vmem:[%s192 + $0x58] sm:$0xf]
      %v2466 = vld [vmem:[%s192 + $0x5c] sm:$0xf]
      %v2467 = vld [vmem:[%s192 + $0x60] sm:$0xf]
      %v2468 = vld [vmem:[%s192 + $0x64] sm:$0xf]
      %v2469 = vld [vmem:[%s192 + $0x68] sm:$0xf]
      %v2470 = vld [vmem:[%s192 + $0x6c] sm:$0xf]
      %v2471 = vld [vmem:[%s192 + $0x70] sm:$0xf]
      %v2472 = vld [vmem:[%s192 + $0x74] sm:$0xf]
      %v2473 = vld [vmem:[%s192 + $0x78] sm:$0xf]
      %v2474 = vld [vmem:[%s192 + $0x7c] sm:$0xf]
      %v2475 = vld [vmem:[%s192 + $0x80] sm:$0xf]
      %v2476 = vld [vmem:[%s192 + $0x84] sm:$0xf]
      %v2477 = vld [vmem:[%s192 + $0x88] sm:$0xf]
      %v2478 = vld [vmem:[%s192 + $0x8c] sm:$0xf]
      %v2479 = vld [vmem:[%s192 + $0x90] sm:$0xf]
      %v2480 = vld [vmem:[%s192 + $0x94] sm:$0xf]
      %v2481 = vld [vmem:[%s192 + $0x98] sm:$0xf]
      %v2482 = vld [vmem:[%s192 + $0x9c] sm:$0xf]
      %v2483 = vld [vmem:[%s192 + $0xa0] sm:$0x3]
      %s2484 = scalar_lea.vmem %s1, 24
      %v2485 = vld [vmem:[%s2484] sm:$0xf]
      %v2523 = vunpack.c.l.b16 %v2447
      %v2524 = vunpack.c.l.b16 %v2448
      %v2525 = vunpack.c.l.b16 %v2449
      %v2526 = vunpack.c.l.b16 %v2450
      %v2527 = vunpack.c.l.b16 %v2451
      %v2528 = vunpack.c.l.b16 %v2452
      %v2529 = vunpack.c.l.b16 %v2453
      %v2530 = vunpack.c.l.b16 %v2454
      %v2531 = vunpack.c.l.b16 %v2455
      %v2532 = vunpack.c.l.b16 %v2456
      %v2533 = vunpack.c.l.b16 %v2457
      %v2534 = vunpack.c.l.b16 %v2458
      %v2535 = vunpack.c.l.b16 %v2459
      %v2536 = vunpack.c.l.b16 %v2460
      %v2537 = vunpack.c.l.b16 %v2461
      %v2538 = vunpack.c.l.b16 %v2462
      %v2539 = vunpack.c.l.b16 %v2463
      %v2540 = vunpack.c.l.b16 %v2464
      %v2541 = vunpack.c.l.b16 %v2465
      %v2542 = vunpack.c.l.b16 %v2466
      %v2543 = vunpack.c.l.b16 %v2467
      %v2544 = vunpack.c.l.b16 %v2468
      %v2545 = vunpack.c.l.b16 %v2469
      %v2546 = vunpack.c.l.b16 %v2470
      %v2547 = vunpack.c.l.b16 %v2471
      %v2548 = vunpack.c.l.b16 %v2472
      %v2549 = vunpack.c.l.b16 %v2473
      %v2550 = vunpack.c.l.b16 %v2474
      %v2551 = vunpack.c.l.b16 %v2475
      %v2552 = vunpack.c.l.b16 %v2476
      %v2553 = vunpack.c.l.b16 %v2477
      %v2554 = vunpack.c.l.b16 %v2478
      %v2555 = vunpack.c.l.b16 %v2479
      %v2556 = vunpack.c.l.b16 %v2480
      %v2557 = vunpack.c.l.b16 %v2481
      %v2558 = vunpack.c.l.b16 %v2482
      %v2559 = vunpack.c.l.b16 %v2483
      %v2560 = vpack.c.b16 %v2524, %v2523
      %v2561 = vpack.c.b16 %v2526, %v2525
      %v2562 = vpack.c.b16 %v2528, %v2527
      %v2563 = vpack.c.b16 %v2530, %v2529
      %v2564 = vpack.c.b16 %v2532, %v2531
      %v2565 = vpack.c.b16 %v2534, %v2533
      %v2566 = vpack.c.b16 %v2536, %v2535
      %v2567 = vpack.c.b16 %v2538, %v2537
      %v2568 = vpack.c.b16 %v2540, %v2539
      %v2569 = vpack.c.b16 %v2542, %v2541
      %v2570 = vpack.c.b16 %v2544, %v2543
      %v2571 = vpack.c.b16 %v2546, %v2545
      %v2572 = vpack.c.b16 %v2548, %v2547
      %v2573 = vpack.c.b16 %v2550, %v2549
      %v2574 = vpack.c.b16 %v2552, %v2551
      %v2575 = vpack.c.b16 %v2554, %v2553
      %v2576 = vpack.c.b16 %v2556, %v2555
      %v2577 = vpack.c.b16 %v2558, %v2557
      %v2578 = vpack.c.b16 %v2559, %v2559
      %v2579 = vrot.slane %v2560, 2
      %v2580 = vrot.slane %v2561, 2
      %v2581 = vsel %vm2139, %v2579, %v2580
      %v2582 = vrot.slane %v2562, 2
      %v2583 = vsel %vm2139, %v2580, %v2582
      %v2584 = vrot.slane %v2563, 2
      %v2585 = vsel %vm2139, %v2582, %v2584
      %v2586 = vrot.slane %v2564, 2
      %v2587 = vsel %vm2139, %v2584, %v2586
      %v2588 = vrot.slane %v2565, 2
      %v2589 = vsel %vm2139, %v2586, %v2588
      %v2590 = vrot.slane %v2566, 2
      %v2591 = vsel %vm2139, %v2588, %v2590
      %v2592 = vrot.slane %v2567, 2
      %v2593 = vsel %vm2139, %v2590, %v2592
      %v2594 = vrot.slane %v2568, 2
      %v2595 = vsel %vm2139, %v2592, %v2594
      %v2596 = vrot.slane %v2569, 2
      %v2597 = vsel %vm2139, %v2594, %v2596
      %v2598 = vrot.slane %v2570, 2
      %v2599 = vsel %vm2139, %v2596, %v2598
      %v2600 = vrot.slane %v2571, 2
      %v2601 = vsel %vm2139, %v2598, %v2600
      %v2602 = vrot.slane %v2572, 2
      %v2603 = vsel %vm2139, %v2600, %v2602
      %v2604 = vrot.slane %v2573, 2
      %v2605 = vsel %vm2139, %v2602, %v2604
      %v2606 = vrot.slane %v2574, 2
      %v2607 = vsel %vm2139, %v2604, %v2606
      %v2608 = vrot.slane %v2575, 2
      %v2609 = vsel %vm2139, %v2606, %v2608
      %v2610 = vrot.slane %v2576, 2
      %v2611 = vsel %vm2139, %v2608, %v2610
      %v2612 = vrot.slane %v2577, 2
      %v2613 = vsel %vm2139, %v2610, %v2612
      %v2614 = vrot.slane %v2578, 2
      %v2615 = vsel %vm2139, %v2612, %v2614
      %v2617 = vsel %vm481, %v2581, 0
      %v2620 = vsel %vm481, %v2583, 0
      %v2623 = vsel %vm481, %v2585, 0
      %v2626 = vsel %vm481, %v2587, 0
      %v2629 = vsel %vm481, %v2589, 0
      %v2632 = vsel %vm481, %v2591, 0
      %v2635 = vsel %vm481, %v2593, 0
      %v2638 = vsel %vm481, %v2595, 0
      %v2641 = vsel %vm481, %v2597, 0
      %v2644 = vsel %vm481, %v2599, 0
      %v2647 = vsel %vm481, %v2601, 0
      %v2650 = vsel %vm481, %v2603, 0
      %v2653 = vsel %vm481, %v2605, 0
      %v2656 = vsel %vm481, %v2607, 0
      %v2659 = vsel %vm481, %v2609, 0
      %v2662 = vsel %vm481, %v2611, 0
      %v2665 = vsel %vm481, %v2613, 0
      %v2668 = vsel %vm481, %v2615, 0
      %v2671 = vsel %vm536, %v2485, 0
      %2673 = vmatprep.subr.bf16.mxu0 0
      %2674 = vmatpush1.bf16.msra.mxu0 %v2671
      %2675 = vmatprep.subr.bf16.mxu0 0
      %2676 = vmatpush1.bf16.msra.mxu0 0
      %2677 = vmatprep.subr.bf16.mxu0 0
      %2678 = vmatpush1.bf16.msra.mxu0 0
      %2679 = vmatprep.subr.bf16.mxu0 0
      %2680 = vmatpush1.bf16.msra.mxu0 0
      %2681 = vmatprep.subr.bf16.mxu0 0
      %2682 = vmatpush1.bf16.msra.mxu0 0
      %2683 = vmatprep.subr.bf16.mxu0 0
      %2684 = vmatpush1.bf16.msra.mxu0 0
      %2685 = vmatprep.subr.bf16.mxu0 0
      %2686 = vmatpush1.bf16.msra.mxu0 0
      %2687 = vmatprep.subr.bf16.mxu0 0
      %2688 = vmatpush1.bf16.msra.mxu0 0
      %2689 = vmatprep.subr.bf16.mxu0 0
      %2690 = vmatpush1.bf16.msra.mxu0 0
      %2691 = vmatprep.subr.bf16.mxu0 0
      %2692 = vmatpush1.bf16.msra.mxu0 0
      %2693 = vmatprep.subr.bf16.mxu0 0
      %2694 = vmatpush1.bf16.msra.mxu0 0
      %2695 = vmatprep.subr.bf16.mxu0 0
      %2696 = vmatpush1.bf16.msra.mxu0 0
      %2697 = vmatprep.subr.bf16.mxu0 0
      %2698 = vmatpush1.bf16.msra.mxu0 0
      %2699 = vmatprep.subr.bf16.mxu0 0
      %2700 = vmatpush1.bf16.msra.mxu0 0
      %2701 = vmatprep.subr.bf16.mxu0 0
      %2702 = vmatpush1.bf16.msra.mxu0 0
      %2703 = vmatprep.subr.bf16.mxu0 0
      %2704 = vmatpush1.bf16.msra.mxu0 0
      %2705 = vmatprep.mubr.bf16.mxu0 0
      %2706 = vmatmul.mubr.bf16.gmra.mrb[0].mxu0 %v2617
      %v2707 = vpop.f32.mrb[0].mxu0
      %v2708 = vadd.f32 0.0, %v2707
      %v2709 = vpop.f32.mrb[0].mxu0
      %v2710 = vpop.f32.mrb[0].mxu0
      %v2711 = vadd.f32 0.0, %v2710
      %v2712 = vpop.f32.mrb[0].mxu0
      %2713 = vmatprep.mubr.bf16.mxu0 0
      %2714 = vmatmul.mubr.bf16.gmra.mrb[0].mxu0 %v2620
      %v2715 = vpop.f32.mrb[0].mxu0
      %v2716 = vadd.f32 0.0, %v2715
      %v2717 = vpop.f32.mrb[0].mxu0
      %v2718 = vpop.f32.mrb[0].mxu0
      %v2719 = vadd.f32 0.0, %v2718
      %v2720 = vpop.f32.mrb[0].mxu0
      %2721 = vmatprep.mubr.bf16.mxu0 0
      %2722 = vmatmul.mubr.bf16.gmra.mrb[0].mxu0 %v2623
      %v2723 = vpop.f32.mrb[0].mxu0
      %v2724 = vadd.f32 0.0, %v2723
      %v2725 = vpop.f32.mrb[0].mxu0
      %v2726 = vpop.f32.mrb[0].mxu0
      %v2727 = vadd.f32 0.0, %v2726
      %v2728 = vpop.f32.mrb[0].mxu0
      %2729 = vmatprep.mubr.bf16.mxu0 0
      %2730 = vmatmul.mubr.bf16.gmra.mrb[0].mxu0 %v2626
      %v2731 = vpop.f32.mrb[0].mxu0
      %v2732 = vadd.f32 0.0, %v2731
      %v2733 = vpop.f32.mrb[0].mxu0
      %v2734 = vpop.f32.mrb[0].mxu0
      %v2735 = vadd.f32 0.0, %v2734
      %v2736 = vpop.f32.mrb[0].mxu0
      %2737 = vmatprep.mubr.bf16.mxu0 0
      %2738 = vmatmul.mubr.bf16.gmra.mrb[0].mxu0 %v2629
      %v2739 = vpop.f32.mrb[0].mxu0
      %v2740 = vadd.f32 0.0, %v2739
      %v2741 = vpop.f32.mrb[0].mxu0
      %v2742 = vpop.f32.mrb[0].mxu0
      %v2743 = vadd.f32 0.0, %v2742
      %v2744 = vpop.f32.mrb[0].mxu0
      %2745 = vmatprep.mubr.bf16.mxu0 0
      %2746 = vmatmul.mubr.bf16.gmra.mrb[0].mxu0 %v2632
      %v2747 = vpop.f32.mrb[0].mxu0
      %v2748 = vadd.f32 0.0, %v2747
      %v2749 = vpop.f32.mrb[0].mxu0
      %v2750 = vpop.f32.mrb[0].mxu0
      %v2751 = vadd.f32 0.0, %v2750
      %v2752 = vpop.f32.mrb[0].mxu0
      %2753 = vmatprep.mubr.bf16.mxu0 0
      %2754 = vmatmul.mubr.bf16.gmra.mrb[0].mxu0 %v2635
      %v2755 = vpop.f32.mrb[0].mxu0
      %v2756 = vadd.f32 0.0, %v2755
      %v2757 = vpop.f32.mrb[0].mxu0
      %v2758 = vpop.f32.mrb[0].mxu0
      %v2759 = vadd.f32 0.0, %v2758
      %v2760 = vpop.f32.mrb[0].mxu0
      %2761 = vmatprep.mubr.bf16.mxu0 0
      %2762 = vmatmul.mubr.bf16.gmra.mrb[0].mxu0 %v2638
      %v2763 = vpop.f32.mrb[0].mxu0
      %v2764 = vadd.f32 0.0, %v2763
      %v2765 = vpop.f32.mrb[0].mxu0
      %v2766 = vpop.f32.mrb[0].mxu0
      %v2767 = vadd.f32 0.0, %v2766
      %v2768 = vpop.f32.mrb[0].mxu0
      %2769 = vmatprep.mubr.bf16.mxu0 0
      %2770 = vmatmul.mubr.bf16.gmra.mrb[0].mxu0 %v2641
      %v2771 = vpop.f32.mrb[0].mxu0
      %v2772 = vadd.f32 0.0, %v2771
      %v2773 = vpop.f32.mrb[0].mxu0
      %v2774 = vpop.f32.mrb[0].mxu0
      %v2775 = vadd.f32 0.0, %v2774
      %v2776 = vpop.f32.mrb[0].mxu0
      %2777 = vmatprep.mubr.bf16.mxu0 0
      %2778 = vmatmul.mubr.bf16.gmra.mrb[0].mxu0 %v2644
      %v2779 = vpop.f32.mrb[0].mxu0
      %v2780 = vadd.f32 0.0, %v2779
      %v2781 = vpop.f32.mrb[0].mxu0
      %v2782 = vpop.f32.mrb[0].mxu0
      %v2783 = vadd.f32 0.0, %v2782
      %v2784 = vpop.f32.mrb[0].mxu0
      %2785 = vmatprep.mubr.bf16.mxu0 0
      %2786 = vmatmul.mubr.bf16.gmra.mrb[0].mxu0 %v2647
      %v2787 = vpop.f32.mrb[0].mxu0
      %v2788 = vadd.f32 0.0, %v2787
      %v2789 = vpop.f32.mrb[0].mxu0
      %v2790 = vpop.f32.mrb[0].mxu0
      %v2791 = vadd.f32 0.0, %v2790
      %v2792 = vpop.f32.mrb[0].mxu0
      %2793 = vmatprep.mubr.bf16.mxu0 0
      %2794 = vmatmul.mubr.bf16.gmra.mrb[0].mxu0 %v2650
      %v2795 = vpop.f32.mrb[0].mxu0
      %v2796 = vadd.f32 0.0, %v2795
      %v2797 = vpop.f32.mrb[0].mxu0
      %v2798 = vpop.f32.mrb[0].mxu0
      %v2799 = vadd.f32 0.0, %v2798
      %v2800 = vpop.f32.mrb[0].mxu0
      %2801 = vmatprep.mubr.bf16.mxu0 0
      %2802 = vmatmul.mubr.bf16.gmra.mrb[0].mxu0 %v2653
      %v2803 = vpop.f32.mrb[0].mxu0
      %v2804 = vadd.f32 0.0, %v2803
      %v2805 = vpop.f32.mrb[0].mxu0
      %v2806 = vpop.f32.mrb[0].mxu0
      %v2807 = vadd.f32 0.0, %v2806
      %v2808 = vpop.f32.mrb[0].mxu0
      %2809 = vmatprep.mubr.bf16.mxu0 0
      %2810 = vmatmul.mubr.bf16.gmra.mrb[0].mxu0 %v2656
      %v2811 = vpop.f32.mrb[0].mxu0
      %v2812 = vadd.f32 0.0, %v2811
      %v2813 = vpop.f32.mrb[0].mxu0
      %v2814 = vpop.f32.mrb[0].mxu0
      %v2815 = vadd.f32 0.0, %v2814
      %v2816 = vpop.f32.mrb[0].mxu0
      %2817 = vmatprep.mubr.bf16.mxu0 0
      %2818 = vmatmul.mubr.bf16.gmra.mrb[0].mxu0 %v2659
      %v2819 = vpop.f32.mrb[0].mxu0
      %v2820 = vadd.f32 0.0, %v2819
      %v2821 = vpop.f32.mrb[0].mxu0
      %v2822 = vpop.f32.mrb[0].mxu0
      %v2823 = vadd.f32 0.0, %v2822
      %v2824 = vpop.f32.mrb[0].mxu0
      %2825 = vmatprep.mubr.bf16.mxu0 0
      %2826 = vmatmul.mubr.bf16.gmra.mrb[0].mxu0 %v2662
      %v2827 = vpop.f32.mrb[0].mxu0
      %v2828 = vadd.f32 0.0, %v2827
      %v2829 = vpop.f32.mrb[0].mxu0
      %v2830 = vpop.f32.mrb[0].mxu0
      %v2831 = vadd.f32 0.0, %v2830
      %v2832 = vpop.f32.mrb[0].mxu0
      %2833 = vmatprep.mubr.bf16.mxu0 0
      %2834 = vmatmul.mubr.bf16.gmra.mrb[0].mxu0 %v2665
      %v2835 = vpop.f32.mrb[0].mxu0
      %v2836 = vadd.f32 0.0, %v2835
      %v2837 = vpop.f32.mrb[0].mxu0
      %v2838 = vpop.f32.mrb[0].mxu0
      %v2839 = vadd.f32 0.0, %v2838
      %v2840 = vpop.f32.mrb[0].mxu0
      %2841 = vmatprep.mubr.bf16.mxu0 0
      %2842 = vmatmul.mubr.bf16.gmra.mrb[0].mxu0 %v2668
      %v2843 = vpop.f32.mrb[0].mxu0
      %v2844 = vadd.f32 0.0, %v2843
      %v2845 = vpop.f32.mrb[0].mxu0
      %v2846 = vpop.f32.mrb[0].mxu0
      %v2847 = vadd.f32 0.0, %v2846
      %v2848 = vpop.f32.mrb[0].mxu0
      %2849 = vdwg.mxu0
      %v2850 = vadd.f32 %v2411, %v2708
      %v2851 = vadd.f32 %v2412, %v2711
      %v2852 = vadd.f32 %v2413, %v2716
      %v2853 = vadd.f32 %v2414, %v2719
      %v2854 = vadd.f32 %v2415, %v2724
      %v2855 = vadd.f32 %v2416, %v2727
      %v2856 = vadd.f32 %v2417, %v2732
      %v2857 = vadd.f32 %v2418, %v2735
      %v2858 = vadd.f32 %v2419, %v2740
      %v2859 = vadd.f32 %v2420, %v2743
      %v2860 = vadd.f32 %v2421, %v2748
      %v2861 = vadd.f32 %v2422, %v2751
      %v2862 = vadd.f32 %v2423, %v2756
      %v2863 = vadd.f32 %v2424, %v2759
      %v2864 = vadd.f32 %v2425, %v2764
      %v2865 = vadd.f32 %v2426, %v2767
      %v2866 = vadd.f32 %v2427, %v2772
      %v2867 = vadd.f32 %v2428, %v2775
      %v2868 = vadd.f32 %v2429, %v2780
      %v2869 = vadd.f32 %v2430, %v2783
      %v2870 = vadd.f32 %v2431, %v2788
      %v2871 = vadd.f32 %v2432, %v2791
      %v2872 = vadd.f32 %v2433, %v2796
      %v2873 = vadd.f32 %v2434, %v2799
      %v2874 = vadd.f32 %v2435, %v2804
      %v2875 = vadd.f32 %v2436, %v2807
      %v2876 = vadd.f32 %v2437, %v2812
      %v2877 = vadd.f32 %v2438, %v2815
      %v2878 = vadd.f32 %v2439, %v2820
      %v2879 = vadd.f32 %v2440, %v2823
      %v2880 = vadd.f32 %v2441, %v2828
      %v2881 = vadd.f32 %v2442, %v2831
      %v2882 = vadd.f32 %v2443, %v2836
      %v2883 = vadd.f32 %v2444, %v2839
      %v2884 = vadd.f32 %v2445, %v2844
      %v2885 = vadd.f32 %v2446, %v2847
      %v2886 = vld [vmem:[%s192 + $0xa0] sm:$0x7]
      %s2887 = scalar_lea.vmem %s1, 28
      %v2888 = vld [vmem:[%s2887] sm:$0xf]
      %v2890 = vunpack.c.l.b16 %v2886
      %v2891 = vpack.c.b16 %v2890, %v2890
      %vm2892 = vsmask.f32 5376
      %v2894 = vshrl.u32 %v2560, 16
      %v2896 = vrot.slane %v2894, 2
      %v2897 = vshll.u32 %v2560, 16
      %v2899 = vrot.slane %v2897, 3
      %v2900 = vor.u32 %v2896, %v2899
      %v2902 = vshrl.u32 %v2561, 16
      %v2904 = vrot.slane %v2902, 2
      %v2905 = vshll.u32 %v2561, 16
      %v2907 = vrot.slane %v2905, 3
      %v2908 = vor.u32 %v2904, %v2907
      %v2909 = vsel %vm2892, %v2900, %v2908
      %v2911 = vshrl.u32 %v2562, 16
      %v2913 = vrot.slane %v2911, 2
      %v2914 = vshll.u32 %v2562, 16
      %v2916 = vrot.slane %v2914, 3
      %v2917 = vor.u32 %v2913, %v2916
      %v2918 = vsel %vm2892, %v2908, %v2917
      %v2920 = vshrl.u32 %v2563, 16
      %v2922 = vrot.slane %v2920, 2
      %v2923 = vshll.u32 %v2563, 16
      %v2925 = vrot.slane %v2923, 3
      %v2926 = vor.u32 %v2922, %v2925
      %v2927 = vsel %vm2892, %v2917, %v2926
      %v2929 = vshrl.u32 %v2564, 16
      %v2931 = vrot.slane %v2929, 2
      %v2932 = vshll.u32 %v2564, 16
      %v2934 = vrot.slane %v2932, 3
      %v2935 = vor.u32 %v2931, %v2934
      %v2936 = vsel %vm2892, %v2926, %v2935
      %v2938 = vshrl.u32 %v2565, 16
      %v2940 = vrot.slane %v2938, 2
      %v2941 = vshll.u32 %v2565, 16
      %v2943 = vrot.slane %v2941, 3
      %v2944 = vor.u32 %v2940, %v2943
      %v2945 = vsel %vm2892, %v2935, %v2944
      %v2947 = vshrl.u32 %v2566, 16
      %v2949 = vrot.slane %v2947, 2
      %v2950 = vshll.u32 %v2566, 16
      %v2952 = vrot.slane %v2950, 3
      %v2953 = vor.u32 %v2949, %v2952
      %v2954 = vsel %vm2892, %v2944, %v2953
      %v2956 = vshrl.u32 %v2567, 16
      %v2958 = vrot.slane %v2956, 2
      %v2959 = vshll.u32 %v2567, 16
      %v2961 = vrot.slane %v2959, 3
      %v2962 = vor.u32 %v2958, %v2961
      %v2963 = vsel %vm2892, %v2953, %v2962
      %v2965 = vshrl.u32 %v2568, 16
      %v2967 = vrot.slane %v2965, 2
      %v2968 = vshll.u32 %v2568, 16
      %v2970 = vrot.slane %v2968, 3
      %v2971 = vor.u32 %v2967, %v2970
      %v2972 = vsel %vm2892, %v2962, %v2971
      %v2974 = vshrl.u32 %v2569, 16
      %v2976 = vrot.slane %v2974, 2
      %v2977 = vshll.u32 %v2569, 16
      %v2979 = vrot.slane %v2977, 3
      %v2980 = vor.u32 %v2976, %v2979
      %v2981 = vsel %vm2892, %v2971, %v2980
      %v2983 = vshrl.u32 %v2570, 16
      %v2985 = vrot.slane %v2983, 2
      %v2986 = vshll.u32 %v2570, 16
      %v2988 = vrot.slane %v2986, 3
      %v2989 = vor.u32 %v2985, %v2988
      %v2990 = vsel %vm2892, %v2980, %v2989
      %v2992 = vshrl.u32 %v2571, 16
      %v2994 = vrot.slane %v2992, 2
      %v2995 = vshll.u32 %v2571, 16
      %v2997 = vrot.slane %v2995, 3
      %v2998 = vor.u32 %v2994, %v2997
      %v2999 = vsel %vm2892, %v2989, %v2998
      %v3001 = vshrl.u32 %v2572, 16
      %v3003 = vrot.slane %v3001, 2
      %v3004 = vshll.u32 %v2572, 16
      %v3006 = vrot.slane %v3004, 3
      %v3007 = vor.u32 %v3003, %v3006
      %v3008 = vsel %vm2892, %v2998, %v3007
      %v3010 = vshrl.u32 %v2573, 16
      %v3012 = vrot.slane %v3010, 2
      %v3013 = vshll.u32 %v2573, 16
      %v3015 = vrot.slane %v3013, 3
      %v3016 = vor.u32 %v3012, %v3015
      %v3017 = vsel %vm2892, %v3007, %v3016
      %v3019 = vshrl.u32 %v2574, 16
      %v3021 = vrot.slane %v3019, 2
      %v3022 = vshll.u32 %v2574, 16
      %v3024 = vrot.slane %v3022, 3
      %v3025 = vor.u32 %v3021, %v3024
      %v3026 = vsel %vm2892, %v3016, %v3025
      %v3028 = vshrl.u32 %v2575, 16
      %v3030 = vrot.slane %v3028, 2
      %v3031 = vshll.u32 %v2575, 16
      %v3033 = vrot.slane %v3031, 3
      %v3034 = vor.u32 %v3030, %v3033
      %v3035 = vsel %vm2892, %v3025, %v3034
      %v3037 = vshrl.u32 %v2576, 16
      %v3039 = vrot.slane %v3037, 2
      %v3040 = vshll.u32 %v2576, 16
      %v3042 = vrot.slane %v3040, 3
      %v3043 = vor.u32 %v3039, %v3042
      %v3044 = vsel %vm2892, %v3034, %v3043
      %v3046 = vshrl.u32 %v2577, 16
      %v3048 = vrot.slane %v3046, 2
      %v3049 = vshll.u32 %v2577, 16
      %v3051 = vrot.slane %v3049, 3
      %v3052 = vor.u32 %v3048, %v3051
      %v3053 = vsel %vm2892, %v3043, %v3052
      %v3055 = vshrl.u32 %v2891, 16
      %v3057 = vrot.slane %v3055, 2
      %v3058 = vshll.u32 %v2891, 16
      %v3060 = vrot.slane %v3058, 3
      %v3061 = vor.u32 %v3057, %v3060
      %v3062 = vsel %vm2892, %v3052, %v3061
      %v3064 = vsel %vm481, %v2909, 0
      %v3067 = vsel %vm481, %v2918, 0
      %v3070 = vsel %vm481, %v2927, 0
      %v3073 = vsel %vm481, %v2936, 0
      %v3076 = vsel %vm481, %v2945, 0
      %v3079 = vsel %vm481, %v2954, 0
      %v3082 = vsel %vm481, %v2963, 0
      %v3085 = vsel %vm481, %v2972, 0
      %v3088 = vsel %vm481, %v2981, 0
      %v3091 = vsel %vm481, %v2990, 0
      %v3094 = vsel %vm481, %v2999, 0
      %v3097 = vsel %vm481, %v3008, 0
      %v3100 = vsel %vm481, %v3017, 0
      %v3103 = vsel %vm481, %v3026, 0
      %v3106 = vsel %vm481, %v3035, 0
      %v3109 = vsel %vm481, %v3044, 0
      %v3112 = vsel %vm481, %v3053, 0
      %v3115 = vsel %vm481, %v3062, 0
      %v3118 = vsel %vm536, %v2888, 0
      %3120 = vmatprep.subr.bf16.mxu0 0
      %3121 = vmatpush1.bf16.msra.mxu0 %v3118
      %3122 = vmatprep.subr.bf16.mxu0 0
      %3123 = vmatpush1.bf16.msra.mxu0 0
      %3124 = vmatprep.subr.bf16.mxu0 0
      %3125 = vmatpush1.bf16.msra.mxu0 0
      %3126 = vmatprep.subr.bf16.mxu0 0
      %3127 = vmatpush1.bf16.msra.mxu0 0
      %3128 = vmatprep.subr.bf16.mxu0 0
      %3129 = vmatpush1.bf16.msra.mxu0 0
      %3130 = vmatprep.subr.bf16.mxu0 0
      %3131 = vmatpush1.bf16.msra.mxu0 0
      %3132 = vmatprep.subr.bf16.mxu0 0
      %3133 = vmatpush1.bf16.msra.mxu0 0
      %3134 = vmatprep.subr.bf16.mxu0 0
      %3135 = vmatpush1.bf16.msra.mxu0 0
      %3136 = vmatprep.subr.bf16.mxu0 0
      %3137 = vmatpush1.bf16.msra.mxu0 0
      %3138 = vmatprep.subr.bf16.mxu0 0
      %3139 = vmatpush1.bf16.msra.mxu0 0
      %3140 = vmatprep.subr.bf16.mxu0 0
      %3141 = vmatpush1.bf16.msra.mxu0 0
      %3142 = vmatprep.subr.bf16.mxu0 0
      %3143 = vmatpush1.bf16.msra.mxu0 0
      %3144 = vmatprep.subr.bf16.mxu0 0
      %3145 = vmatpush1.bf16.msra.mxu0 0
      %3146 = vmatprep.subr.bf16.mxu0 0
      %3147 = vmatpush1.bf16.msra.mxu0 0
      %3148 = vmatprep.subr.bf16.mxu0 0
      %3149 = vmatpush1.bf16.msra.mxu0 0
      %3150 = vmatprep.subr.bf16.mxu0 0
      %3151 = vmatpush1.bf16.msra.mxu0 0
      %3152 = vmatprep.mubr.bf16.mxu0 0
      %3153 = vmatmul.mubr.bf16.gmra.mrb[0].mxu0 %v3064
      %v3154 = vpop.f32.mrb[0].mxu0
      %v3155 = vadd.f32 0.0, %v3154
      %v3156 = vpop.f32.mrb[0].mxu0
      %v3157 = vpop.f32.mrb[0].mxu0
      %v3158 = vadd.f32 0.0, %v3157
      %v3159 = vpop.f32.mrb[0].mxu0
      %3160 = vmatprep.mubr.bf16.mxu0 0
      %3161 = vmatmul.mubr.bf16.gmra.mrb[0].mxu0 %v3067
      %v3162 = vpop.f32.mrb[0].mxu0
      %v3163 = vadd.f32 0.0, %v3162
      %v3164 = vpop.f32.mrb[0].mxu0
      %v3165 = vpop.f32.mrb[0].mxu0
      %v3166 = vadd.f32 0.0, %v3165
      %v3167 = vpop.f32.mrb[0].mxu0
      %3168 = vmatprep.mubr.bf16.mxu0 0
      %3169 = vmatmul.mubr.bf16.gmra.mrb[0].mxu0 %v3070
      %v3170 = vpop.f32.mrb[0].mxu0
      %v3171 = vadd.f32 0.0, %v3170
      %v3172 = vpop.f32.mrb[0].mxu0
      %v3173 = vpop.f32.mrb[0].mxu0
      %v3174 = vadd.f32 0.0, %v3173
      %v3175 = vpop.f32.mrb[0].mxu0
      %3176 = vmatprep.mubr.bf16.mxu0 0
      %3177 = vmatmul.mubr.bf16.gmra.mrb[0].mxu0 %v3073
      %v3178 = vpop.f32.mrb[0].mxu0
      %v3179 = vadd.f32 0.0, %v3178
      %v3180 = vpop.f32.mrb[0].mxu0
      %v3181 = vpop.f32.mrb[0].mxu0
      %v3182 = vadd.f32 0.0, %v3181
      %v3183 = vpop.f32.mrb[0].mxu0
      %3184 = vmatprep.mubr.bf16.mxu0 0
      %3185 = vmatmul.mubr.bf16.gmra.mrb[0].mxu0 %v3076
      %v3186 = vpop.f32.mrb[0].mxu0
      %v3187 = vadd.f32 0.0, %v3186
      %v3188 = vpop.f32.mrb[0].mxu0
      %v3189 = vpop.f32.mrb[0].mxu0
      %v3190 = vadd.f32 0.0, %v3189
      %v3191 = vpop.f32.mrb[0].mxu0
      %3192 = vmatprep.mubr.bf16.mxu0 0
      %3193 = vmatmul.mubr.bf16.gmra.mrb[0].mxu0 %v3079
      %v3194 = vpop.f32.mrb[0].mxu0
      %v3195 = vadd.f32 0.0, %v3194
      %v3196 = vpop.f32.mrb[0].mxu0
      %v3197 = vpop.f32.mrb[0].mxu0
      %v3198 = vadd.f32 0.0, %v3197
      %v3199 = vpop.f32.mrb[0].mxu0
      %3200 = vmatprep.mubr.bf16.mxu0 0
      %3201 = vmatmul.mubr.bf16.gmra.mrb[0].mxu0 %v3082
      %v3202 = vpop.f32.mrb[0].mxu0
      %v3203 = vadd.f32 0.0, %v3202
      %v3204 = vpop.f32.mrb[0].mxu0
      %v3205 = vpop.f32.mrb[0].mxu0
      %v3206 = vadd.f32 0.0, %v3205
      %v3207 = vpop.f32.mrb[0].mxu0
      %3208 = vmatprep.mubr.bf16.mxu0 0
      %3209 = vmatmul.mubr.bf16.gmra.mrb[0].mxu0 %v3085
      %v3210 = vpop.f32.mrb[0].mxu0
      %v3211 = vadd.f32 0.0, %v3210
      %v3212 = vpop.f32.mrb[0].mxu0
      %v3213 = vpop.f32.mrb[0].mxu0
      %v3214 = vadd.f32 0.0, %v3213
      %v3215 = vpop.f32.mrb[0].mxu0
      %3216 = vmatprep.mubr.bf16.mxu0 0
      %3217 = vmatmul.mubr.bf16.gmra.mrb[0].mxu0 %v3088
      %v3218 = vpop.f32.mrb[0].mxu0
      %v3219 = vadd.f32 0.0, %v3218
      %v3220 = vpop.f32.mrb[0].mxu0
      %v3221 = vpop.f32.mrb[0].mxu0
      %v3222 = vadd.f32 0.0, %v3221
      %v3223 = vpop.f32.mrb[0].mxu0
      %3224 = vmatprep.mubr.bf16.mxu0 0
      %3225 = vmatmul.mubr.bf16.gmra.mrb[0].mxu0 %v3091
      %v3226 = vpop.f32.mrb[0].mxu0
      %v3227 = vadd.f32 0.0, %v3226
      %v3228 = vpop.f32.mrb[0].mxu0
      %v3229 = vpop.f32.mrb[0].mxu0
      %v3230 = vadd.f32 0.0, %v3229
      %v3231 = vpop.f32.mrb[0].mxu0
      %3232 = vmatprep.mubr.bf16.mxu0 0
      %3233 = vmatmul.mubr.bf16.gmra.mrb[0].mxu0 %v3094
      %v3234 = vpop.f32.mrb[0].mxu0
      %v3235 = vadd.f32 0.0, %v3234
      %v3236 = vpop.f32.mrb[0].mxu0
      %v3237 = vpop.f32.mrb[0].mxu0
      %v3238 = vadd.f32 0.0, %v3237
      %v3239 = vpop.f32.mrb[0].mxu0
      %3240 = vmatprep.mubr.bf16.mxu0 0
      %3241 = vmatmul.mubr.bf16.gmra.mrb[0].mxu0 %v3097
      %v3242 = vpop.f32.mrb[0].mxu0
      %v3243 = vadd.f32 0.0, %v3242
      %v3244 = vpop.f32.mrb[0].mxu0
      %v3245 = vpop.f32.mrb[0].mxu0
      %v3246 = vadd.f32 0.0, %v3245
      %v3247 = vpop.f32.mrb[0].mxu0
      %3248 = vmatprep.mubr.bf16.mxu0 0
      %3249 = vmatmul.mubr.bf16.gmra.mrb[0].mxu0 %v3100
      %v3250 = vpop.f32.mrb[0].mxu0
      %v3251 = vadd.f32 0.0, %v3250
      %v3252 = vpop.f32.mrb[0].mxu0
      %v3253 = vpop.f32.mrb[0].mxu0
      %v3254 = vadd.f32 0.0, %v3253
      %v3255 = vpop.f32.mrb[0].mxu0
      %3256 = vmatprep.mubr.bf16.mxu0 0
      %3257 = vmatmul.mubr.bf16.gmra.mrb[0].mxu0 %v3103
      %v3258 = vpop.f32.mrb[0].mxu0
      %v3259 = vadd.f32 0.0, %v3258
      %v3260 = vpop.f32.mrb[0].mxu0
      %v3261 = vpop.f32.mrb[0].mxu0
      %v3262 = vadd.f32 0.0, %v3261
      %v3263 = vpop.f32.mrb[0].mxu0
      %3264 = vmatprep.mubr.bf16.mxu0 0
      %3265 = vmatmul.mubr.bf16.gmra.mrb[0].mxu0 %v3106
      %v3266 = vpop.f32.mrb[0].mxu0
      %v3267 = vadd.f32 0.0, %v3266
      %v3268 = vpop.f32.mrb[0].mxu0
      %v3269 = vpop.f32.mrb[0].mxu0
      %v3270 = vadd.f32 0.0, %v3269
      %v3271 = vpop.f32.mrb[0].mxu0
      %3272 = vmatprep.mubr.bf16.mxu0 0
      %3273 = vmatmul.mubr.bf16.gmra.mrb[0].mxu0 %v3109
      %v3274 = vpop.f32.mrb[0].mxu0
      %v3275 = vadd.f32 0.0, %v3274
      %v3276 = vpop.f32.mrb[0].mxu0
      %v3277 = vpop.f32.mrb[0].mxu0
      %v3278 = vadd.f32 0.0, %v3277
      %v3279 = vpop.f32.mrb[0].mxu0
      %3280 = vmatprep.mubr.bf16.mxu0 0
      %3281 = vmatmul.mubr.bf16.gmra.mrb[0].mxu0 %v3112
      %v3282 = vpop.f32.mrb[0].mxu0
      %v3283 = vadd.f32 0.0, %v3282
      %v3284 = vpop.f32.mrb[0].mxu0
      %v3285 = vpop.f32.mrb[0].mxu0
      %v3286 = vadd.f32 0.0, %v3285
      %v3287 = vpop.f32.mrb[0].mxu0
      %3288 = vmatprep.mubr.bf16.mxu0 0
      %3289 = vmatmul.mubr.bf16.gmra.mrb[0].mxu0 %v3115
      %v3290 = vpop.f32.mrb[0].mxu0
      %v3291 = vadd.f32 0.0, %v3290
      %v3292 = vpop.f32.mrb[0].mxu0
      %v3293 = vpop.f32.mrb[0].mxu0
      %v3294 = vadd.f32 0.0, %v3293
      %v3295 = vpop.f32.mrb[0].mxu0
      %3296 = vdwg.mxu0
      %v3297 = vadd.f32 %v2850, %v3155
      %v3298 = vadd.f32 %v2851, %v3158
      %v3299 = vadd.f32 %v2852, %v3163
      %v3300 = vadd.f32 %v2853, %v3166
      %v3301 = vadd.f32 %v2854, %v3171
      %v3302 = vadd.f32 %v2855, %v3174
      %v3303 = vadd.f32 %v2856, %v3179
      %v3304 = vadd.f32 %v2857, %v3182
      %v3305 = vadd.f32 %v2858, %v3187
      %v3306 = vadd.f32 %v2859, %v3190
      %v3307 = vadd.f32 %v2860, %v3195
      %v3308 = vadd.f32 %v2861, %v3198
      %v3309 = vadd.f32 %v2862, %v3203
      %v3310 = vadd.f32 %v2863, %v3206
      %v3311 = vadd.f32 %v2864, %v3211
      %v3312 = vadd.f32 %v2865, %v3214
      %v3313 = vadd.f32 %v2866, %v3219
      %v3314 = vadd.f32 %v2867, %v3222
      %v3315 = vadd.f32 %v2868, %v3227
      %v3316 = vadd.f32 %v2869, %v3230
      %v3317 = vadd.f32 %v2870, %v3235
      %v3318 = vadd.f32 %v2871, %v3238
      %v3319 = vadd.f32 %v2872, %v3243
      %v3320 = vadd.f32 %v2873, %v3246
      %v3321 = vadd.f32 %v2874, %v3251
      %v3322 = vadd.f32 %v2875, %v3254
      %v3323 = vadd.f32 %v2876, %v3259
      %v3324 = vadd.f32 %v2877, %v3262
      %v3325 = vadd.f32 %v2878, %v3267
      %v3326 = vadd.f32 %v2879, %v3270
      %v3327 = vadd.f32 %v2880, %v3275
      %v3328 = vadd.f32 %v2881, %v3278
      %v3329 = vadd.f32 %v2882, %v3283
      %v3330 = vadd.f32 %v2883, %v3286
      %v3331 = vadd.f32 %v2884, %v3291
      %v3332 = vadd.f32 %v2885, %v3294
      %v3333 = vld [vmem:[%s192 + $0x10] sm:$0x8]
      %s3334 = scalar_lea.vmem %s1, 32
      %v3335 = vld [vmem:[%s3334] sm:$0xf]
      %v3337 = vunpack.c.l.b16 %v3333
      %v3338 = vpack.c.b16 %v2524, %v3337
      %vm3339 = vcmask 1044480
      %v3340 = vrot.slane %v3338, 3
      %v3341 = vrot.slane %v2561, 3
      %v3342 = vsel %vm3339, %v3340, %v3341
      %v3343 = vrot.slane %v2562, 3
      %v3344 = vsel %vm3339, %v3341, %v3343
      %v3345 = vrot.slane %v2563, 3
      %v3346 = vsel %vm3339, %v3343, %v3345
      %v3347 = vrot.slane %v2564, 3
      %v3348 = vsel %vm3339, %v3345, %v3347
      %v3349 = vrot.slane %v2565, 3
      %v3350 = vsel %vm3339, %v3347, %v3349
      %v3351 = vrot.slane %v2566, 3
      %v3352 = vsel %vm3339, %v3349, %v3351
      %v3353 = vrot.slane %v2567, 3
      %v3354 = vsel %vm3339, %v3351, %v3353
      %v3355 = vrot.slane %v2568, 3
      %v3356 = vsel %vm3339, %v3353, %v3355
      %v3357 = vrot.slane %v2569, 3
      %v3358 = vsel %vm3339, %v3355, %v3357
      %v3359 = vrot.slane %v2570, 3
      %v3360 = vsel %vm3339, %v3357, %v3359
      %v3361 = vrot.slane %v2571, 3
      %v3362 = vsel %vm3339, %v3359, %v3361
      %v3363 = vrot.slane %v2572, 3
      %v3364 = vsel %vm3339, %v3361, %v3363
      %v3365 = vrot.slane %v2573, 3
      %v3366 = vsel %vm3339, %v3363, %v3365
      %v3367 = vrot.slane %v2574, 3
      %v3368 = vsel %vm3339, %v3365, %v3367
      %v3369 = vrot.slane %v2575, 3
      %v3370 = vsel %vm3339, %v3367, %v3369
      %v3371 = vrot.slane %v2576, 3
      %v3372 = vsel %vm3339, %v3369, %v3371
      %v3373 = vrot.slane %v2577, 3
      %v3374 = vsel %vm3339, %v3371, %v3373
      %v3375 = vrot.slane %v2891, 3
      %v3376 = vsel %vm3339, %v3373, %v3375
      %v3378 = vsel %vm481, %v3342, 0
      %v3381 = vsel %vm481, %v3344, 0
      %v3384 = vsel %vm481, %v3346, 0
      %v3387 = vsel %vm481, %v3348, 0
      %v3390 = vsel %vm481, %v3350, 0
      %v3393 = vsel %vm481, %v3352, 0
      %v3396 = vsel %vm481, %v3354, 0
      %v3399 = vsel %vm481, %v3356, 0
      %v3402 = vsel %vm481, %v3358, 0
      %v3405 = vsel %vm481, %v3360, 0
      %v3408 = vsel %vm481, %v3362, 0
      %v3411 = vsel %vm481, %v3364, 0
      %v3414 = vsel %vm481, %v3366, 0
      %v3417 = vsel %vm481, %v3368, 0
      %v3420 = vsel %vm481, %v3370, 0
      %v3423 = vsel %vm481, %v3372, 0
      %v3426 = vsel %vm481, %v3374, 0
      %v3429 = vsel %vm481, %v3376, 0
      %v3432 = vsel %vm536, %v3335, 0
      %3434 = vmatprep.subr.bf16.mxu0 0
      %3435 = vmatpush1.bf16.msra.mxu0 %v3432
      %3436 = vmatprep.subr.bf16.mxu0 0
      %3437 = vmatpush1.bf16.msra.mxu0 0
      %3438 = vmatprep.subr.bf16.mxu0 0
      %3439 = vmatpush1.bf16.msra.mxu0 0
      %3440 = vmatprep.subr.bf16.mxu0 0
      %3441 = vmatpush1.bf16.msra.mxu0 0
      %3442 = vmatprep.subr.bf16.mxu0 0
      %3443 = vmatpush1.bf16.msra.mxu0 0
      %3444 = vmatprep.subr.bf16.mxu0 0
      %3445 = vmatpush1.bf16.msra.mxu0 0
      %3446 = vmatprep.subr.bf16.mxu0 0
      %3447 = vmatpush1.bf16.msra.mxu0 0
      %3448 = vmatprep.subr.bf16.mxu0 0
      %3449 = vmatpush1.bf16.msra.mxu0 0
      %3450 = vmatprep.subr.bf16.mxu0 0
      %3451 = vmatpush1.bf16.msra.mxu0 0
      %3452 = vmatprep.subr.bf16.mxu0 0
      %3453 = vmatpush1.bf16.msra.mxu0 0
      %3454 = vmatprep.subr.bf16.mxu0 0
      %3455 = vmatpush1.bf16.msra.mxu0 0
      %3456 = vmatprep.subr.bf16.mxu0 0
      %3457 = vmatpush1.bf16.msra.mxu0 0
      %3458 = vmatprep.subr.bf16.mxu0 0
      %3459 = vmatpush1.bf16.msra.mxu0 0
      %3460 = vmatprep.subr.bf16.mxu0 0
      %3461 = vmatpush1.bf16.msra.mxu0 0
      %3462 = vmatprep.subr.bf16.mxu0 0
      %3463 = vmatpush1.bf16.msra.mxu0 0
      %3464 = vmatprep.subr.bf16.mxu0 0
      %3465 = vmatpush1.bf16.msra.mxu0 0
      %3466 = vmatprep.mubr.bf16.mxu0 0
      %3467 = vmatmul.mubr.bf16.gmra.mrb[0].mxu0 %v3378
      %v3468 = vpop.f32.mrb[0].mxu0
      %v3469 = vadd.f32 0.0, %v3468
      %v3470 = vpop.f32.mrb[0].mxu0
      %v3471 = vpop.f32.mrb[0].mxu0
      %v3472 = vadd.f32 0.0, %v3471
      %v3473 = vpop.f32.mrb[0].mxu0
      %3474 = vmatprep.mubr.bf16.mxu0 0
      %3475 = vmatmul.mubr.bf16.gmra.mrb[0].mxu0 %v3381
      %v3476 = vpop.f32.mrb[0].mxu0
      %v3477 = vadd.f32 0.0, %v3476
      %v3478 = vpop.f32.mrb[0].mxu0
      %v3479 = vpop.f32.mrb[0].mxu0
      %v3480 = vadd.f32 0.0, %v3479
      %v3481 = vpop.f32.mrb[0].mxu0
      %3482 = vmatprep.mubr.bf16.mxu0 0
      %3483 = vmatmul.mubr.bf16.gmra.mrb[0].mxu0 %v3384
      %v3484 = vpop.f32.mrb[0].mxu0
      %v3485 = vadd.f32 0.0, %v3484
      %v3486 = vpop.f32.mrb[0].mxu0
      %v3487 = vpop.f32.mrb[0].mxu0
      %v3488 = vadd.f32 0.0, %v3487
      %v3489 = vpop.f32.mrb[0].mxu0
      %3490 = vmatprep.mubr.bf16.mxu0 0
      %3491 = vmatmul.mubr.bf16.gmra.mrb[0].mxu0 %v3387
      %v3492 = vpop.f32.mrb[0].mxu0
      %v3493 = vadd.f32 0.0, %v3492
      %v3494 = vpop.f32.mrb[0].mxu0
      %v3495 = vpop.f32.mrb[0].mxu0
      %v3496 = vadd.f32 0.0, %v3495
      %v3497 = vpop.f32.mrb[0].mxu0
      %3498 = vmatprep.mubr.bf16.mxu0 0
      %3499 = vmatmul.mubr.bf16.gmra.mrb[0].mxu0 %v3390
      %v3500 = vpop.f32.mrb[0].mxu0
      %v3501 = vadd.f32 0.0, %v3500
      %v3502 = vpop.f32.mrb[0].mxu0
      %v3503 = vpop.f32.mrb[0].mxu0
      %v3504 = vadd.f32 0.0, %v3503
      %v3505 = vpop.f32.mrb[0].mxu0
      %3506 = vmatprep.mubr.bf16.mxu0 0
      %3507 = vmatmul.mubr.bf16.gmra.mrb[0].mxu0 %v3393
      %v3508 = vpop.f32.mrb[0].mxu0
      %v3509 = vadd.f32 0.0, %v3508
      %v3510 = vpop.f32.mrb[0].mxu0
      %v3511 = vpop.f32.mrb[0].mxu0
      %v3512 = vadd.f32 0.0, %v3511
      %v3513 = vpop.f32.mrb[0].mxu0
      %3514 = vmatprep.mubr.bf16.mxu0 0
      %3515 = vmatmul.mubr.bf16.gmra.mrb[0].mxu0 %v3396
      %v3516 = vpop.f32.mrb[0].mxu0
      %v3517 = vadd.f32 0.0, %v3516
      %v3518 = vpop.f32.mrb[0].mxu0
      %v3519 = vpop.f32.mrb[0].mxu0
      %v3520 = vadd.f32 0.0, %v3519
      %v3521 = vpop.f32.mrb[0].mxu0
      %3522 = vmatprep.mubr.bf16.mxu0 0
      %3523 = vmatmul.mubr.bf16.gmra.mrb[0].mxu0 %v3399
      %v3524 = vpop.f32.mrb[0].mxu0
      %v3525 = vadd.f32 0.0, %v3524
      %v3526 = vpop.f32.mrb[0].mxu0
      %v3527 = vpop.f32.mrb[0].mxu0
      %v3528 = vadd.f32 0.0, %v3527
      %v3529 = vpop.f32.mrb[0].mxu0
      %3530 = vmatprep.mubr.bf16.mxu0 0
      %3531 = vmatmul.mubr.bf16.gmra.mrb[0].mxu0 %v3402
      %v3532 = vpop.f32.mrb[0].mxu0
      %v3533 = vadd.f32 0.0, %v3532
      %v3534 = vpop.f32.mrb[0].mxu0
      %v3535 = vpop.f32.mrb[0].mxu0
      %v3536 = vadd.f32 0.0, %v3535
      %v3537 = vpop.f32.mrb[0].mxu0
      %3538 = vmatprep.mubr.bf16.mxu0 0
      %3539 = vmatmul.mubr.bf16.gmra.mrb[0].mxu0 %v3405
      %v3540 = vpop.f32.mrb[0].mxu0
      %v3541 = vadd.f32 0.0, %v3540
      %v3542 = vpop.f32.mrb[0].mxu0
      %v3543 = vpop.f32.mrb[0].mxu0
      %v3544 = vadd.f32 0.0, %v3543
      %v3545 = vpop.f32.mrb[0].mxu0
      %3546 = vmatprep.mubr.bf16.mxu0 0
      %3547 = vmatmul.mubr.bf16.gmra.mrb[0].mxu0 %v3408
      %v3548 = vpop.f32.mrb[0].mxu0
      %v3549 = vadd.f32 0.0, %v3548
      %v3550 = vpop.f32.mrb[0].mxu0
      %v3551 = vpop.f32.mrb[0].mxu0
      %v3552 = vadd.f32 0.0, %v3551
      %v3553 = vpop.f32.mrb[0].mxu0
      %3554 = vmatprep.mubr.bf16.mxu0 0
      %3555 = vmatmul.mubr.bf16.gmra.mrb[0].mxu0 %v3411
      %v3556 = vpop.f32.mrb[0].mxu0
      %v3557 = vadd.f32 0.0, %v3556
      %v3558 = vpop.f32.mrb[0].mxu0
      %v3559 = vpop.f32.mrb[0].mxu0
      %v3560 = vadd.f32 0.0, %v3559
      %v3561 = vpop.f32.mrb[0].mxu0
      %3562 = vmatprep.mubr.bf16.mxu0 0
      %3563 = vmatmul.mubr.bf16.gmra.mrb[0].mxu0 %v3414
      %v3564 = vpop.f32.mrb[0].mxu0
      %v3565 = vadd.f32 0.0, %v3564
      %v3566 = vpop.f32.mrb[0].mxu0
      %v3567 = vpop.f32.mrb[0].mxu0
      %v3568 = vadd.f32 0.0, %v3567
      %v3569 = vpop.f32.mrb[0].mxu0
      %3570 = vmatprep.mubr.bf16.mxu0 0
      %3571 = vmatmul.mubr.bf16.gmra.mrb[0].mxu0 %v3417
      %v3572 = vpop.f32.mrb[0].mxu0
      %v3573 = vadd.f32 0.0, %v3572
      %v3574 = vpop.f32.mrb[0].mxu0
      %v3575 = vpop.f32.mrb[0].mxu0
      %v3576 = vadd.f32 0.0, %v3575
      %v3577 = vpop.f32.mrb[0].mxu0
      %3578 = vmatprep.mubr.bf16.mxu0 0
      %3579 = vmatmul.mubr.bf16.gmra.mrb[0].mxu0 %v3420
      %v3580 = vpop.f32.mrb[0].mxu0
      %v3581 = vadd.f32 0.0, %v3580
      %v3582 = vpop.f32.mrb[0].mxu0
      %v3583 = vpop.f32.mrb[0].mxu0
      %v3584 = vadd.f32 0.0, %v3583
      %v3585 = vpop.f32.mrb[0].mxu0
      %3586 = vmatprep.mubr.bf16.mxu0 0
      %3587 = vmatmul.mubr.bf16.gmra.mrb[0].mxu0 %v3423
      %v3588 = vpop.f32.mrb[0].mxu0
      %v3589 = vadd.f32 0.0, %v3588
      %v3590 = vpop.f32.mrb[0].mxu0
      %v3591 = vpop.f32.mrb[0].mxu0
      %v3592 = vadd.f32 0.0, %v3591
      %v3593 = vpop.f32.mrb[0].mxu0
      %3594 = vmatprep.mubr.bf16.mxu0 0
      %3595 = vmatmul.mubr.bf16.gmra.mrb[0].mxu0 %v3426
      %v3596 = vpop.f32.mrb[0].mxu0
      %v3597 = vadd.f32 0.0, %v3596
      %v3598 = vpop.f32.mrb[0].mxu0
      %v3599 = vpop.f32.mrb[0].mxu0
      %v3600 = vadd.f32 0.0, %v3599
      %v3601 = vpop.f32.mrb[0].mxu0
      %3602 = vmatprep.mubr.bf16.mxu0 0
      %3603 = vmatmul.mubr.bf16.gmra.mrb[0].mxu0 %v3429
      %v3604 = vpop.f32.mrb[0].mxu0
      %v3605 = vadd.f32 0.0, %v3604
      %v3606 = vpop.f32.mrb[0].mxu0
      %v3607 = vpop.f32.mrb[0].mxu0
      %v3608 = vadd.f32 0.0, %v3607
      %v3609 = vpop.f32.mrb[0].mxu0
      %3610 = vdwg.mxu0
      %v3611 = vadd.f32 %v3297, %v3469
      %v3612 = vadd.f32 %v3298, %v3472
      %v3613 = vadd.f32 %v3299, %v3477
      %v3614 = vadd.f32 %v3300, %v3480
      %v3615 = vadd.f32 %v3301, %v3485
      %v3616 = vadd.f32 %v3302, %v3488
      %v3617 = vadd.f32 %v3303, %v3493
      %v3618 = vadd.f32 %v3304, %v3496
      %v3619 = vadd.f32 %v3305, %v3501
      %v3620 = vadd.f32 %v3306, %v3504
      %v3621 = vadd.f32 %v3307, %v3509
      %v3622 = vadd.f32 %v3308, %v3512
      %v3623 = vadd.f32 %v3309, %v3517
      %v3624 = vadd.f32 %v3310, %v3520
      %v3625 = vadd.f32 %v3311, %v3525
      %v3626 = vadd.f32 %v3312, %v3528
      %v3627 = vadd.f32 %v3313, %v3533
      %v3628 = vadd.f32 %v3314, %v3536
      %v3629 = vadd.f32 %v3315, %v3541
      %v3630 = vadd.f32 %v3316, %v3544
      %v3631 = vadd.f32 %v3317, %v3549
      %v3632 = vadd.f32 %v3318, %v3552
      %v3633 = vadd.f32 %v3319, %v3557
      %v3634 = vadd.f32 %v3320, %v3560
      %v3635 = vadd.f32 %v3321, %v3565
      %v3636 = vadd.f32 %v3322, %v3568
      %v3637 = vadd.f32 %v3323, %v3573
      %v3638 = vadd.f32 %v3324, %v3576
      %v3639 = vadd.f32 %v3325, %v3581
      %v3640 = vadd.f32 %v3326, %v3584
      %v3641 = vadd.f32 %v3327, %v3589
      %v3642 = vadd.f32 %v3328, %v3592
      %v3643 = vadd.f32 %v3329, %v3597
      %v3644 = vadd.f32 %v3330, %v3600
      %v3645 = vadd.f32 %v3331, %v3605
      %v3646 = vadd.f32 %v3332, %v3608
      %v3647 = vld [vmem:[%s2] sm:$0x1]
      %v3649 = vlaneseq
      %v3650 = vshrl.u32 %v3649, 7
      %v3651 = vsub.s32 0, %v3650
      %v3652 = vrot.slane %v3647, %v3651
      %v3654 = vmul.f32 %v3611, %v3652
      %v3655 = vmul.f32 %v3612, %v3652
      %v3656 = vmul.f32 %v3613, %v3652
      %v3657 = vmul.f32 %v3614, %v3652
      %v3658 = vmul.f32 %v3615, %v3652
      %v3659 = vmul.f32 %v3616, %v3652
      %v3660 = vmul.f32 %v3617, %v3652
      %v3661 = vmul.f32 %v3618, %v3652
      %v3662 = vmul.f32 %v3619, %v3652
      %v3663 = vmul.f32 %v3620, %v3652
      %v3664 = vmul.f32 %v3621, %v3652
      %v3665 = vmul.f32 %v3622, %v3652
      %v3666 = vmul.f32 %v3623, %v3652
      %v3667 = vmul.f32 %v3624, %v3652
      %v3668 = vmul.f32 %v3625, %v3652
      %v3669 = vmul.f32 %v3626, %v3652
      %v3670 = vmul.f32 %v3627, %v3652
      %v3671 = vmul.f32 %v3628, %v3652
      %v3672 = vmul.f32 %v3629, %v3652
      %v3673 = vmul.f32 %v3630, %v3652
      %v3674 = vmul.f32 %v3631, %v3652
      %v3675 = vmul.f32 %v3632, %v3652
      %v3676 = vmul.f32 %v3633, %v3652
      %v3677 = vmul.f32 %v3634, %v3652
      %v3678 = vmul.f32 %v3635, %v3652
      %v3679 = vmul.f32 %v3636, %v3652
      %v3680 = vmul.f32 %v3637, %v3652
      %v3681 = vmul.f32 %v3638, %v3652
      %v3682 = vmul.f32 %v3639, %v3652
      %v3683 = vmul.f32 %v3640, %v3652
      %v3684 = vmul.f32 %v3641, %v3652
      %v3685 = vmul.f32 %v3642, %v3652
      %v3686 = vmul.f32 %v3643, %v3652
      %v3687 = vmul.f32 %v3644, %v3652
      %v3688 = vmul.f32 %v3645, %v3652
      %v3689 = vmul.f32 %v3646, %v3652
      %v3690 = vld [vmem:[%s3] sm:$0x1]
      %v3692 = vlaneseq
      %v3693 = vshrl.u32 %v3692, 7
      %v3694 = vsub.s32 0, %v3693
      %v3695 = vrot.slane %v3690, %v3694
      %v3697 = vadd.f32 %v3654, %v3695
      %v3698 = vadd.f32 %v3655, %v3695
      %v3699 = vadd.f32 %v3656, %v3695
      %v3700 = vadd.f32 %v3657, %v3695
      %v3701 = vadd.f32 %v3658, %v3695
      %v3702 = vadd.f32 %v3659, %v3695
      %v3703 = vadd.f32 %v3660, %v3695
      %v3704 = vadd.f32 %v3661, %v3695
      %v3705 = vadd.f32 %v3662, %v3695
      %v3706 = vadd.f32 %v3663, %v3695
      %v3707 = vadd.f32 %v3664, %v3695
      %v3708 = vadd.f32 %v3665, %v3695
      %v3709 = vadd.f32 %v3666, %v3695
      %v3710 = vadd.f32 %v3667, %v3695
      %v3711 = vadd.f32 %v3668, %v3695
      %v3712 = vadd.f32 %v3669, %v3695
      %v3713 = vadd.f32 %v3670, %v3695
      %v3714 = vadd.f32 %v3671, %v3695
      %v3715 = vadd.f32 %v3672, %v3695
      %v3716 = vadd.f32 %v3673, %v3695
      %v3717 = vadd.f32 %v3674, %v3695
      %v3718 = vadd.f32 %v3675, %v3695
      %v3719 = vadd.f32 %v3676, %v3695
      %v3720 = vadd.f32 %v3677, %v3695
      %v3721 = vadd.f32 %v3678, %v3695
      %v3722 = vadd.f32 %v3679, %v3695
      %v3723 = vadd.f32 %v3680, %v3695
      %v3724 = vadd.f32 %v3681, %v3695
      %v3725 = vadd.f32 %v3682, %v3695
      %v3726 = vadd.f32 %v3683, %v3695
      %v3727 = vadd.f32 %v3684, %v3695
      %v3728 = vadd.f32 %v3685, %v3695
      %v3729 = vadd.f32 %v3686, %v3695
      %v3730 = vadd.f32 %v3687, %v3695
      %v3731 = vadd.f32 %v3688, %v3695
      %v3732 = vadd.f32 %v3689, %v3695
      %v3733 = vmax.f32 %v3697, 0.0
      %v3734 = vmax.f32 %v3698, 0.0
      %v3735 = vmax.f32 %v3699, 0.0
      %v3736 = vmax.f32 %v3700, 0.0
      %v3737 = vmax.f32 %v3701, 0.0
      %v3738 = vmax.f32 %v3702, 0.0
      %v3739 = vmax.f32 %v3703, 0.0
      %v3740 = vmax.f32 %v3704, 0.0
      %v3741 = vmax.f32 %v3705, 0.0
      %v3742 = vmax.f32 %v3706, 0.0
      %v3743 = vmax.f32 %v3707, 0.0
      %v3744 = vmax.f32 %v3708, 0.0
      %v3745 = vmax.f32 %v3709, 0.0
      %v3746 = vmax.f32 %v3710, 0.0
      %v3747 = vmax.f32 %v3711, 0.0
      %v3748 = vmax.f32 %v3712, 0.0
      %v3749 = vmax.f32 %v3713, 0.0
      %v3750 = vmax.f32 %v3714, 0.0
      %v3751 = vmax.f32 %v3715, 0.0
      %v3752 = vmax.f32 %v3716, 0.0
      %v3753 = vmax.f32 %v3717, 0.0
      %v3754 = vmax.f32 %v3718, 0.0
      %v3755 = vmax.f32 %v3719, 0.0
      %v3756 = vmax.f32 %v3720, 0.0
      %v3757 = vmax.f32 %v3721, 0.0
      %v3758 = vmax.f32 %v3722, 0.0
      %v3759 = vmax.f32 %v3723, 0.0
      %v3760 = vmax.f32 %v3724, 0.0
      %v3761 = vmax.f32 %v3725, 0.0
      %v3762 = vmax.f32 %v3726, 0.0
      %v3763 = vmax.f32 %v3727, 0.0
      %v3764 = vmax.f32 %v3728, 0.0
      %v3765 = vmax.f32 %v3729, 0.0
      %v3766 = vmax.f32 %v3730, 0.0
      %v3767 = vmax.f32 %v3731, 0.0
      %v3768 = vmax.f32 %v3732, 0.0
      %v3769 = vpack.c.bf16 %v3734, %v3733
      %v3770 = vpack.c.bf16 %v3736, %v3735
      %v3771 = vpack.c.bf16 %v3738, %v3737
      %v3772 = vpack.c.bf16 %v3740, %v3739
      %v3773 = vpack.c.bf16 %v3742, %v3741
      %v3774 = vpack.c.bf16 %v3744, %v3743
      %v3775 = vpack.c.bf16 %v3746, %v3745
      %v3776 = vpack.c.bf16 %v3748, %v3747
      %v3777 = vpack.c.bf16 %v3750, %v3749
      %v3778 = vpack.c.bf16 %v3752, %v3751
      %v3779 = vpack.c.bf16 %v3754, %v3753
      %v3780 = vpack.c.bf16 %v3756, %v3755
      %v3781 = vpack.c.bf16 %v3758, %v3757
      %v3782 = vpack.c.bf16 %v3760, %v3759
      %v3783 = vpack.c.bf16 %v3762, %v3761
      %v3784 = vpack.c.bf16 %v3764, %v3763
      %v3785 = vpack.c.bf16 %v3766, %v3765
      %v3786 = vpack.c.bf16 %v3768, %v3767
      %v3805 = vunpack.c.l.b16 %v3769
      %v3806 = vunpack.c.h.b16 %v3769
      %v3807 = vunpack.c.l.b16 %v3770
      %v3808 = vunpack.c.h.b16 %v3770
      %v3809 = vunpack.c.l.b16 %v3771
      %v3810 = vunpack.c.h.b16 %v3771
      %v3811 = vunpack.c.l.b16 %v3772
      %v3812 = vunpack.c.h.b16 %v3772
      %v3813 = vunpack.c.l.b16 %v3773
      %v3814 = vunpack.c.h.b16 %v3773
      %v3815 = vunpack.c.l.b16 %v3774
      %v3816 = vunpack.c.h.b16 %v3774
      %v3817 = vunpack.c.l.b16 %v3775
      %v3818 = vunpack.c.h.b16 %v3775
      %v3819 = vunpack.c.l.b16 %v3776
      %v3820 = vunpack.c.h.b16 %v3776
      %v3821 = vunpack.c.l.b16 %v3777
      %v3822 = vunpack.c.h.b16 %v3777
      %v3823 = vunpack.c.l.b16 %v3778
      %v3824 = vunpack.c.h.b16 %v3778
      %v3825 = vunpack.c.l.b16 %v3779
      %v3826 = vunpack.c.h.b16 %v3779
      %v3827 = vunpack.c.l.b16 %v3780
      %v3828 = vunpack.c.h.b16 %v3780
      %v3829 = vunpack.c.l.b16 %v3781
      %v3830 = vunpack.c.h.b16 %v3781
      %v3831 = vunpack.c.l.b16 %v3782
      %v3832 = vunpack.c.h.b16 %v3782
      %v3833 = vunpack.c.l.b16 %v3783
      %v3834 = vunpack.c.h.b16 %v3783
      %v3835 = vunpack.c.l.b16 %v3784
      %v3836 = vunpack.c.h.b16 %v3784
      %v3837 = vunpack.c.l.b16 %v3785
      %v3838 = vunpack.c.h.b16 %v3785
      %v3839 = vunpack.c.l.b16 %v3786
      %v3840 = vunpack.c.h.b16 %v3786
      %v3841 = vpack.c.b16 %v3805, %v3805
      %v3842 = vpack.c.b16 %v3806, %v3806
      %v3843 = vpack.c.b16 %v3807, %v3807
      %v3844 = vpack.c.b16 %v3808, %v3808
      %v3845 = vpack.c.b16 %v3809, %v3809
      %v3846 = vpack.c.b16 %v3810, %v3810
      %v3847 = vpack.c.b16 %v3811, %v3811
      %v3848 = vpack.c.b16 %v3812, %v3812
      %v3849 = vpack.c.b16 %v3813, %v3813
      %v3850 = vpack.c.b16 %v3814, %v3814
      %v3851 = vpack.c.b16 %v3815, %v3815
      %v3852 = vpack.c.b16 %v3816, %v3816
      %v3853 = vpack.c.b16 %v3817, %v3817
      %v3854 = vpack.c.b16 %v3818, %v3818
      %v3855 = vpack.c.b16 %v3819, %v3819
      %v3856 = vpack.c.b16 %v3820, %v3820
      %v3857 = vpack.c.b16 %v3821, %v3821
      %v3858 = vpack.c.b16 %v3822, %v3822
      %v3859 = vpack.c.b16 %v3823, %v3823
      %v3860 = vpack.c.b16 %v3824, %v3824
      %v3861 = vpack.c.b16 %v3825, %v3825
      %v3862 = vpack.c.b16 %v3826, %v3826
      %v3863 = vpack.c.b16 %v3827, %v3827
      %v3864 = vpack.c.b16 %v3828, %v3828
      %v3865 = vpack.c.b16 %v3829, %v3829
      %v3866 = vpack.c.b16 %v3830, %v3830
      %v3867 = vpack.c.b16 %v3831, %v3831
      %v3868 = vpack.c.b16 %v3832, %v3832
      %v3869 = vpack.c.b16 %v3833, %v3833
      %v3870 = vpack.c.b16 %v3834, %v3834
      %v3871 = vpack.c.b16 %v3835, %v3835
      %v3872 = vpack.c.b16 %v3836, %v3836
      %v3873 = vpack.c.b16 %v3837, %v3837
      %v3874 = vpack.c.b16 %v3838, %v3838
      %v3875 = vpack.c.b16 %v3839, %v3839
      %v3876 = vpack.c.b16 %v3840, %v3840
      %vm3913 = vcmask 125952
      %3914 = vst.msk [vmem:[%s197] sm:$0xf] %vm3913, %v3841
      %3915 = vst.msk [vmem:[%s197 + $0x4] sm:$0xf] %vm3913, %v3842
      %3916 = vst.msk [vmem:[%s197 + $0x8] sm:$0xf] %vm3913, %v3843
      %3917 = vst.msk [vmem:[%s197 + $0xc] sm:$0xf] %vm3913, %v3844
      %3918 = vst.msk [vmem:[%s197 + $0x10] sm:$0xf] %vm3913, %v3845
      %3919 = vst.msk [vmem:[%s197 + $0x14] sm:$0xf] %vm3913, %v3846
      %3920 = vst.msk [vmem:[%s197 + $0x18] sm:$0xf] %vm3913, %v3847
      %3921 = vst.msk [vmem:[%s197 + $0x1c] sm:$0xf] %vm3913, %v3848
      %3922 = vst.msk [vmem:[%s197 + $0x20] sm:$0xf] %vm3913, %v3849
      %3923 = vst.msk [vmem:[%s197 + $0x24] sm:$0xf] %vm3913, %v3850
      %3924 = vst.msk [vmem:[%s197 + $0x28] sm:$0xf] %vm3913, %v3851
      %3925 = vst.msk [vmem:[%s197 + $0x2c] sm:$0xf] %vm3913, %v3852
      %3926 = vst.msk [vmem:[%s197 + $0x30] sm:$0xf] %vm3913, %v3853
      %3927 = vst.msk [vmem:[%s197 + $0x34] sm:$0xf] %vm3913, %v3854
      %3928 = vst.msk [vmem:[%s197 + $0x38] sm:$0xf] %vm3913, %v3855
      %3929 = vst.msk [vmem:[%s197 + $0x3c] sm:$0xf] %vm3913, %v3856
      %3930 = vst.msk [vmem:[%s197 + $0x40] sm:$0xf] %vm3913, %v3857
      %3931 = vst.msk [vmem:[%s197 + $0x44] sm:$0xf] %vm3913, %v3858
      %3932 = vst.msk [vmem:[%s197 + $0x48] sm:$0xf] %vm3913, %v3859
      %3933 = vst.msk [vmem:[%s197 + $0x4c] sm:$0xf] %vm3913, %v3860
      %3934 = vst.msk [vmem:[%s197 + $0x50] sm:$0xf] %vm3913, %v3861
      %3935 = vst.msk [vmem:[%s197 + $0x54] sm:$0xf] %vm3913, %v3862
      %3936 = vst.msk [vmem:[%s197 + $0x58] sm:$0xf] %vm3913, %v3863
      %3937 = vst.msk [vmem:[%s197 + $0x5c] sm:$0xf] %vm3913, %v3864
      %3938 = vst.msk [vmem:[%s197 + $0x60] sm:$0xf] %vm3913, %v3865
      %3939 = vst.msk [vmem:[%s197 + $0x64] sm:$0xf] %vm3913, %v3866
      %3940 = vst.msk [vmem:[%s197 + $0x68] sm:$0xf] %vm3913, %v3867
      %3941 = vst.msk [vmem:[%s197 + $0x6c] sm:$0xf] %vm3913, %v3868
      %3942 = vst.msk [vmem:[%s197 + $0x70] sm:$0xf] %vm3913, %v3869
      %3943 = vst.msk [vmem:[%s197 + $0x74] sm:$0xf] %vm3913, %v3870
      %3944 = vst.msk [vmem:[%s197 + $0x78] sm:$0xf] %vm3913, %v3871
      %3945 = vst.msk [vmem:[%s197 + $0x7c] sm:$0xf] %vm3913, %v3872
      %3946 = vst.msk [vmem:[%s197 + $0x80] sm:$0xf] %vm3913, %v3873
      %3947 = vst.msk [vmem:[%s197 + $0x84] sm:$0xf] %vm3913, %v3874
      %3948 = vst.msk [vmem:[%s197 + $0x88] sm:$0xf] %vm3913, %v3875
      %3949 = vst.msk [vmem:[%s197 + $0x8c] sm:$0xf] %vm3913, %v3876
      %p3950 = scmp.lt.s32.totalorder %s15, 1
      %s3951 = scalar_select %p3950, %s15, 1
      %s3952 = smul.addr %s3951, 36
      %s3953 = smul.addr %s3952, 4
      %s3954 = scalar_lea.vmem %s4, %s3953
      // Predicated region
      $region37: #{tpu_custom_call.1} parent=35 // pred_check
        %p3955 = pneg %p122
      $region38: #{tpu_custom_call.1} parent=35 // pred_check_branch
        %3957 = sbr.rel (%p3955) target = $region40
      $region39: #{tpu_custom_call.1} parent=35 // pred_region
        _
      $region40: #{tpu_custom_call.1} parent=35 // pred_fallthru
        _
    $region36: #{tpu_custom_call.1} parent=5 // pred_fallthru
      _
    %p3958 = scmp.le.s32.totalorder 2, %s10
    // Predicated region
    $region41: #{tpu_custom_call.1} parent=5 // pred_check
      %p3959 = pneg %p3958
    $region42: #{tpu_custom_call.1} parent=5 // pred_check_branch
      %3961 = sbr.rel (%p3959) target = $region44
    $region43: #{tpu_custom_call.1} parent=5 // pred_region
      %s3962 = ssub.s32 %s10, 2
      // Predicated region
      $region45: #{tpu_custom_call.1} parent=43 // pred_check
        %p3963 = pneg %p128
      $region46: #{tpu_custom_call.1} parent=43 // pred_check_branch
        %3965 = sbr.rel (%p3963) target = $region48
      $region47: #{tpu_custom_call.1} parent=43 // pred_region
        %p3966 = scmp.lt.s32.totalorder %s16, 1
        %s3967 = scalar_select %p3966, %s16, 1
        %s3968 = smul.addr %s3967, 36
        %s3969 = smul.addr %s3968, 4
        %s3970 = scalar_lea.vmem %s4, %s3969
      $region48: #{tpu_custom_call.1} parent=43 // pred_fallthru
        _
    $region44: #{tpu_custom_call.1} parent=5 // pred_fallthru
      _
  $region6: #{tpu_custom_call.1} parent=0 // loop_footer
    %s14 = sadd.s32 1, %s10
  $region7: #{tpu_custom_call.1} parent=0 // loop_footer_branch
    %9 = sbr.rel target = $region3
  $region8: #{tpu_custom_call.1} parent=0 // loop_exit
    _

</llo_original>
